<compile_context>
chip_gen: v6e
topology: v6e:2x2x1
jax: 0.10.0
libtpu: 0.0.40
codegen_flags: <defaults>
</compile_context>

<pallas_src>
import math
import functools

import numpy as np
import jax
import jax.numpy as jnp
from jax.experimental import pallas as pl
from jax.experimental.pallas import tpu as pltpu

K = 13            # winsize
P = K // 2        # reflection pad = 6
DY_PAD = 16       # dy-group padded to 16 sublanes (rows 13..15 carry zero weights)
KP = K * DY_PAD   # 208 = matmul contraction length (pads to 256 on the MXU)


# ----------------------------------------------------------------------------
# Deterministic parameter construction (synthetic Gabor bank, 48 quadrature
# pairs interleaved along the 96 output channels, matching reshape(-1, 2, ...)).
# TODO(synk): the original module loads '../weights/kernel2.npy'; replaced here
#             by a deterministic synthetic bank of the same shape.
# ----------------------------------------------------------------------------
def make_gabor_bank(k=K, n_scale=6, n_orient=8):
    half = k // 2
    ys, xs = jnp.meshgrid(
        jnp.arange(-half, half + 1, dtype=jnp.float32),
        jnp.arange(-half, half + 1, dtype=jnp.float32),
        indexing="ij",
    )
    filters = []
    for s in range(n_scale):
        lam = 3.0 + 2.0 * s
        sigma = 0.56 * lam
        for o in range(n_orient):
            theta = math.pi * o / n_orient
            xr = xs * math.cos(theta) + ys * math.sin(theta)
            yr = -xs * math.sin(theta) + ys * math.cos(theta)
            env = jnp.exp(-(xr * xr + yr * yr) / (2.0 * sigma * sigma))
            filters.append(env * jnp.cos(2.0 * math.pi * xr / lam))  # even
            filters.append(env * jnp.sin(2.0 * math.pi * xr / lam))  # odd
    gk = jnp.stack(filters, axis=0)[:, None, :, :]  # (96, 1, K, K)
    return gk.astype(jnp.float32)


# ----------------------------------------------------------------------------
# Host-side constant builders
# ----------------------------------------------------------------------------
def _pack_gabor_weights(gkern, dtype):
    """(96,1,K,K) -> (96, KP) with channels reordered [even pairs | odd pairs]
    and patch column p = dx*16 + dy (dy >= 13 columns are zero)."""
    gk = np.asarray(gkern, dtype=np.float32).reshape(96, K, K)
    perm = list(range(0, 96, 2)) + list(range(1, 96, 2))
    gk = gk[perm]
    w2 = np.zeros((96, KP), np.float32)
    for dx in range(K):
        w2[:, dx * DY_PAD: dx * DY_PAD + K] = gk[:, :, dx]
    return jnp.asarray(w2, dtype=dtype)


def _reflect_box_matrix(n, k=K, p=P):
    """Band matrix A (n,n): A[i, j] = #taps of the k-wide box at output i that
    land on source index j, with ReflectionPad2d(p) folded in."""
    a = np.zeros((n, n), np.float32)
    for i in range(n):
        for d in range(k):
            s = i + d - p
            if s < 0:
                s = -s
            elif s > n - 1:
                s = 2 * (n - 1) - s
            a[i, s] += 1.0
    return a


def _vmem_capacity_bytes():
    try:
        info = pltpu.get_tpu_info()
        return int(getattr(info, "vmem_capacity_bytes", 64 * 2**20))
    except Exception:
        return 64 * 2**20          # conservative (v7x) fallback


def _vmem_limit_bytes(need_bytes, capacity):
    # 2x margin, floor 8 MiB, cap at 3/4 of physical VMEM so the compiler keeps
    # headroom for internal scratch/semaphores (<=48 MiB on v7x's 64 MiB parts).
    return int(min(max(2 * int(need_bytes), 8 * 2**20), (3 * capacity) // 4))


# ----------------------------------------------------------------------------
# Kernel 1: in-kernel im2col + row-batched (96, KP) Gabor matmul + magnitude.
#   w_ref   : (96, KP)            packed Gabor weights (matmul dtype)
#   xs_ref  : (tr + 15, w + 12)   reflection-padded row strip (matmul dtype)
#   tmp_ref : (48, tr, w)         quadrature magnitudes (f32)
# ----------------------------------------------------------------------------
def _gabor_mag_kernel(w_ref, xs_ref, tmp_ref, *, tr, w, rg):
    w2 = w_ref[...]                       # (96, KP)
    strip = xs_ref[...]                   # (tr + 15, w + 2P)
    # Hoisted: the 13 lane-crossing dx shifts happen ONCE per tile (the row
    # loops below only take sublane windows of these slabs).
    shifted = [strip[:, dx:dx + w] for dx in range(K)]          # 13 x (tr+15, w)

    for y0 in range(0, tr, rg):           # static unroll over row groups
        # im2col patch for rg output rows at once: rows batched along lanes,
        # dx groups stacked along sublanes -> (KP, rg*w), ONE matmul per group.
        cols = []
        for dx in range(K):
            s = shifted[dx]
            rows = [s[y0 + j: y0 + j + DY_PAD, :] for j in range(rg)]
            cols.append(rows[0] if rg == 1 else jnp.concatenate(rows, axis=1))
        patch = jnp.concatenate(cols, axis=0)                   # (KP, rg*w)
        feats = jnp.dot(w2, patch, preferred_element_type=jnp.float32)  # (96, rg*w)
        fe = feats[0:48, :]
        fo = feats[48:96, :]
        mag = jnp.sqrt(fe * fe + fo * fo)                       # (48, rg*w)
        for j in range(rg):
            tmp_ref[:, y0 + j, :] = mag[:, j * w:(j + 1) * w]


# ----------------------------------------------------------------------------
# Kernel 2: 13x13 box mean / stddev as four batched band-matrix MXU matmuls.
#   a_ref   : (ct*h, ct*h)  block-diagonal kron(I_ct, A) reflect-folded row band
#   c_ref   : (w, w)        column band matrix transposed  C = A_w^T
#   t_ref   : (ct, h, w)    tmp channel tile (f32)
#   out_ref : (2, ct, h, w) mean at index 0, std at index 1
# ----------------------------------------------------------------------------
def _wind_stats_kernel(a_ref, c_ref, t_ref, out_ref, *, ct, h):
    inv = jnp.float32(1.0 / (K * K))
    a_big = a_ref[...]                    # (ct*h, ct*h)
    cm = c_ref[...]                       # (w, w)
    # stack the ct channels along sublanes -> every stage is one batched matmul
    if ct == 1:
        t_tall = t_ref[0]                 # (h, w)
    else:
        t_tall = jnp.concatenate([t_ref[c] for c in range(ct)], axis=0)  # (ct*h, w)
    v1 = jnp.dot(a_big, t_tall, preferred_element_type=jnp.float32)
    v2 = jnp.dot(a_big, t_tall * t_tall, preferred_element_type=jnp.float32)
    s1 = jnp.dot(v1, cm, preferred_element_type=jnp.float32)
    s2 = jnp.dot(v2, cm, preferred_element_type=jnp.float32)
    mu = s1 * inv
    var = jnp.maximum(s2 * inv - mu * mu, 0.0)
    sd = jnp.sqrt(var)
    for c in range(ct):                   # sublane-aligned (h, w) block stores
        out_ref[0, c] = mu[c * h:(c + 1) * h, :]
        out_ref[1, c] = sd[c * h:(c + 1) * h, :]


# ----------------------------------------------------------------------------
# Wrapper: reproduces GaborWavelet.forward
# ----------------------------------------------------------------------------
def gabor_wavelet_forward(x, gkern, *, matmul_dtype=jnp.float32):
    n, c, h, w = x.shape
    assert c == 1, "GaborWavelet expects a single input channel"
    assert h > P and w > P, "spatial dims must exceed the reflection pad"

    capacity = _vmem_capacity_bytes()

    # ---- kernel 1 tiling --------------------------------------------------
    # Pad the output-row count to a multiple of 8 so the row tile is always 8
    # or 16 (no h-way static unroll for odd heights); the extra rows compute on
    # zero-extended data and are sliced off before kernel 2.
    h_out = h if h % 8 == 0 else ((h + 7) // 8) * 8
    tr = 16 if h_out % 16 == 0 else 8
    if n * (h_out // tr) < 2 and tr > 8:
        tr = 8                             # >=2 grid points for v7x's two TCs
    r_tiles = h_out // tr
    trs = tr + DY_PAD - 1                  # rows per strip
    wp = w + 2 * P

    # Row group: batch rg output rows along MXU lanes (<= ~512 lanes / matmul).
    rg = 1
    for cand in (16, 8, 4, 2, 1):
        if cand <= tr and tr % cand == 0 and cand * w <= 512:
            rg = cand
            break

    # ReflectionPad2d(P) + zero rows (3 for the 16-sublane dy groups, plus the
    # odd-height padding), then overlapping row strips pre-cast to the matmul
    # dtype (halves strip DMA bytes on the bf16 path).
    xp = jnp.pad(x[:, 0], ((0, 0), (P, P), (P, P)), mode="reflect")
    xp = jnp.pad(xp, ((0, 0), (0, (DY_PAD - K) + (h_out - h)), (0, 0)))
    strips = jnp.stack(
        [xp[:, r * tr: r * tr + trs, :] for r in range(r_tiles)], axis=1
    ).astype(matmul_dtype)                                       # (n, R, trs, wp)

    w2 = _pack_gabor_weights(gkern, matmul_dtype)                # (96, KP)

    isz = jnp.dtype(matmul_dtype).itemsize
    k1_need = (96 * KP * isz                # weights
               + 2 * trs * wp * isz         # strip block, double buffered
               + 2 * 48 * tr * w * 4        # out block, double buffered
               + 13 * trs * w * isz         # hoisted shifted slabs
               + KP * rg * w * isz          # patch
               + 4 * 96 * rg * w * 4)       # matmul result + magnitude temps
    tmp = pl.pallas_call(
        functools.partial(_gabor_mag_kernel, tr=tr, w=w, rg=rg),
        out_shape=jax.ShapeDtypeStruct((n, 48, h_out, w), jnp.float32),
        grid=(n, r_tiles),
        in_specs=[
            pl.BlockSpec((96, KP), lambda i, r: (0, 0)),
            pl.BlockSpec((None, None, trs, wp), lambda i, r: (i, r, 0, 0)),
        ],
        out_specs=pl.BlockSpec((None, 48, tr, w), lambda i, r: (i, 0, r, 0)),
        compiler_params=pltpu.CompilerParams(
            dimension_semantics=("parallel", "parallel"),
            vmem_limit_bytes=_vmem_limit_bytes(k1_need, capacity)),
    )(w2, strips)
    if h_out != h:
        tmp = tmp[:, :, :h, :]             # drop the zero-padded fallback rows

    # ---- kernel 2 tiling --------------------------------------------------
    # Channel tile: ct*h <= 256 keeps the block-diagonal row band matrix within
    # one MXU contraction tile (no wasted passes, <=256 KiB); the VMEM budget
    # is generation-aware (20 MiB on 64 MiB-VMEM parts, 56 MiB on 128 MiB).
    budget = (20 * 2**20) if capacity <= 80 * 2**20 else (56 * 2**20)
    ct = 1
    for cand in (48, 24, 16, 12, 8, 6, 4, 3, 2, 1):
        if 48 % cand or cand * h > 256:
            continue
        need = ((cand * h) ** 2 + w * w) * 4 + 14 * cand * h * w * 4
        if need <= budget:
            ct = cand
            break
    c_tiles = 48 // ct

    a_h = _reflect_box_matrix(h)                                 # (h, h)
    a_big = jnp.asarray(np.kron(np.eye(ct, dtype=np.float32), a_h))
    c_w = jnp.asarray(_reflect_box_matrix(w).T)                  # (w, w)

    k2_need = ((ct * h) ** 2 + w * w) * 4 + 14 * ct * h * w * 4
    out = pl.pallas_call(
        functools.partial(_wind_stats_kernel, ct=ct, h=h),
        out_shape=jax.ShapeDtypeStruct((n, 2, 48, h, w), jnp.float32),
        grid=(n, c_tiles),
        in_specs=[
            pl.BlockSpec((ct * h, ct * h), lambda i, cc: (0, 0)),
            pl.BlockSpec((w, w), lambda i, cc: (0, 0)),
            pl.BlockSpec((None, ct, h, w), lambda i, cc: (i, cc, 0, 0)),
        ],
        out_specs=pl.BlockSpec((None, 2, ct, h, w),
                               lambda i, cc: (i, 0, cc, 0, 0)),
        compiler_params=pltpu.CompilerParams(
            dimension_semantics=("parallel", "parallel"),
            vmem_limit_bytes=_vmem_limit_bytes(k2_need, capacity)),
    )(a_big, c_w, tmp)

    # mean (index 0) and std (index 1) are already adjacent along axis 1:
    # contiguous, copy-free reshape replaces the old concat epilogue.
    return out.reshape(n, 96, h, w)


# ----------------------------------------------------------------------------
# Pure-JAX reference of the PyTorch forward (validation only)
# ----------------------------------------------------------------------------
def reference_forward(x, gkern):
    n, _, h, w = x.shape

    def refl_pad(z):
        return jnp.pad(z, ((0, 0), (0, 0), (P, P), (P, P)), mode="reflect")

    def conv(z, wk):
        return jax.lax.conv_general_dilated(
            z, wk, (1, 1), "VALID", dimension_numbers=("NCHW", "OIHW", "NCHW"))

    feats = conv(refl_pad(x), gkern)                            # (N, 96, H, W)
    feats = feats.reshape(-1, 2, h, w)
    tmp = jnp.sqrt(jnp.sum(feats ** 2, axis=1, keepdims=True))  # (N*48,1,H,W)

    wind_w = jnp.full((1, 1, K, K), 1.0 / (K * K), jnp.float32)
    wt = conv(refl_pad(tmp), wind_w)
    wt2 = conv(refl_pad(tmp ** 2), wind_w)
    mean = wt.reshape(-1, 48, h, w)
    std = jnp.sqrt(jnp.clip(wt2 - wt ** 2, 0.0, None)).reshape(-1, 48, h, w)
    return jnp.concatenate([mean, std], axis=1)


if __name__ == "__main__":
    key = jax.random.PRNGKey(0)
    x = jax.random.normal(key, (2, 1, 16, 16), dtype=jnp.float32)  # N=2, C=1
    gkern = make_gabor_bank()                                      # (96, 1, 13, 13)

    ref = jax.block_until_ready(reference_forward(x, gkern))

    # f32 MXU path (default): must match the f32 reference tightly.
    out_f32 = jax.block_until_ready(
        gabor_wavelet_forward(x, gkern, matmul_dtype=jnp.float32))
    assert out_f32.shape == (2, 96, 16, 16) and out_f32.dtype == jnp.float32
    np.testing.assert_allclose(np.asarray(out_f32), np.asarray(ref),
                               rtol=5e-3, atol=5e-3)

    # bf16-input / f32-accumulate fast path; tolerance consistent with bf16
    # input rounding.
    out_bf16 = jax.block_until_ready(
        gabor_wavelet_forward(x, gkern, matmul_dtype=jnp.bfloat16))
    assert out_bf16.shape == (2, 96, 16, 16)
    np.testing.assert_allclose(np.asarray(out_bf16), np.asarray(ref),
                               rtol=2e-2, atol=2e-2)

    print("KERNEL_OK")
</pallas_src>

<mosaic_0001>
module attributes {stable_mosaic.version = 11 : i64} {
  func.func @_gabor_mag_kernel(%arg0: i32, %arg1: i32, %arg2: memref<96x208xf32, #tpu.memory_space<vmem>>, %arg3: memref<1x1x31x28xf32, #tpu.memory_space<vmem>>, %arg4: memref<1x48x16x16xf32, #tpu.memory_space<vmem>>) attributes {dimension_semantics = [#tpu.dimension_semantics<parallel>, #tpu.dimension_semantics<parallel>], iteration_bounds = array<i64: 2, 1>, scalar_prefetch = 0 : i64, scratch_operands = 0 : i64, tpu.core_type = #tpu.core_type<tc>, window_params = [{pipeline_mode = #tpu.pipeline_mode<synchronous>, transform_indices = @transform_0, window_bounds = array<i64: 96, 208>}, {transform_indices = @transform_1, window_bounds = array<i64: 1, 1, 31, 28>}, {transform_indices = @transform_2, window_bounds = array<i64: 1, 48, 16, 16>}]} {
    %c0 = arith.constant 0 : index
    %c0_0 = arith.constant 0 : index
    %0 = vector.load %arg2[%c0, %c0_0] : memref<96x208xf32, #tpu.memory_space<vmem>>, vector<96x208xf32>
    %c0_1 = arith.constant 0 : index
    %c0_2 = arith.constant 0 : index
    %c0_3 = arith.constant 0 : index
    %c0_4 = arith.constant 0 : index
    %1 = vector.load %arg3[%c0_1, %c0_2, %c0_3, %c0_4] : memref<1x1x31x28xf32, #tpu.memory_space<vmem>>, vector<1x1x31x28xf32>
    %2 = vector.shape_cast %1 : vector<1x1x31x28xf32> to vector<31x28xf32>
    %3 = vector.extract_strided_slice %2 {offsets = [0, 0], sizes = [31, 16], strides = [1, 1]} : vector<31x28xf32> to vector<31x16xf32>
    %4 = vector.extract_strided_slice %2 {offsets = [0, 1], sizes = [31, 16], strides = [1, 1]} : vector<31x28xf32> to vector<31x16xf32>
    %5 = vector.extract_strided_slice %2 {offsets = [0, 2], sizes = [31, 16], strides = [1, 1]} : vector<31x28xf32> to vector<31x16xf32>
    %6 = vector.extract_strided_slice %2 {offsets = [0, 3], sizes = [31, 16], strides = [1, 1]} : vector<31x28xf32> to vector<31x16xf32>
    %7 = vector.extract_strided_slice %2 {offsets = [0, 4], sizes = [31, 16], strides = [1, 1]} : vector<31x28xf32> to vector<31x16xf32>
    %8 = vector.extract_strided_slice %2 {offsets = [0, 5], sizes = [31, 16], strides = [1, 1]} : vector<31x28xf32> to vector<31x16xf32>
    %9 = vector.extract_strided_slice %2 {offsets = [0, 6], sizes = [31, 16], strides = [1, 1]} : vector<31x28xf32> to vector<31x16xf32>
    %10 = vector.extract_strided_slice %2 {offsets = [0, 7], sizes = [31, 16], strides = [1, 1]} : vector<31x28xf32> to vector<31x16xf32>
    %11 = vector.extract_strided_slice %2 {offsets = [0, 8], sizes = [31, 16], strides = [1, 1]} : vector<31x28xf32> to vector<31x16xf32>
    %12 = vector.extract_strided_slice %2 {offsets = [0, 9], sizes = [31, 16], strides = [1, 1]} : vector<31x28xf32> to vector<31x16xf32>
    %13 = vector.extract_strided_slice %2 {offsets = [0, 10], sizes = [31, 16], strides = [1, 1]} : vector<31x28xf32> to vector<31x16xf32>
    %14 = vector.extract_strided_slice %2 {offsets = [0, 11], sizes = [31, 16], strides = [1, 1]} : vector<31x28xf32> to vector<31x16xf32>
    %15 = vector.extract_strided_slice %2 {offsets = [0, 12], sizes = [31, 16], strides = [1, 1]} : vector<31x28xf32> to vector<31x16xf32>
    %16 = vector.extract_strided_slice %3 {offsets = [0, 0], sizes = [16, 16], strides = [1, 1]} : vector<31x16xf32> to vector<16x16xf32>
    %17 = vector.extract_strided_slice %3 {offsets = [1, 0], sizes = [16, 16], strides = [1, 1]} : vector<31x16xf32> to vector<16x16xf32>
    %18 = vector.extract_strided_slice %3 {offsets = [2, 0], sizes = [16, 16], strides = [1, 1]} : vector<31x16xf32> to vector<16x16xf32>
    %19 = vector.extract_strided_slice %3 {offsets = [3, 0], sizes = [16, 16], strides = [1, 1]} : vector<31x16xf32> to vector<16x16xf32>
    %20 = vector.extract_strided_slice %3 {offsets = [4, 0], sizes = [16, 16], strides = [1, 1]} : vector<31x16xf32> to vector<16x16xf32>
    %21 = vector.extract_strided_slice %3 {offsets = [5, 0], sizes = [16, 16], strides = [1, 1]} : vector<31x16xf32> to vector<16x16xf32>
    %22 = vector.extract_strided_slice %3 {offsets = [6, 0], sizes = [16, 16], strides = [1, 1]} : vector<31x16xf32> to vector<16x16xf32>
    %23 = vector.extract_strided_slice %3 {offsets = [7, 0], sizes = [16, 16], strides = [1, 1]} : vector<31x16xf32> to vector<16x16xf32>
    %24 = vector.extract_strided_slice %3 {offsets = [8, 0], sizes = [16, 16], strides = [1, 1]} : vector<31x16xf32> to vector<16x16xf32>
    %25 = vector.extract_strided_slice %3 {offsets = [9, 0], sizes = [16, 16], strides = [1, 1]} : vector<31x16xf32> to vector<16x16xf32>
    %26 = vector.extract_strided_slice %3 {offsets = [10, 0], sizes = [16, 16], strides = [1, 1]} : vector<31x16xf32> to vector<16x16xf32>
    %27 = vector.extract_strided_slice %3 {offsets = [11, 0], sizes = [16, 16], strides = [1, 1]} : vector<31x16xf32> to vector<16x16xf32>
    %28 = vector.extract_strided_slice %3 {offsets = [12, 0], sizes = [16, 16], strides = [1, 1]} : vector<31x16xf32> to vector<16x16xf32>
    %29 = vector.extract_strided_slice %3 {offsets = [13, 0], sizes = [16, 16], strides = [1, 1]} : vector<31x16xf32> to vector<16x16xf32>
    %30 = vector.extract_strided_slice %3 {offsets = [14, 0], sizes = [16, 16], strides = [1, 1]} : vector<31x16xf32> to vector<16x16xf32>
    %31 = vector.extract_strided_slice %3 {offsets = [15, 0], sizes = [16, 16], strides = [1, 1]} : vector<31x16xf32> to vector<16x16xf32>
    %32 = tpu.concatenate %16, %17, %18, %19, %20, %21, %22, %23, %24, %25, %26, %27, %28, %29, %30, %31 in 1 : vector<16x16xf32>, vector<16x16xf32>, vector<16x16xf32>, vector<16x16xf32>, vector<16x16xf32>, vector<16x16xf32>, vector<16x16xf32>, vector<16x16xf32>, vector<16x16xf32>, vector<16x16xf32>, vector<16x16xf32>, vector<16x16xf32>, vector<16x16xf32>, vector<16x16xf32>, vector<16x16xf32>, vector<16x16xf32> -> vector<16x256xf32>
    %33 = vector.extract_strided_slice %4 {offsets = [0, 0], sizes = [16, 16], strides = [1, 1]} : vector<31x16xf32> to vector<16x16xf32>
    %34 = vector.extract_strided_slice %4 {offsets = [1, 0], sizes = [16, 16], strides = [1, 1]} : vector<31x16xf32> to vector<16x16xf32>
    %35 = vector.extract_strided_slice %4 {offsets = [2, 0], sizes = [16, 16], strides = [1, 1]} : vector<31x16xf32> to vector<16x16xf32>
    %36 = vector.extract_strided_slice %4 {offsets = [3, 0], sizes = [16, 16], strides = [1, 1]} : vector<31x16xf32> to vector<16x16xf32>
    %37 = vector.extract_strided_slice %4 {offsets = [4, 0], sizes = [16, 16], strides = [1, 1]} : vector<31x16xf32> to vector<16x16xf32>
    %38 = vector.extract_strided_slice %4 {offsets = [5, 0], sizes = [16, 16], strides = [1, 1]} : vector<31x16xf32> to vector<16x16xf32>
    %39 = vector.extract_strided_slice %4 {offsets = [6, 0], sizes = [16, 16], strides = [1, 1]} : vector<31x16xf32> to vector<16x16xf32>
    %40 = vector.extract_strided_slice %4 {offsets = [7, 0], sizes = [16, 16], strides = [1, 1]} : vector<31x16xf32> to vector<16x16xf32>
    %41 = vector.extract_strided_slice %4 {offsets = [8, 0], sizes = [16, 16], strides = [1, 1]} : vector<31x16xf32> to vector<16x16xf32>
    %42 = vector.extract_strided_slice %4 {offsets = [9, 0], sizes = [16, 16], strides = [1, 1]} : vector<31x16xf32> to vector<16x16xf32>
    %43 = vector.extract_strided_slice %4 {offsets = [10, 0], sizes = [16, 16], strides = [1, 1]} : vector<31x16xf32> to vector<16x16xf32>
    %44 = vector.extract_strided_slice %4 {offsets = [11, 0], sizes = [16, 16], strides = [1, 1]} : vector<31x16xf32> to vector<16x16xf32>
    %45 = vector.extract_strided_slice %4 {offsets = [12, 0], sizes = [16, 16], strides = [1, 1]} : vector<31x16xf32> to vector<16x16xf32>
    %46 = vector.extract_strided_slice %4 {offsets = [13, 0], sizes = [16, 16], strides = [1, 1]} : vector<31x16xf32> to vector<16x16xf32>
    %47 = vector.extract_strided_slice %4 {offsets = [14, 0], sizes = [16, 16], strides = [1, 1]} : vector<31x16xf32> to vector<16x16xf32>
    %48 = vector.extract_strided_slice %4 {offsets = [15, 0], sizes = [16, 16], strides = [1, 1]} : vector<31x16xf32> to vector<16x16xf32>
    %49 = tpu.concatenate %33, %34, %35, %36, %37, %38, %39, %40, %41, %42, %43, %44, %45, %46, %47, %48 in 1 : vector<16x16xf32>, vector<16x16xf32>, vector<16x16xf32>, vector<16x16xf32>, vector<16x16xf32>, vector<16x16xf32>, vector<16x16xf32>, vector<16x16xf32>, vector<16x16xf32>, vector<16x16xf32>, vector<16x16xf32>, vector<16x16xf32>, vector<16x16xf32>, vector<16x16xf32>, vector<16x16xf32>, vector<16x16xf32> -> vector<16x256xf32>
    %50 = vector.extract_strided_slice %5 {offsets = [0, 0], sizes = [16, 16], strides = [1, 1]} : vector<31x16xf32> to vector<16x16xf32>
    %51 = vector.extract_strided_slice %5 {offsets = [1, 0], sizes = [16, 16], strides = [1, 1]} : vector<31x16xf32> to vector<16x16xf32>
    %52 = vector.extract_strided_slice %5 {offsets = [2, 0], sizes = [16, 16], strides = [1, 1]} : vector<31x16xf32> to vector<16x16xf32>
    %53 = vector.extract_strided_slice %5 {offsets = [3, 0], sizes = [16, 16], strides = [1, 1]} : vector<31x16xf32> to vector<16x16xf32>
    %54 = vector.extract_strided_slice %5 {offsets = [4, 0], sizes = [16, 16], strides = [1, 1]} : vector<31x16xf32> to vector<16x16xf32>
    %55 = vector.extract_strided_slice %5 {offsets = [5, 0], sizes = [16, 16], strides = [1, 1]} : vector<31x16xf32> to vector<16x16xf32>
    %56 = vector.extract_strided_slice %5 {offsets = [6, 0], sizes = [16, 16], strides = [1, 1]} : vector<31x16xf32> to vector<16x16xf32>
    %57 = vector.extract_strided_slice %5 {offsets = [7, 0], sizes = [16, 16], strides = [1, 1]} : vector<31x16xf32> to vector<16x16xf32>
    %58 = vector.extract_strided_slice %5 {offsets = [8, 0], sizes = [16, 16], strides = [1, 1]} : vector<31x16xf32> to vector<16x16xf32>
    %59 = vector.extract_strided_slice %5 {offsets = [9, 0], sizes = [16, 16], strides = [1, 1]} : vector<31x16xf32> to vector<16x16xf32>
    %60 = vector.extract_strided_slice %5 {offsets = [10, 0], sizes = [16, 16], strides = [1, 1]} : vector<31x16xf32> to vector<16x16xf32>
    %61 = vector.extract_strided_slice %5 {offsets = [11, 0], sizes = [16, 16], strides = [1, 1]} : vector<31x16xf32> to vector<16x16xf32>
    %62 = vector.extract_strided_slice %5 {offsets = [12, 0], sizes = [16, 16], strides = [1, 1]} : vector<31x16xf32> to vector<16x16xf32>
    %63 = vector.extract_strided_slice %5 {offsets = [13, 0], sizes = [16, 16], strides = [1, 1]} : vector<31x16xf32> to vector<16x16xf32>
    %64 = vector.extract_strided_slice %5 {offsets = [14, 0], sizes = [16, 16], strides = [1, 1]} : vector<31x16xf32> to vector<16x16xf32>
    %65 = vector.extract_strided_slice %5 {offsets = [15, 0], sizes = [16, 16], strides = [1, 1]} : vector<31x16xf32> to vector<16x16xf32>
    %66 = tpu.concatenate %50, %51, %52, %53, %54, %55, %56, %57, %58, %59, %60, %61, %62, %63, %64, %65 in 1 : vector<16x16xf32>, vector<16x16xf32>, vector<16x16xf32>, vector<16x16xf32>, vector<16x16xf32>, vector<16x16xf32>, vector<16x16xf32>, vector<16x16xf32>, vector<16x16xf32>, vector<16x16xf32>, vector<16x16xf32>, vector<16x16xf32>, vector<16x16xf32>, vector<16x16xf32>, vector<16x16xf32>, vector<16x16xf32> -> vector<16x256xf32>
    %67 = vector.extract_strided_slice %6 {offsets = [0, 0], sizes = [16, 16], strides = [1, 1]} : vector<31x16xf32> to vector<16x16xf32>
    %68 = vector.extract_strided_slice %6 {offsets = [1, 0], sizes = [16, 16], strides = [1, 1]} : vector<31x16xf32> to vector<16x16xf32>
    %69 = vector.extract_strided_slice %6 {offsets = [2, 0], sizes = [16, 16], strides = [1, 1]} : vector<31x16xf32> to vector<16x16xf32>
    %70 = vector.extract_strided_slice %6 {offsets = [3, 0], sizes = [16, 16], strides = [1, 1]} : vector<31x16xf32> to vector<16x16xf32>
    %71 = vector.extract_strided_slice %6 {offsets = [4, 0], sizes = [16, 16], strides = [1, 1]} : vector<31x16xf32> to vector<16x16xf32>
    %72 = vector.extract_strided_slice %6 {offsets = [5, 0], sizes = [16, 16], strides = [1, 1]} : vector<31x16xf32> to vector<16x16xf32>
    %73 = vector.extract_strided_slice %6 {offsets = [6, 0], sizes = [16, 16], strides = [1, 1]} : vector<31x16xf32> to vector<16x16xf32>
    %74 = vector.extract_strided_slice %6 {offsets = [7, 0], sizes = [16, 16], strides = [1, 1]} : vector<31x16xf32> to vector<16x16xf32>
    %75 = vector.extract_strided_slice %6 {offsets = [8, 0], sizes = [16, 16], strides = [1, 1]} : vector<31x16xf32> to vector<16x16xf32>
    %76 = vector.extract_strided_slice %6 {offsets = [9, 0], sizes = [16, 16], strides = [1, 1]} : vector<31x16xf32> to vector<16x16xf32>
    %77 = vector.extract_strided_slice %6 {offsets = [10, 0], sizes = [16, 16], strides = [1, 1]} : vector<31x16xf32> to vector<16x16xf32>
    %78 = vector.extract_strided_slice %6 {offsets = [11, 0], sizes = [16, 16], strides = [1, 1]} : vector<31x16xf32> to vector<16x16xf32>
    %79 = vector.extract_strided_slice %6 {offsets = [12, 0], sizes = [16, 16], strides = [1, 1]} : vector<31x16xf32> to vector<16x16xf32>
    %80 = vector.extract_strided_slice %6 {offsets = [13, 0], sizes = [16, 16], strides = [1, 1]} : vector<31x16xf32> to vector<16x16xf32>
    %81 = vector.extract_strided_slice %6 {offsets = [14, 0], sizes = [16, 16], strides = [1, 1]} : vector<31x16xf32> to vector<16x16xf32>
    %82 = vector.extract_strided_slice %6 {offsets = [15, 0], sizes = [16, 16], strides = [1, 1]} : vector<31x16xf32> to vector<16x16xf32>
    %83 = tpu.concatenate %67, %68, %69, %70, %71, %72, %73, %74, %75, %76, %77, %78, %79, %80, %81, %82 in 1 : vector<16x16xf32>, vector<16x16xf32>, vector<16x16xf32>, vector<16x16xf32>, vector<16x16xf32>, vector<16x16xf32>, vector<16x16xf32>, vector<16x16xf32>, vector<16x16xf32>, vector<16x16xf32>, vector<16x16xf32>, vector<16x16xf32>, vector<16x16xf32>, vector<16x16xf32>, vector<16x16xf32>, vector<16x16xf32> -> vector<16x256xf32>
    %84 = vector.extract_strided_slice %7 {offsets = [0, 0], sizes = [16, 16], strides = [1, 1]} : vector<31x16xf32> to vector<16x16xf32>
    %85 = vector.extract_strided_slice %7 {offsets = [1, 0], sizes = [16, 16], strides = [1, 1]} : vector<31x16xf32> to vector<16x16xf32>
    %86 = vector.extract_strided_slice %7 {offsets = [2, 0], sizes = [16, 16], strides = [1, 1]} : vector<31x16xf32> to vector<16x16xf32>
    %87 = vector.extract_strided_slice %7 {offsets = [3, 0], sizes = [16, 16], strides = [1, 1]} : vector<31x16xf32> to vector<16x16xf32>
    %88 = vector.extract_strided_slice %7 {offsets = [4, 0], sizes = [16, 16], strides = [1, 1]} : vector<31x16xf32> to vector<16x16xf32>
    %89 = vector.extract_strided_slice %7 {offsets = [5, 0], sizes = [16, 16], strides = [1, 1]} : vector<31x16xf32> to vector<16x16xf32>
    %90 = vector.extract_strided_slice %7 {offsets = [6, 0], sizes = [16, 16], strides = [1, 1]} : vector<31x16xf32> to vector<16x16xf32>
    %91 = vector.extract_strided_slice %7 {offsets = [7, 0], sizes = [16, 16], strides = [1, 1]} : vector<31x16xf32> to vector<16x16xf32>
    %92 = vector.extract_strided_slice %7 {offsets = [8, 0], sizes = [16, 16], strides = [1, 1]} : vector<31x16xf32> to vector<16x16xf32>
    %93 = vector.extract_strided_slice %7 {offsets = [9, 0], sizes = [16, 16], strides = [1, 1]} : vector<31x16xf32> to vector<16x16xf32>
    %94 = vector.extract_strided_slice %7 {offsets = [10, 0], sizes = [16, 16], strides = [1, 1]} : vector<31x16xf32> to vector<16x16xf32>
    %95 = vector.extract_strided_slice %7 {offsets = [11, 0], sizes = [16, 16], strides = [1, 1]} : vector<31x16xf32> to vector<16x16xf32>
    %96 = vector.extract_strided_slice %7 {offsets = [12, 0], sizes = [16, 16], strides = [1, 1]} : vector<31x16xf32> to vector<16x16xf32>
    %97 = vector.extract_strided_slice %7 {offsets = [13, 0], sizes = [16, 16], strides = [1, 1]} : vector<31x16xf32> to vector<16x16xf32>
    %98 = vector.extract_strided_slice %7 {offsets = [14, 0], sizes = [16, 16], strides = [1, 1]} : vector<31x16xf32> to vector<16x16xf32>
    %99 = vector.extract_strided_slice %7 {offsets = [15, 0], sizes = [16, 16], strides = [1, 1]} : vector<31x16xf32> to vector<16x16xf32>
    %100 = tpu.concatenate %84, %85, %86, %87, %88, %89, %90, %91, %92, %93, %94, %95, %96, %97, %98, %99 in 1 : vector<16x16xf32>, vector<16x16xf32>, vector<16x16xf32>, vector<16x16xf32>, vector<16x16xf32>, vector<16x16xf32>, vector<16x16xf32>, vector<16x16xf32>, vector<16x16xf32>, vector<16x16xf32>, vector<16x16xf32>, vector<16x16xf32>, vector<16x16xf32>, vector<16x16xf32>, vector<16x16xf32>, vector<16x16xf32> -> vector<16x256xf32>
    %101 = vector.extract_strided_slice %8 {offsets = [0, 0], sizes = [16, 16], strides = [1, 1]} : vector<31x16xf32> to vector<16x16xf32>
    %102 = vector.extract_strided_slice %8 {offsets = [1, 0], sizes = [16, 16], strides = [1, 1]} : vector<31x16xf32> to vector<16x16xf32>
    %103 = vector.extract_strided_slice %8 {offsets = [2, 0], sizes = [16, 16], strides = [1, 1]} : vector<31x16xf32> to vector<16x16xf32>
    %104 = vector.extract_strided_slice %8 {offsets = [3, 0], sizes = [16, 16], strides = [1, 1]} : vector<31x16xf32> to vector<16x16xf32>
    %105 = vector.extract_strided_slice %8 {offsets = [4, 0], sizes = [16, 16], strides = [1, 1]} : vector<31x16xf32> to vector<16x16xf32>
    %106 = vector.extract_strided_slice %8 {offsets = [5, 0], sizes = [16, 16], strides = [1, 1]} : vector<31x16xf32> to vector<16x16xf32>
    %107 = vector.extract_strided_slice %8 {offsets = [6, 0], sizes = [16, 16], strides = [1, 1]} : vector<31x16xf32> to vector<16x16xf32>
    %108 = vector.extract_strided_slice %8 {offsets = [7, 0], sizes = [16, 16], strides = [1, 1]} : vector<31x16xf32> to vector<16x16xf32>
    %109 = vector.extract_strided_slice %8 {offsets = [8, 0], sizes = [16, 16], strides = [1, 1]} : vector<31x16xf32> to vector<16x16xf32>
    %110 = vector.extract_strided_slice %8 {offsets = [9, 0], sizes = [16, 16], strides = [1, 1]} : vector<31x16xf32> to vector<16x16xf32>
    %111 = vector.extract_strided_slice %8 {offsets = [10, 0], sizes = [16, 16], strides = [1, 1]} : vector<31x16xf32> to vector<16x16xf32>
    %112 = vector.extract_strided_slice %8 {offsets = [11, 0], sizes = [16, 16], strides = [1, 1]} : vector<31x16xf32> to vector<16x16xf32>
    %113 = vector.extract_strided_slice %8 {offsets = [12, 0], sizes = [16, 16], strides = [1, 1]} : vector<31x16xf32> to vector<16x16xf32>
    %114 = vector.extract_strided_slice %8 {offsets = [13, 0], sizes = [16, 16], strides = [1, 1]} : vector<31x16xf32> to vector<16x16xf32>
    %115 = vector.extract_strided_slice %8 {offsets = [14, 0], sizes = [16, 16], strides = [1, 1]} : vector<31x16xf32> to vector<16x16xf32>
    %116 = vector.extract_strided_slice %8 {offsets = [15, 0], sizes = [16, 16], strides = [1, 1]} : vector<31x16xf32> to vector<16x16xf32>
    %117 = tpu.concatenate %101, %102, %103, %104, %105, %106, %107, %108, %109, %110, %111, %112, %113, %114, %115, %116 in 1 : vector<16x16xf32>, vector<16x16xf32>, vector<16x16xf32>, vector<16x16xf32>, vector<16x16xf32>, vector<16x16xf32>, vector<16x16xf32>, vector<16x16xf32>, vector<16x16xf32>, vector<16x16xf32>, vector<16x16xf32>, vector<16x16xf32>, vector<16x16xf32>, vector<16x16xf32>, vector<16x16xf32>, vector<16x16xf32> -> vector<16x256xf32>
    %118 = vector.extract_strided_slice %9 {offsets = [0, 0], sizes = [16, 16], strides = [1, 1]} : vector<31x16xf32> to vector<16x16xf32>
    %119 = vector.extract_strided_slice %9 {offsets = [1, 0], sizes = [16, 16], strides = [1, 1]} : vector<31x16xf32> to vector<16x16xf32>
    %120 = vector.extract_strided_slice %9 {offsets = [2, 0], sizes = [16, 16], strides = [1, 1]} : vector<31x16xf32> to vector<16x16xf32>
    %121 = vector.extract_strided_slice %9 {offsets = [3, 0], sizes = [16, 16], strides = [1, 1]} : vector<31x16xf32> to vector<16x16xf32>
    %122 = vector.extract_strided_slice %9 {offsets = [4, 0], sizes = [16, 16], strides = [1, 1]} : vector<31x16xf32> to vector<16x16xf32>
    %123 = vector.extract_strided_slice %9 {offsets = [5, 0], sizes = [16, 16], strides = [1, 1]} : vector<31x16xf32> to vector<16x16xf32>
    %124 = vector.extract_strided_slice %9 {offsets = [6, 0], sizes = [16, 16], strides = [1, 1]} : vector<31x16xf32> to vector<16x16xf32>
    %125 = vector.extract_strided_slice %9 {offsets = [7, 0], sizes = [16, 16], strides = [1, 1]} : vector<31x16xf32> to vector<16x16xf32>
    %126 = vector.extract_strided_slice %9 {offsets = [8, 0], sizes = [16, 16], strides = [1, 1]} : vector<31x16xf32> to vector<16x16xf32>
    %127 = vector.extract_strided_slice %9 {offsets = [9, 0], sizes = [16, 16], strides = [1, 1]} : vector<31x16xf32> to vector<16x16xf32>
    %128 = vector.extract_strided_slice %9 {offsets = [10, 0], sizes = [16, 16], strides = [1, 1]} : vector<31x16xf32> to vector<16x16xf32>
    %129 = vector.extract_strided_slice %9 {offsets = [11, 0], sizes = [16, 16], strides = [1, 1]} : vector<31x16xf32> to vector<16x16xf32>
    %130 = vector.extract_strided_slice %9 {offsets = [12, 0], sizes = [16, 16], strides = [1, 1]} : vector<31x16xf32> to vector<16x16xf32>
    %131 = vector.extract_strided_slice %9 {offsets = [13, 0], sizes = [16, 16], strides = [1, 1]} : vector<31x16xf32> to vector<16x16xf32>
    %132 = vector.extract_strided_slice %9 {offsets = [14, 0], sizes = [16, 16], strides = [1, 1]} : vector<31x16xf32> to vector<16x16xf32>
    %133 = vector.extract_strided_slice %9 {offsets = [15, 0], sizes = [16, 16], strides = [1, 1]} : vector<31x16xf32> to vector<16x16xf32>
    %134 = tpu.concatenate %118, %119, %120, %121, %122, %123, %124, %125, %126, %127, %128, %129, %130, %131, %132, %133 in 1 : vector<16x16xf32>, vector<16x16xf32>, vector<16x16xf32>, vector<16x16xf32>, vector<16x16xf32>, vector<16x16xf32>, vector<16x16xf32>, vector<16x16xf32>, vector<16x16xf32>, vector<16x16xf32>, vector<16x16xf32>, vector<16x16xf32>, vector<16x16xf32>, vector<16x16xf32>, vector<16x16xf32>, vector<16x16xf32> -> vector<16x256xf32>
    %135 = vector.extract_strided_slice %10 {offsets = [0, 0], sizes = [16, 16], strides = [1, 1]} : vector<31x16xf32> to vector<16x16xf32>
    %136 = vector.extract_strided_slice %10 {offsets = [1, 0], sizes = [16, 16], strides = [1, 1]} : vector<31x16xf32> to vector<16x16xf32>
    %137 = vector.extract_strided_slice %10 {offsets = [2, 0], sizes = [16, 16], strides = [1, 1]} : vector<31x16xf32> to vector<16x16xf32>
    %138 = vector.extract_strided_slice %10 {offsets = [3, 0], sizes = [16, 16], strides = [1, 1]} : vector<31x16xf32> to vector<16x16xf32>
    %139 = vector.extract_strided_slice %10 {offsets = [4, 0], sizes = [16, 16], strides = [1, 1]} : vector<31x16xf32> to vector<16x16xf32>
    %140 = vector.extract_strided_slice %10 {offsets = [5, 0], sizes = [16, 16], strides = [1, 1]} : vector<31x16xf32> to vector<16x16xf32>
    %141 = vector.extract_strided_slice %10 {offsets = [6, 0], sizes = [16, 16], strides = [1, 1]} : vector<31x16xf32> to vector<16x16xf32>
    %142 = vector.extract_strided_slice %10 {offsets = [7, 0], sizes = [16, 16], strides = [1, 1]} : vector<31x16xf32> to vector<16x16xf32>
    %143 = vector.extract_strided_slice %10 {offsets = [8, 0], sizes = [16, 16], strides = [1, 1]} : vector<31x16xf32> to vector<16x16xf32>
    %144 = vector.extract_strided_slice %10 {offsets = [9, 0], sizes = [16, 16], strides = [1, 1]} : vector<31x16xf32> to vector<16x16xf32>
    %145 = vector.extract_strided_slice %10 {offsets = [10, 0], sizes = [16, 16], strides = [1, 1]} : vector<31x16xf32> to vector<16x16xf32>
    %146 = vector.extract_strided_slice %10 {offsets = [11, 0], sizes = [16, 16], strides = [1, 1]} : vector<31x16xf32> to vector<16x16xf32>
    %147 = vector.extract_strided_slice %10 {offsets = [12, 0], sizes = [16, 16], strides = [1, 1]} : vector<31x16xf32> to vector<16x16xf32>
    %148 = vector.extract_strided_slice %10 {offsets = [13, 0], sizes = [16, 16], strides = [1, 1]} : vector<31x16xf32> to vector<16x16xf32>
    %149 = vector.extract_strided_slice %10 {offsets = [14, 0], sizes = [16, 16], strides = [1, 1]} : vector<31x16xf32> to vector<16x16xf32>
    %150 = vector.extract_strided_slice %10 {offsets = [15, 0], sizes = [16, 16], strides = [1, 1]} : vector<31x16xf32> to vector<16x16xf32>
    %151 = tpu.concatenate %135, %136, %137, %138, %139, %140, %141, %142, %143, %144, %145, %146, %147, %148, %149, %150 in 1 : vector<16x16xf32>, vector<16x16xf32>, vector<16x16xf32>, vector<16x16xf32>, vector<16x16xf32>, vector<16x16xf32>, vector<16x16xf32>, vector<16x16xf32>, vector<16x16xf32>, vector<16x16xf32>, vector<16x16xf32>, vector<16x16xf32>, vector<16x16xf32>, vector<16x16xf32>, vector<16x16xf32>, vector<16x16xf32> -> vector<16x256xf32>
    %152 = vector.extract_strided_slice %11 {offsets = [0, 0], sizes = [16, 16], strides = [1, 1]} : vector<31x16xf32> to vector<16x16xf32>
    %153 = vector.extract_strided_slice %11 {offsets = [1, 0], sizes = [16, 16], strides = [1, 1]} : vector<31x16xf32> to vector<16x16xf32>
    %154 = vector.extract_strided_slice %11 {offsets = [2, 0], sizes = [16, 16], strides = [1, 1]} : vector<31x16xf32> to vector<16x16xf32>
    %155 = vector.extract_strided_slice %11 {offsets = [3, 0], sizes = [16, 16], strides = [1, 1]} : vector<31x16xf32> to vector<16x16xf32>
    %156 = vector.extract_strided_slice %11 {offsets = [4, 0], sizes = [16, 16], strides = [1, 1]} : vector<31x16xf32> to vector<16x16xf32>
    %157 = vector.extract_strided_slice %11 {offsets = [5, 0], sizes = [16, 16], strides = [1, 1]} : vector<31x16xf32> to vector<16x16xf32>
    %158 = vector.extract_strided_slice %11 {offsets = [6, 0], sizes = [16, 16], strides = [1, 1]} : vector<31x16xf32> to vector<16x16xf32>
    %159 = vector.extract_strided_slice %11 {offsets = [7, 0], sizes = [16, 16], strides = [1, 1]} : vector<31x16xf32> to vector<16x16xf32>
    %160 = vector.extract_strided_slice %11 {offsets = [8, 0], sizes = [16, 16], strides = [1, 1]} : vector<31x16xf32> to vector<16x16xf32>
    %161 = vector.extract_strided_slice %11 {offsets = [9, 0], sizes = [16, 16], strides = [1, 1]} : vector<31x16xf32> to vector<16x16xf32>
    %162 = vector.extract_strided_slice %11 {offsets = [10, 0], sizes = [16, 16], strides = [1, 1]} : vector<31x16xf32> to vector<16x16xf32>
    %163 = vector.extract_strided_slice %11 {offsets = [11, 0], sizes = [16, 16], strides = [1, 1]} : vector<31x16xf32> to vector<16x16xf32>
    %164 = vector.extract_strided_slice %11 {offsets = [12, 0], sizes = [16, 16], strides = [1, 1]} : vector<31x16xf32> to vector<16x16xf32>
    %165 = vector.extract_strided_slice %11 {offsets = [13, 0], sizes = [16, 16], strides = [1, 1]} : vector<31x16xf32> to vector<16x16xf32>
    %166 = vector.extract_strided_slice %11 {offsets = [14, 0], sizes = [16, 16], strides = [1, 1]} : vector<31x16xf32> to vector<16x16xf32>
    %167 = vector.extract_strided_slice %11 {offsets = [15, 0], sizes = [16, 16], strides = [1, 1]} : vector<31x16xf32> to vector<16x16xf32>
    %168 = tpu.concatenate %152, %153, %154, %155, %156, %157, %158, %159, %160, %161, %162, %163, %164, %165, %166, %167 in 1 : vector<16x16xf32>, vector<16x16xf32>, vector<16x16xf32>, vector<16x16xf32>, vector<16x16xf32>, vector<16x16xf32>, vector<16x16xf32>, vector<16x16xf32>, vector<16x16xf32>, vector<16x16xf32>, vector<16x16xf32>, vector<16x16xf32>, vector<16x16xf32>, vector<16x16xf32>, vector<16x16xf32>, vector<16x16xf32> -> vector<16x256xf32>
    %169 = vector.extract_strided_slice %12 {offsets = [0, 0], sizes = [16, 16], strides = [1, 1]} : vector<31x16xf32> to vector<16x16xf32>
    %170 = vector.extract_strided_slice %12 {offsets = [1, 0], sizes = [16, 16], strides = [1, 1]} : vector<31x16xf32> to vector<16x16xf32>
    %171 = vector.extract_strided_slice %12 {offsets = [2, 0], sizes = [16, 16], strides = [1, 1]} : vector<31x16xf32> to vector<16x16xf32>
    %172 = vector.extract_strided_slice %12 {offsets = [3, 0], sizes = [16, 16], strides = [1, 1]} : vector<31x16xf32> to vector<16x16xf32>
    %173 = vector.extract_strided_slice %12 {offsets = [4, 0], sizes = [16, 16], strides = [1, 1]} : vector<31x16xf32> to vector<16x16xf32>
    %174 = vector.extract_strided_slice %12 {offsets = [5, 0], sizes = [16, 16], strides = [1, 1]} : vector<31x16xf32> to vector<16x16xf32>
    %175 = vector.extract_strided_slice %12 {offsets = [6, 0], sizes = [16, 16], strides = [1, 1]} : vector<31x16xf32> to vector<16x16xf32>
    %176 = vector.extract_strided_slice %12 {offsets = [7, 0], sizes = [16, 16], strides = [1, 1]} : vector<31x16xf32> to vector<16x16xf32>
    %177 = vector.extract_strided_slice %12 {offsets = [8, 0], sizes = [16, 16], strides = [1, 1]} : vector<31x16xf32> to vector<16x16xf32>
    %178 = vector.extract_strided_slice %12 {offsets = [9, 0], sizes = [16, 16], strides = [1, 1]} : vector<31x16xf32> to vector<16x16xf32>
    %179 = vector.extract_strided_slice %12 {offsets = [10, 0], sizes = [16, 16], strides = [1, 1]} : vector<31x16xf32> to vector<16x16xf32>
    %180 = vector.extract_strided_slice %12 {offsets = [11, 0], sizes = [16, 16], strides = [1, 1]} : vector<31x16xf32> to vector<16x16xf32>
    %181 = vector.extract_strided_slice %12 {offsets = [12, 0], sizes = [16, 16], strides = [1, 1]} : vector<31x16xf32> to vector<16x16xf32>
    %182 = vector.extract_strided_slice %12 {offsets = [13, 0], sizes = [16, 16], strides = [1, 1]} : vector<31x16xf32> to vector<16x16xf32>
    %183 = vector.extract_strided_slice %12 {offsets = [14, 0], sizes = [16, 16], strides = [1, 1]} : vector<31x16xf32> to vector<16x16xf32>
    %184 = vector.extract_strided_slice %12 {offsets = [15, 0], sizes = [16, 16], strides = [1, 1]} : vector<31x16xf32> to vector<16x16xf32>
    %185 = tpu.concatenate %169, %170, %171, %172, %173, %174, %175, %176, %177, %178, %179, %180, %181, %182, %183, %184 in 1 : vector<16x16xf32>, vector<16x16xf32>, vector<16x16xf32>, vector<16x16xf32>, vector<16x16xf32>, vector<16x16xf32>, vector<16x16xf32>, vector<16x16xf32>, vector<16x16xf32>, vector<16x16xf32>, vector<16x16xf32>, vector<16x16xf32>, vector<16x16xf32>, vector<16x16xf32>, vector<16x16xf32>, vector<16x16xf32> -> vector<16x256xf32>
    %186 = vector.extract_strided_slice %13 {offsets = [0, 0], sizes = [16, 16], strides = [1, 1]} : vector<31x16xf32> to vector<16x16xf32>
    %187 = vector.extract_strided_slice %13 {offsets = [1, 0], sizes = [16, 16], strides = [1, 1]} : vector<31x16xf32> to vector<16x16xf32>
    %188 = vector.extract_strided_slice %13 {offsets = [2, 0], sizes = [16, 16], strides = [1, 1]} : vector<31x16xf32> to vector<16x16xf32>
    %189 = vector.extract_strided_slice %13 {offsets = [3, 0], sizes = [16, 16], strides = [1, 1]} : vector<31x16xf32> to vector<16x16xf32>
    %190 = vector.extract_strided_slice %13 {offsets = [4, 0], sizes = [16, 16], strides = [1, 1]} : vector<31x16xf32> to vector<16x16xf32>
    %191 = vector.extract_strided_slice %13 {offsets = [5, 0], sizes = [16, 16], strides = [1, 1]} : vector<31x16xf32> to vector<16x16xf32>
    %192 = vector.extract_strided_slice %13 {offsets = [6, 0], sizes = [16, 16], strides = [1, 1]} : vector<31x16xf32> to vector<16x16xf32>
    %193 = vector.extract_strided_slice %13 {offsets = [7, 0], sizes = [16, 16], strides = [1, 1]} : vector<31x16xf32> to vector<16x16xf32>
    %194 = vector.extract_strided_slice %13 {offsets = [8, 0], sizes = [16, 16], strides = [1, 1]} : vector<31x16xf32> to vector<16x16xf32>
    %195 = vector.extract_strided_slice %13 {offsets = [9, 0], sizes = [16, 16], strides = [1, 1]} : vector<31x16xf32> to vector<16x16xf32>
    %196 = vector.extract_strided_slice %13 {offsets = [10, 0], sizes = [16, 16], strides = [1, 1]} : vector<31x16xf32> to vector<16x16xf32>
    %197 = vector.extract_strided_slice %13 {offsets = [11, 0], sizes = [16, 16], strides = [1, 1]} : vector<31x16xf32> to vector<16x16xf32>
    %198 = vector.extract_strided_slice %13 {offsets = [12, 0], sizes = [16, 16], strides = [1, 1]} : vector<31x16xf32> to vector<16x16xf32>
    %199 = vector.extract_strided_slice %13 {offsets = [13, 0], sizes = [16, 16], strides = [1, 1]} : vector<31x16xf32> to vector<16x16xf32>
    %200 = vector.extract_strided_slice %13 {offsets = [14, 0], sizes = [16, 16], strides = [1, 1]} : vector<31x16xf32> to vector<16x16xf32>
    %201 = vector.extract_strided_slice %13 {offsets = [15, 0], sizes = [16, 16], strides = [1, 1]} : vector<31x16xf32> to vector<16x16xf32>
    %202 = tpu.concatenate %186, %187, %188, %189, %190, %191, %192, %193, %194, %195, %196, %197, %198, %199, %200, %201 in 1 : vector<16x16xf32>, vector<16x16xf32>, vector<16x16xf32>, vector<16x16xf32>, vector<16x16xf32>, vector<16x16xf32>, vector<16x16xf32>, vector<16x16xf32>, vector<16x16xf32>, vector<16x16xf32>, vector<16x16xf32>, vector<16x16xf32>, vector<16x16xf32>, vector<16x16xf32>, vector<16x16xf32>, vector<16x16xf32> -> vector<16x256xf32>
    %203 = vector.extract_strided_slice %14 {offsets = [0, 0], sizes = [16, 16], strides = [1, 1]} : vector<31x16xf32> to vector<16x16xf32>
    %204 = vector.extract_strided_slice %14 {offsets = [1, 0], sizes = [16, 16], strides = [1, 1]} : vector<31x16xf32> to vector<16x16xf32>
    %205 = vector.extract_strided_slice %14 {offsets = [2, 0], sizes = [16, 16], strides = [1, 1]} : vector<31x16xf32> to vector<16x16xf32>
    %206 = vector.extract_strided_slice %14 {offsets = [3, 0], sizes = [16, 16], strides = [1, 1]} : vector<31x16xf32> to vector<16x16xf32>
    %207 = vector.extract_strided_slice %14 {offsets = [4, 0], sizes = [16, 16], strides = [1, 1]} : vector<31x16xf32> to vector<16x16xf32>
    %208 = vector.extract_strided_slice %14 {offsets = [5, 0], sizes = [16, 16], strides = [1, 1]} : vector<31x16xf32> to vector<16x16xf32>
    %209 = vector.extract_strided_slice %14 {offsets = [6, 0], sizes = [16, 16], strides = [1, 1]} : vector<31x16xf32> to vector<16x16xf32>
    %210 = vector.extract_strided_slice %14 {offsets = [7, 0], sizes = [16, 16], strides = [1, 1]} : vector<31x16xf32> to vector<16x16xf32>
    %211 = vector.extract_strided_slice %14 {offsets = [8, 0], sizes = [16, 16], strides = [1, 1]} : vector<31x16xf32> to vector<16x16xf32>
    %212 = vector.extract_strided_slice %14 {offsets = [9, 0], sizes = [16, 16], strides = [1, 1]} : vector<31x16xf32> to vector<16x16xf32>
    %213 = vector.extract_strided_slice %14 {offsets = [10, 0], sizes = [16, 16], strides = [1, 1]} : vector<31x16xf32> to vector<16x16xf32>
    %214 = vector.extract_strided_slice %14 {offsets = [11, 0], sizes = [16, 16], strides = [1, 1]} : vector<31x16xf32> to vector<16x16xf32>
    %215 = vector.extract_strided_slice %14 {offsets = [12, 0], sizes = [16, 16], strides = [1, 1]} : vector<31x16xf32> to vector<16x16xf32>
    %216 = vector.extract_strided_slice %14 {offsets = [13, 0], sizes = [16, 16], strides = [1, 1]} : vector<31x16xf32> to vector<16x16xf32>
    %217 = vector.extract_strided_slice %14 {offsets = [14, 0], sizes = [16, 16], strides = [1, 1]} : vector<31x16xf32> to vector<16x16xf32>
    %218 = vector.extract_strided_slice %14 {offsets = [15, 0], sizes = [16, 16], strides = [1, 1]} : vector<31x16xf32> to vector<16x16xf32>
    %219 = tpu.concatenate %203, %204, %205, %206, %207, %208, %209, %210, %211, %212, %213, %214, %215, %216, %217, %218 in 1 : vector<16x16xf32>, vector<16x16xf32>, vector<16x16xf32>, vector<16x16xf32>, vector<16x16xf32>, vector<16x16xf32>, vector<16x16xf32>, vector<16x16xf32>, vector<16x16xf32>, vector<16x16xf32>, vector<16x16xf32>, vector<16x16xf32>, vector<16x16xf32>, vector<16x16xf32>, vector<16x16xf32>, vector<16x16xf32> -> vector<16x256xf32>
    %220 = vector.extract_strided_slice %15 {offsets = [0, 0], sizes = [16, 16], strides = [1, 1]} : vector<31x16xf32> to vector<16x16xf32>
    %221 = vector.extract_strided_slice %15 {offsets = [1, 0], sizes = [16, 16], strides = [1, 1]} : vector<31x16xf32> to vector<16x16xf32>
    %222 = vector.extract_strided_slice %15 {offsets = [2, 0], sizes = [16, 16], strides = [1, 1]} : vector<31x16xf32> to vector<16x16xf32>
    %223 = vector.extract_strided_slice %15 {offsets = [3, 0], sizes = [16, 16], strides = [1, 1]} : vector<31x16xf32> to vector<16x16xf32>
    %224 = vector.extract_strided_slice %15 {offsets = [4, 0], sizes = [16, 16], strides = [1, 1]} : vector<31x16xf32> to vector<16x16xf32>
    %225 = vector.extract_strided_slice %15 {offsets = [5, 0], sizes = [16, 16], strides = [1, 1]} : vector<31x16xf32> to vector<16x16xf32>
    %226 = vector.extract_strided_slice %15 {offsets = [6, 0], sizes = [16, 16], strides = [1, 1]} : vector<31x16xf32> to vector<16x16xf32>
    %227 = vector.extract_strided_slice %15 {offsets = [7, 0], sizes = [16, 16], strides = [1, 1]} : vector<31x16xf32> to vector<16x16xf32>
    %228 = vector.extract_strided_slice %15 {offsets = [8, 0], sizes = [16, 16], strides = [1, 1]} : vector<31x16xf32> to vector<16x16xf32>
    %229 = vector.extract_strided_slice %15 {offsets = [9, 0], sizes = [16, 16], strides = [1, 1]} : vector<31x16xf32> to vector<16x16xf32>
    %230 = vector.extract_strided_slice %15 {offsets = [10, 0], sizes = [16, 16], strides = [1, 1]} : vector<31x16xf32> to vector<16x16xf32>
    %231 = vector.extract_strided_slice %15 {offsets = [11, 0], sizes = [16, 16], strides = [1, 1]} : vector<31x16xf32> to vector<16x16xf32>
    %232 = vector.extract_strided_slice %15 {offsets = [12, 0], sizes = [16, 16], strides = [1, 1]} : vector<31x16xf32> to vector<16x16xf32>
    %233 = vector.extract_strided_slice %15 {offsets = [13, 0], sizes = [16, 16], strides = [1, 1]} : vector<31x16xf32> to vector<16x16xf32>
    %234 = vector.extract_strided_slice %15 {offsets = [14, 0], sizes = [16, 16], strides = [1, 1]} : vector<31x16xf32> to vector<16x16xf32>
    %235 = vector.extract_strided_slice %15 {offsets = [15, 0], sizes = [16, 16], strides = [1, 1]} : vector<31x16xf32> to vector<16x16xf32>
    %236 = tpu.concatenate %220, %221, %222, %223, %224, %225, %226, %227, %228, %229, %230, %231, %232, %233, %234, %235 in 1 : vector<16x16xf32>, vector<16x16xf32>, vector<16x16xf32>, vector<16x16xf32>, vector<16x16xf32>, vector<16x16xf32>, vector<16x16xf32>, vector<16x16xf32>, vector<16x16xf32>, vector<16x16xf32>, vector<16x16xf32>, vector<16x16xf32>, vector<16x16xf32>, vector<16x16xf32>, vector<16x16xf32>, vector<16x16xf32> -> vector<16x256xf32>
    %237 = tpu.concatenate %32, %49, %66, %83, %100, %117, %134, %151, %168, %185, %202, %219, %236 in 0 : vector<16x256xf32>, vector<16x256xf32>, vector<16x256xf32>, vector<16x256xf32>, vector<16x256xf32>, vector<16x256xf32>, vector<16x256xf32>, vector<16x256xf32>, vector<16x256xf32>, vector<16x256xf32>, vector<16x256xf32>, vector<16x256xf32>, vector<16x256xf32> -> vector<208x256xf32>
    %cst = arith.constant dense<0.000000e+00> : vector<96x256xf32>
    %238 = tpu.matmul %0, %237, %cst {dimension_numbers = #tpu.dot_dimension_numbers<[1], [0], [0], [1], [0, 0, 1, 1], [], []>} : vector<96x208xf32>, vector<208x256xf32>, vector<96x256xf32> -> vector<96x256xf32>
    %239 = vector.extract_strided_slice %238 {offsets = [0, 0], sizes = [48, 256], strides = [1, 1]} : vector<96x256xf32> to vector<48x256xf32>
    %240 = vector.extract_strided_slice %238 {offsets = [48, 0], sizes = [48, 256], strides = [1, 1]} : vector<96x256xf32> to vector<48x256xf32>
    %241 = arith.mulf %239, %239 : vector<48x256xf32>
    %242 = arith.mulf %240, %240 : vector<48x256xf32>
    %243 = arith.addf %241, %242 : vector<48x256xf32>
    %244 = math.sqrt %243 : vector<48x256xf32>
    %245 = vector.extract_strided_slice %244 {offsets = [0, 0], sizes = [48, 16], strides = [1, 1]} : vector<48x256xf32> to vector<48x16xf32>
    %c0_5 = arith.constant 0 : index
    %c0_6 = arith.constant 0 : index
    %c0_7 = arith.constant 0 : index
    %c0_8 = arith.constant 0 : index
    %246 = vector.load %arg4[%c0_5, %c0_6, %c0_7, %c0_8] : memref<1x48x16x16xf32, #tpu.memory_space<vmem>>, vector<1x48x1x16xf32>
    %247 = vector.shape_cast %246 : vector<1x48x1x16xf32> to vector<48x16xf32>
    %248 = vector.shape_cast %245 : vector<48x16xf32> to vector<1x48x1x16xf32>
    tpu.vector_store %arg4[%c0_5, %c0_6, %c0_7, %c0_8], %248 {strides = array<i32>} : memref<1x48x16x16xf32, #tpu.memory_space<vmem>>, vector<1x48x1x16xf32>,
    %249 = vector.extract_strided_slice %244 {offsets = [0, 16], sizes = [48, 16], strides = [1, 1]} : vector<48x256xf32> to vector<48x16xf32>
    %c0_9 = arith.constant 0 : index
    %c0_10 = arith.constant 0 : index
    %c1 = arith.constant 1 : index
    %c0_11 = arith.constant 0 : index
    %250 = vector.load %arg4[%c0_9, %c0_10, %c1, %c0_11] : memref<1x48x16x16xf32, #tpu.memory_space<vmem>>, vector<1x48x1x16xf32>
    %251 = vector.shape_cast %250 : vector<1x48x1x16xf32> to vector<48x16xf32>
    %252 = vector.shape_cast %249 : vector<48x16xf32> to vector<1x48x1x16xf32>
    tpu.vector_store %arg4[%c0_9, %c0_10, %c1, %c0_11], %252 {strides = array<i32>} : memref<1x48x16x16xf32, #tpu.memory_space<vmem>>, vector<1x48x1x16xf32>,
    %253 = vector.extract_strided_slice %244 {offsets = [0, 32], sizes = [48, 16], strides = [1, 1]} : vector<48x256xf32> to vector<48x16xf32>
    %c0_12 = arith.constant 0 : index
    %c0_13 = arith.constant 0 : index
    %c2 = arith.constant 2 : index
    %c0_14 = arith.constant 0 : index
    %254 = vector.load %arg4[%c0_12, %c0_13, %c2, %c0_14] : memref<1x48x16x16xf32, #tpu.memory_space<vmem>>, vector<1x48x1x16xf32>
    %255 = vector.shape_cast %254 : vector<1x48x1x16xf32> to vector<48x16xf32>
    %256 = vector.shape_cast %253 : vector<48x16xf32> to vector<1x48x1x16xf32>
    tpu.vector_store %arg4[%c0_12, %c0_13, %c2, %c0_14], %256 {strides = array<i32>} : memref<1x48x16x16xf32, #tpu.memory_space<vmem>>, vector<1x48x1x16xf32>,
    %257 = vector.extract_strided_slice %244 {offsets = [0, 48], sizes = [48, 16], strides = [1, 1]} : vector<48x256xf32> to vector<48x16xf32>
    %c0_15 = arith.constant 0 : index
    %c0_16 = arith.constant 0 : index
    %c3 = arith.constant 3 : index
    %c0_17 = arith.constant 0 : index
    %258 = vector.load %arg4[%c0_15, %c0_16, %c3, %c0_17] : memref<1x48x16x16xf32, #tpu.memory_space<vmem>>, vector<1x48x1x16xf32>
    %259 = vector.shape_cast %258 : vector<1x48x1x16xf32> to vector<48x16xf32>
    %260 = vector.shape_cast %257 : vector<48x16xf32> to vector<1x48x1x16xf32>
    tpu.vector_store %arg4[%c0_15, %c0_16, %c3, %c0_17], %260 {strides = array<i32>} : memref<1x48x16x16xf32, #tpu.memory_space<vmem>>, vector<1x48x1x16xf32>,
    %261 = vector.extract_strided_slice %244 {offsets = [0, 64], sizes = [48, 16], strides = [1, 1]} : vector<48x256xf32> to vector<48x16xf32>
    %c0_18 = arith.constant 0 : index
    %c0_19 = arith.constant 0 : index
    %c4 = arith.constant 4 : index
    %c0_20 = arith.constant 0 : index
    %262 = vector.load %arg4[%c0_18, %c0_19, %c4, %c0_20] : memref<1x48x16x16xf32, #tpu.memory_space<vmem>>, vector<1x48x1x16xf32>
    %263 = vector.shape_cast %262 : vector<1x48x1x16xf32> to vector<48x16xf32>
    %264 = vector.shape_cast %261 : vector<48x16xf32> to vector<1x48x1x16xf32>
    tpu.vector_store %arg4[%c0_18, %c0_19, %c4, %c0_20], %264 {strides = array<i32>} : memref<1x48x16x16xf32, #tpu.memory_space<vmem>>, vector<1x48x1x16xf32>,
    %265 = vector.extract_strided_slice %244 {offsets = [0, 80], sizes = [48, 16], strides = [1, 1]} : vector<48x256xf32> to vector<48x16xf32>
    %c0_21 = arith.constant 0 : index
    %c0_22 = arith.constant 0 : index
    %c5 = arith.constant 5 : index
    %c0_23 = arith.constant 0 : index
    %266 = vector.load %arg4[%c0_21, %c0_22, %c5, %c0_23] : memref<1x48x16x16xf32, #tpu.memory_space<vmem>>, vector<1x48x1x16xf32>
    %267 = vector.shape_cast %266 : vector<1x48x1x16xf32> to vector<48x16xf32>
    %268 = vector.shape_cast %265 : vector<48x16xf32> to vector<1x48x1x16xf32>
    tpu.vector_store %arg4[%c0_21, %c0_22, %c5, %c0_23], %268 {strides = array<i32>} : memref<1x48x16x16xf32, #tpu.memory_space<vmem>>, vector<1x48x1x16xf32>,
    %269 = vector.extract_strided_slice %244 {offsets = [0, 96], sizes = [48, 16], strides = [1, 1]} : vector<48x256xf32> to vector<48x16xf32>
    %c0_24 = arith.constant 0 : index
    %c0_25 = arith.constant 0 : index
    %c6 = arith.constant 6 : index
    %c0_26 = arith.constant 0 : index
    %270 = vector.load %arg4[%c0_24, %c0_25, %c6, %c0_26] : memref<1x48x16x16xf32, #tpu.memory_space<vmem>>, vector<1x48x1x16xf32>
    %271 = vector.shape_cast %270 : vector<1x48x1x16xf32> to vector<48x16xf32>
    %272 = vector.shape_cast %269 : vector<48x16xf32> to vector<1x48x1x16xf32>
    tpu.vector_store %arg4[%c0_24, %c0_25, %c6, %c0_26], %272 {strides = array<i32>} : memref<1x48x16x16xf32, #tpu.memory_space<vmem>>, vector<1x48x1x16xf32>,
    %273 = vector.extract_strided_slice %244 {offsets = [0, 112], sizes = [48, 16], strides = [1, 1]} : vector<48x256xf32> to vector<48x16xf32>
    %c0_27 = arith.constant 0 : index
    %c0_28 = arith.constant 0 : index
    %c7 = arith.constant 7 : index
    %c0_29 = arith.constant 0 : index
    %274 = vector.load %arg4[%c0_27, %c0_28, %c7, %c0_29] : memref<1x48x16x16xf32, #tpu.memory_space<vmem>>, vector<1x48x1x16xf32>
    %275 = vector.shape_cast %274 : vector<1x48x1x16xf32> to vector<48x16xf32>
    %276 = vector.shape_cast %273 : vector<48x16xf32> to vector<1x48x1x16xf32>
    tpu.vector_store %arg4[%c0_27, %c0_28, %c7, %c0_29], %276 {strides = array<i32>} : memref<1x48x16x16xf32, #tpu.memory_space<vmem>>, vector<1x48x1x16xf32>,
    %277 = vector.extract_strided_slice %244 {offsets = [0, 128], sizes = [48, 16], strides = [1, 1]} : vector<48x256xf32> to vector<48x16xf32>
    %c0_30 = arith.constant 0 : index
    %c0_31 = arith.constant 0 : index
    %c8 = arith.constant 8 : index
    %c0_32 = arith.constant 0 : index
    %278 = vector.load %arg4[%c0_30, %c0_31, %c8, %c0_32] : memref<1x48x16x16xf32, #tpu.memory_space<vmem>>, vector<1x48x1x16xf32>
    %279 = vector.shape_cast %278 : vector<1x48x1x16xf32> to vector<48x16xf32>
    %280 = vector.shape_cast %277 : vector<48x16xf32> to vector<1x48x1x16xf32>
    tpu.vector_store %arg4[%c0_30, %c0_31, %c8, %c0_32], %280 {strides = array<i32>} : memref<1x48x16x16xf32, #tpu.memory_space<vmem>>, vector<1x48x1x16xf32>,
    %281 = vector.extract_strided_slice %244 {offsets = [0, 144], sizes = [48, 16], strides = [1, 1]} : vector<48x256xf32> to vector<48x16xf32>
    %c0_33 = arith.constant 0 : index
    %c0_34 = arith.constant 0 : index
    %c9 = arith.constant 9 : index
    %c0_35 = arith.constant 0 : index
    %282 = vector.load %arg4[%c0_33, %c0_34, %c9, %c0_35] : memref<1x48x16x16xf32, #tpu.memory_space<vmem>>, vector<1x48x1x16xf32>
    %283 = vector.shape_cast %282 : vector<1x48x1x16xf32> to vector<48x16xf32>
    %284 = vector.shape_cast %281 : vector<48x16xf32> to vector<1x48x1x16xf32>
    tpu.vector_store %arg4[%c0_33, %c0_34, %c9, %c0_35], %284 {strides = array<i32>} : memref<1x48x16x16xf32, #tpu.memory_space<vmem>>, vector<1x48x1x16xf32>,
    %285 = vector.extract_strided_slice %244 {offsets = [0, 160], sizes = [48, 16], strides = [1, 1]} : vector<48x256xf32> to vector<48x16xf32>
    %c0_36 = arith.constant 0 : index
    %c0_37 = arith.constant 0 : index
    %c10 = arith.constant 10 : index
    %c0_38 = arith.constant 0 : index
    %286 = vector.load %arg4[%c0_36, %c0_37, %c10, %c0_38] : memref<1x48x16x16xf32, #tpu.memory_space<vmem>>, vector<1x48x1x16xf32>
    %287 = vector.shape_cast %286 : vector<1x48x1x16xf32> to vector<48x16xf32>
    %288 = vector.shape_cast %285 : vector<48x16xf32> to vector<1x48x1x16xf32>
    tpu.vector_store %arg4[%c0_36, %c0_37, %c10, %c0_38], %288 {strides = array<i32>} : memref<1x48x16x16xf32, #tpu.memory_space<vmem>>, vector<1x48x1x16xf32>,
    %289 = vector.extract_strided_slice %244 {offsets = [0, 176], sizes = [48, 16], strides = [1, 1]} : vector<48x256xf32> to vector<48x16xf32>
    %c0_39 = arith.constant 0 : index
    %c0_40 = arith.constant 0 : index
    %c11 = arith.constant 11 : index
    %c0_41 = arith.constant 0 : index
    %290 = vector.load %arg4[%c0_39, %c0_40, %c11, %c0_41] : memref<1x48x16x16xf32, #tpu.memory_space<vmem>>, vector<1x48x1x16xf32>
    %291 = vector.shape_cast %290 : vector<1x48x1x16xf32> to vector<48x16xf32>
    %292 = vector.shape_cast %289 : vector<48x16xf32> to vector<1x48x1x16xf32>
    tpu.vector_store %arg4[%c0_39, %c0_40, %c11, %c0_41], %292 {strides = array<i32>} : memref<1x48x16x16xf32, #tpu.memory_space<vmem>>, vector<1x48x1x16xf32>,
    %293 = vector.extract_strided_slice %244 {offsets = [0, 192], sizes = [48, 16], strides = [1, 1]} : vector<48x256xf32> to vector<48x16xf32>
    %c0_42 = arith.constant 0 : index
    %c0_43 = arith.constant 0 : index
    %c12 = arith.constant 12 : index
    %c0_44 = arith.constant 0 : index
    %294 = vector.load %arg4[%c0_42, %c0_43, %c12, %c0_44] : memref<1x48x16x16xf32, #tpu.memory_space<vmem>>, vector<1x48x1x16xf32>
    %295 = vector.shape_cast %294 : vector<1x48x1x16xf32> to vector<48x16xf32>
    %296 = vector.shape_cast %293 : vector<48x16xf32> to vector<1x48x1x16xf32>
    tpu.vector_store %arg4[%c0_42, %c0_43, %c12, %c0_44], %296 {strides = array<i32>} : memref<1x48x16x16xf32, #tpu.memory_space<vmem>>, vector<1x48x1x16xf32>,
    %297 = vector.extract_strided_slice %244 {offsets = [0, 208], sizes = [48, 16], strides = [1, 1]} : vector<48x256xf32> to vector<48x16xf32>
    %c0_45 = arith.constant 0 : index
    %c0_46 = arith.constant 0 : index
    %c13 = arith.constant 13 : index
    %c0_47 = arith.constant 0 : index
    %298 = vector.load %arg4[%c0_45, %c0_46, %c13, %c0_47] : memref<1x48x16x16xf32, #tpu.memory_space<vmem>>, vector<1x48x1x16xf32>
    %299 = vector.shape_cast %298 : vector<1x48x1x16xf32> to vector<48x16xf32>
    %300 = vector.shape_cast %297 : vector<48x16xf32> to vector<1x48x1x16xf32>
    tpu.vector_store %arg4[%c0_45, %c0_46, %c13, %c0_47], %300 {strides = array<i32>} : memref<1x48x16x16xf32, #tpu.memory_space<vmem>>, vector<1x48x1x16xf32>,
    %301 = vector.extract_strided_slice %244 {offsets = [0, 224], sizes = [48, 16], strides = [1, 1]} : vector<48x256xf32> to vector<48x16xf32>
    %c0_48 = arith.constant 0 : index
    %c0_49 = arith.constant 0 : index
    %c14 = arith.constant 14 : index
    %c0_50 = arith.constant 0 : index
    %302 = vector.load %arg4[%c0_48, %c0_49, %c14, %c0_50] : memref<1x48x16x16xf32, #tpu.memory_space<vmem>>, vector<1x48x1x16xf32>
    %303 = vector.shape_cast %302 : vector<1x48x1x16xf32> to vector<48x16xf32>
    %304 = vector.shape_cast %301 : vector<48x16xf32> to vector<1x48x1x16xf32>
    tpu.vector_store %arg4[%c0_48, %c0_49, %c14, %c0_50], %304 {strides = array<i32>} : memref<1x48x16x16xf32, #tpu.memory_space<vmem>>, vector<1x48x1x16xf32>,
    %305 = vector.extract_strided_slice %244 {offsets = [0, 240], sizes = [48, 16], strides = [1, 1]} : vector<48x256xf32> to vector<48x16xf32>
    %c0_51 = arith.constant 0 : index
    %c0_52 = arith.constant 0 : index
    %c15 = arith.constant 15 : index
    %c0_53 = arith.constant 0 : index
    %306 = vector.load %arg4[%c0_51, %c0_52, %c15, %c0_53] : memref<1x48x16x16xf32, #tpu.memory_space<vmem>>, vector<1x48x1x16xf32>
    %307 = vector.shape_cast %306 : vector<1x48x1x16xf32> to vector<48x16xf32>
    %308 = vector.shape_cast %305 : vector<48x16xf32> to vector<1x48x1x16xf32>
    tpu.vector_store %arg4[%c0_51, %c0_52, %c15, %c0_53], %308 {strides = array<i32>} : memref<1x48x16x16xf32, #tpu.memory_space<vmem>>, vector<1x48x1x16xf32>,
    return
  }
  func.func @transform_0(%arg0: i32, %arg1: i32) -> (i32, i32) {
    %c0_i32 = arith.constant 0 : i32
    %c0_i32_0 = arith.constant 0 : i32
    %c0_i32_1 = arith.constant 0 : i32
    return %c0_i32, %c0_i32_0 : i32, i32
  }
  func.func @transform_1(%arg0: i32, %arg1: i32) -> (i32, i32, i32, i32) {
    %c0_i32 = arith.constant 0 : i32
    %c0_i32_0 = arith.constant 0 : i32
    %c0_i32_1 = arith.constant 0 : i32
    return %arg0, %arg1, %c0_i32, %c0_i32_0 : i32, i32, i32, i32
  }
  func.func @transform_2(%arg0: i32, %arg1: i32) -> (i32, i32, i32, i32) {
    %c0_i32 = arith.constant 0 : i32
    %c0_i32_0 = arith.constant 0 : i32
    %c0_i32_1 = arith.constant 0 : i32
    return %arg0, %c0_i32, %arg1, %c0_i32_0 : i32, i32, i32, i32
  }
}

</mosaic_0001>

<llo_original>
// kernel: tpu_custom_call.1
$region0: #{tpu_custom_call.1}
  #allocation0 [shape = 'u32[]', space=smem, size = 0x4, offset = 0x4, fixed_abs, tag = 'smem constant byte address 0x4 - core index']
  #allocation1 [shape = 'u32[144,128]{1,0:T(1,128)}', space=vmem, size = 0x12000, scoped, tag = 'internal scratch']
  %s0 = inlined_call_operand.hbm [shape: f32[96,208], index: 0, kind: input, shape index: {}]
  %s1 = inlined_call_operand.vmem [shape: f32[2,1,31,28], index: 1, kind: input, shape index: {}]
  %s2 = inlined_call_operand.vmem [shape: f32[2,48,16,16], index: 2, kind: output, shape index: {}]
  %s3 = sld [smem:[#allocation0]]
  $region45: #{tpu_custom_call.1} parent=0
    _
  %s5 = ssub.s32 1, %s3
  %s6 = scalar_select 0, %s5, %s3
  $region1: #{tpu_custom_call.1} parent=0
    #allocation2 [shape = 'u8[98304]{0}', space=vmem, size = 0x18000, scoped, tag = 'input window, operand 0, single buffered']
    #allocation3 [shape = 's32[2]{0}', space=sflag, size = 0x8, scoped, tag = 'scoped memory for tpu_custom_call.1']
    %7 = vsyncpa [#allocation3], 0
    loop: start=0, step=1, limit=4
    $region2: #{tpu_custom_call.1} parent=1 // loop_pre_header
      _
    $region3: #{tpu_custom_call.1} parent=1 // loop_header
      %s9 = sphi 0, %s13
      %p10 = scmp.ge.s32.totalorder %s9, 4
      %s16 = sphi 0, %s28
      %s17 = sphi 0, %s24
      %s18 = sphi 0, %s16
      %s19 = sphi 0, %s17
      %s20 = sphi 0, %s18
      %s21 = sphi 0, %s19
      %s29 = sphi 0, %s29
      %s31 = sphi 0, %s29
      %s32 = sphi 0, %s31
      %s46 = sphi 0, %s32
      %s54 = sphi 0, %s56
      %s57 = sphi 0, %s54
      %s58 = sphi 0, %s57
      %s74 = sphi 0, %s58
      %s82 = sphi 0, %s84
      %s85 = sphi 0, %s82
      %s86 = sphi 0, %s85
      %s102 = sphi 0, %s86
    $region4: #{tpu_custom_call.1} parent=1 // loop_header_branch
      %12 = sbr.rel (%p10) target = $region8
    $region5: #{tpu_custom_call.1} parent=1 // loop_body
      %s14 = ssub.s32 %s9, 1
      %s15 = ssub.s32 %s9, 2
      %s22 = sadd.s32 1, %s17
      %p23 = scmp.ge.s32.totalorder %s22, 1
      %s24 = scalar_select %p23, 0, %s22
      %s25 = sadd.s32 1, %s16
      %s26 = scalar_select %p23, %s25, %s16
      %p27 = scmp.ge.s32.totalorder %s26, 2
      %s28 = scalar_select %p27, 0, %s26
      %s30 = sadd.s32 %s29, 1
      %p33 = scmp.eq.s32.totalorder %s9, 1
      %p34 = scmp.ne.s32.totalorder %s29, %s31
      %p35 = scmp.eq.s32.totalorder %s9, 0
      %p36 = por %p34, %p35
      %p37 = scmp.ne.s32.totalorder %s29, %s31
      %p38 = scmp.eq.s32.totalorder %s14, 1
      %p39 = por %p37, %p38
      %p40 = scmp.ne.s32.totalorder %s31, %s32
      %p41 = scmp.eq.s32.totalorder %s14, 0
      %p42 = por %p40, %p41
      %p43 = scmp.ne.s32.totalorder %s31, %s32
      %p44 = scmp.eq.s32.totalorder %s15, 1
      %p45 = por %p43, %p44
      %p47 = scmp.ne.s32.totalorder %s32, %s46
      %p48 = scmp.eq.s32.totalorder %s15, 0
      %p49 = por %p47, %p48
      %s50 = ssub.s32 %s16, %s28
      %s51 = ssub.s32 %s17, %s24
      %s52 = sor.u32 %s50, %s51
      %p53 = scmp.eq.s32.totalorder %s52, 0
      %s55 = sadd.s32 %s54, 1
      %s56 = scalar_select %p53, %s54, %s55
      %p59 = pneg %p53
      %p60 = scmp.eq.s32.totalorder %s9, 1
      %p61 = por %p59, %p60
      %p62 = scmp.ne.s32.totalorder %s54, %s57
      %p63 = scmp.eq.s32.totalorder %s9, 0
      %p64 = por %p62, %p63
      %p65 = scmp.ne.s32.totalorder %s54, %s57
      %p66 = scmp.eq.s32.totalorder %s14, 1
      %p67 = por %p65, %p66
      %p68 = scmp.ne.s32.totalorder %s57, %s58
      %p69 = scmp.eq.s32.totalorder %s14, 0
      %p70 = por %p68, %p69
      %p71 = scmp.ne.s32.totalorder %s57, %s58
      %p72 = scmp.eq.s32.totalorder %s15, 1
      %p73 = por %p71, %p72
      %p75 = scmp.ne.s32.totalorder %s58, %s74
      %p76 = scmp.eq.s32.totalorder %s15, 0
      %p77 = por %p75, %p76
      %s78 = ssub.s32 %s16, %s28
      %s79 = ssub.s32 %s17, %s24
      %s80 = sor.u32 %s78, %s79
      %p81 = scmp.eq.s32.totalorder %s80, 0
      %s83 = sadd.s32 %s82, 1
      %s84 = scalar_select %p81, %s82, %s83
      %p87 = pneg %p81
      %p88 = scmp.eq.s32.totalorder %s9, 1
      %p89 = por %p87, %p88
      %p90 = scmp.ne.s32.totalorder %s82, %s85
      %p91 = scmp.eq.s32.totalorder %s9, 0
      %p92 = por %p90, %p91
      %p93 = scmp.ne.s32.totalorder %s82, %s85
      %p94 = scmp.eq.s32.totalorder %s14, 1
      %p95 = por %p93, %p94
      %p96 = scmp.ne.s32.totalorder %s85, %s86
      %p97 = scmp.eq.s32.totalorder %s14, 0
      %p98 = por %p96, %p97
      %p99 = scmp.ne.s32.totalorder %s85, %s86
      %p100 = scmp.eq.s32.totalorder %s15, 1
      %p101 = por %p99, %p100
      %p103 = scmp.ne.s32.totalorder %s86, %s102
      %p104 = scmp.eq.s32.totalorder %s15, 0
      %p105 = por %p103, %p104
      %p106 = scmp.le.s32.totalorder 1, %s9
      %p107 = scmp.lt.s32.totalorder %s9, 3
      %p108 = pnand %p106, %p107
      %p109 = pneg %p108
      // Predicated region
      $region9: #{tpu_custom_call.1} parent=5 // pred_check
        _
      $region10: #{tpu_custom_call.1} parent=5 // pred_check_branch
        %111 = sbr.rel (%p108) target = $region12
      $region11: #{tpu_custom_call.1} parent=5 // pred_region
        %s112 = ssub.s32 %s9, 1
        // Predicated region
        $region13: #{tpu_custom_call.1} parent=11 // pred_check
          %p113 = pneg %p42
        $region14: #{tpu_custom_call.1} parent=11 // pred_check_branch
          %115 = sbr.rel (%p113) target = $region16
        $region15: #{tpu_custom_call.1} parent=11 // pred_region
          %s117 = ssub.s32 3072, 3072
          %118 = vsyncadd [#allocation3], %s117
          %s119 = sshll.u32 [#allocation2], 4
          %s120 = int_to_ptr.vmem [resolvable:$true] %s119
          %125 = dma.hbm_to_vmem [thread:$0]  %s0, 3072, %s120, [#allocation3], 256, 256, 16
        $region16: #{tpu_custom_call.1} parent=11 // pred_fallthru
          _
      $region12: #{tpu_custom_call.1} parent=5 // pred_fallthru
        _
      %p126 = scmp.lt.s32.totalorder %s9, 2
      // Predicated region
      $region17: #{tpu_custom_call.1} parent=5 // pred_check
        %p127 = pneg %p126
      $region18: #{tpu_custom_call.1} parent=5 // pred_check_branch
        %129 = sbr.rel (%p127) target = $region20
      $region19: #{tpu_custom_call.1} parent=5 // pred_region
        // Predicated region
        $region21: #{tpu_custom_call.1} parent=19 // pred_check
          %p130 = pneg %p64
        $region22: #{tpu_custom_call.1} parent=19 // pred_check_branch
          %132 = sbr.rel (%p130) target = $region24
        $region23: #{tpu_custom_call.1} parent=19 // pred_region
          %p133 = scmp.lt.s32.totalorder %s16, 1
          %s134 = scalar_select %p133, %s16, 1
          %p135 = scmp.lt.s32.totalorder %s17, 0
          %s136 = scalar_select %p135, %s17, 0
          %s137 = smul.addr %s136, 4
          %s138 = smul.addr %s134, 4
          %s139 = sadd.s32 %s137, %s138
          %s140 = smul.addr %s139, 8
          %s141 = scalar_lea.vmem %s1, %s140
        $region24: #{tpu_custom_call.1} parent=19 // pred_fallthru
          _
      $region20: #{tpu_custom_call.1} parent=5 // pred_fallthru
        _
      %p142 = scmp.le.s32.totalorder 1, %s9
      %p143 = scmp.lt.s32.totalorder %s9, 3
      %p144 = pnand %p142, %p143
      %p145 = pneg %p144
      // Predicated region
      $region25: #{tpu_custom_call.1} parent=5 // pred_check
        _
      $region26: #{tpu_custom_call.1} parent=5 // pred_check_branch
        %147 = sbr.rel (%p144) target = $region28
      $region27: #{tpu_custom_call.1} parent=5 // pred_region
        %s148 = ssub.s32 %s9, 1
        // Predicated region
        $region29: #{tpu_custom_call.1} parent=27 // pred_check
          %p149 = pneg %p42
        $region30: #{tpu_custom_call.1} parent=27 // pred_check_branch
          %151 = sbr.rel (%p149) target = $region32
        $region31: #{tpu_custom_call.1} parent=27 // pred_region
          %152 = dma.done [#allocation3], 3072
        $region32: #{tpu_custom_call.1} parent=27 // pred_fallthru
          _
        %p153 = pneg %p42
        %p154 = pneg %p39
        %p155 = scmp.lt.s32.totalorder %s18, 1
        %s156 = scalar_select %p155, %s18, 1
        %p157 = scmp.lt.s32.totalorder %s19, 0
        %s158 = scalar_select %p157, %s19, 0
        %s159 = smul.addr %s158, 4
        %s160 = smul.addr %s156, 4
        %s161 = sadd.s32 %s159, %s160
        %s162 = smul.addr %s161, 8
        %s163 = scalar_lea.vmem %s1, %s162
        %p164 = pneg %p70
        %p165 = pneg %p67
        %p166 = pneg %p98
        %p167 = pneg %p95
        %s168 = smul.u32 2, %s19
        %p169 = scmp.lt.s32.totalorder %s18, 1
        %s170 = scalar_select %p169, %s18, 1
        %p171 = scmp.lt.s32.totalorder %s168, 1
        %s172 = scalar_select %p171, %s168, 1
        %s173 = smul.addr %s170, 96
        %s174 = sadd.s32 %s172, %s173
        %s175 = smul.addr %s174, 8
        %s176 = scalar_lea.vmem %s2, %s175
        %p177 = scmp.lt.s32.totalorder %s18, 1
        %s178 = scalar_select %p177, %s18, 1
        %p179 = scmp.lt.s32.totalorder %s19, 0
        %s180 = scalar_select %p179, %s19, 0
        %s181 = smul.addr %s180, 4
        %s182 = smul.addr %s178, 4
        %s183 = sadd.s32 %s181, %s182
        %s184 = smul.addr %s183, 8
        %s185 = scalar_lea.vmem %s1, %s184
        %s186 = smul.u32 2, %s19
        %p187 = scmp.lt.s32.totalorder %s18, 1
        %s188 = scalar_select %p187, %s18, 1
        %p189 = scmp.lt.s32.totalorder %s186, 1
        %s190 = scalar_select %p189, %s186, 1
        %s191 = smul.addr %s188, 96
        %s192 = sadd.s32 %s190, %s191
        %s193 = smul.addr %s192, 8
        %s194 = scalar_lea.vmem %s2, %s193
        %s195 = smul.u32 2, %s19
        %v196 = vld [vmem:[#allocation2] sm:$0xff]
        %v197 = vld [vmem:[#allocation2 + $0x8] sm:$0xff]
        %v198 = vld [vmem:[#allocation2 + $0x10] sm:$0xff]
        %v199 = vld [vmem:[#allocation2 + $0x18] sm:$0xff]
        %v200 = vld [vmem:[#allocation2 + $0x20] sm:$0xff]
        %v201 = vld [vmem:[#allocation2 + $0x28] sm:$0xff]
        %v202 = vld [vmem:[#allocation2 + $0x30] sm:$0xff]
        %v203 = vld [vmem:[#allocation2 + $0x38] sm:$0xff]
        %v204 = vld [vmem:[#allocation2 + $0x40] sm:$0xff]
        %v205 = vld [vmem:[#allocation2 + $0x48] sm:$0xff]
        %v206 = vld [vmem:[#allocation2 + $0x50] sm:$0xff]
        %v207 = vld [vmem:[#allocation2 + $0x58] sm:$0xff]
        %v208 = vld [vmem:[#allocation2 + $0x60] sm:$0xff]
        %v209 = vld [vmem:[#allocation2 + $0x68] sm:$0xff]
        %v210 = vld [vmem:[#allocation2 + $0x70] sm:$0xff]
        %v211 = vld [vmem:[#allocation2 + $0x78] sm:$0xff]
        %v212 = vld [vmem:[#allocation2 + $0x80] sm:$0xff]
        %v213 = vld [vmem:[#allocation2 + $0x88] sm:$0xff]
        %v214 = vld [vmem:[#allocation2 + $0x90] sm:$0xff]
        %v215 = vld [vmem:[#allocation2 + $0x98] sm:$0xff]
        %v216 = vld [vmem:[#allocation2 + $0xa0] sm:$0xff]
        %v217 = vld [vmem:[#allocation2 + $0xa8] sm:$0xff]
        %v218 = vld [vmem:[#allocation2 + $0xb0] sm:$0xff]
        %v219 = vld [vmem:[#allocation2 + $0xb8] sm:$0xff]
        %v220 = vld [vmem:[%s185] sm:$0xff]
        %v221 = vld [vmem:[%s185 + $0x8] sm:$0xff]
        %v222 = vld [vmem:[%s185 + $0x10] sm:$0xff]
        %v223 = vld [vmem:[%s185 + $0x18] sm:$0x7f]
        %vm227 = vcmask 1046528
        %v228 = vrot.slane %v220, 1
        %v229 = vrot.slane %v221, 1
        %v230 = vsel %vm227, %v228, %v229
        %v231 = vrot.slane %v222, 1
        %v232 = vsel %vm227, %v229, %v231
        %233 = vrot.lane.b32.xlu0 %v230, 16
        %v234 = vpop.permute.xlu0 %233
        %235 = vrot.lane.b32.xlu0 %v232, 16
        %v236 = vpop.permute.xlu0 %235
        %vm239 = vcmask 1045504
        %v240 = vrot.slane %v220, 2
        %v241 = vrot.slane %v221, 2
        %v242 = vsel %vm239, %v240, %v241
        %v243 = vrot.slane %v222, 2
        %v244 = vsel %vm239, %v241, %v243
        %245 = vrot.lane.b32.xlu0 %v242, 32
        %v246 = vpop.permute.xlu0 %245
        %247 = vrot.lane.b32.xlu0 %v244, 32
        %v248 = vpop.permute.xlu0 %247
        %vm251 = vcmask 1044480
        %v252 = vrot.slane %v220, 3
        %v253 = vrot.slane %v221, 3
        %v254 = vsel %vm251, %v252, %v253
        %v255 = vrot.slane %v222, 3
        %v256 = vsel %vm251, %v253, %v255
        %257 = vrot.lane.b32.xlu0 %v254, 48
        %v258 = vpop.permute.xlu0 %257
        %259 = vrot.lane.b32.xlu0 %v256, 48
        %v260 = vpop.permute.xlu0 %259
        %vm263 = vcmask 1043456
        %v264 = vrot.slane %v220, 4
        %v265 = vrot.slane %v221, 4
        %v266 = vsel %vm263, %v264, %v265
        %v267 = vrot.slane %v222, 4
        %v268 = vsel %vm263, %v265, %v267
        %269 = vrot.lane.b32.xlu0 %v266, 64
        %v270 = vpop.permute.xlu0 %269
        %271 = vrot.lane.b32.xlu0 %v268, 64
        %v272 = vpop.permute.xlu0 %271
        %vm275 = vcmask 1042432
        %v276 = vrot.slane %v220, 5
        %v277 = vrot.slane %v221, 5
        %v278 = vsel %vm275, %v276, %v277
        %v279 = vrot.slane %v222, 5
        %v280 = vsel %vm275, %v277, %v279
        %281 = vrot.lane.b32.xlu0 %v278, 80
        %v282 = vpop.permute.xlu0 %281
        %283 = vrot.lane.b32.xlu0 %v280, 80
        %v284 = vpop.permute.xlu0 %283
        %vm287 = vcmask 1041408
        %v288 = vrot.slane %v220, 6
        %v289 = vrot.slane %v221, 6
        %v290 = vsel %vm287, %v288, %v289
        %v291 = vrot.slane %v222, 6
        %v292 = vsel %vm287, %v289, %v291
        %293 = vrot.lane.b32.xlu0 %v290, 96
        %v294 = vpop.permute.xlu0 %293
        %295 = vrot.lane.b32.xlu0 %v292, 96
        %v296 = vpop.permute.xlu0 %295
        %vm299 = vcmask 1040384
        %v300 = vrot.slane %v220, 7
        %v301 = vrot.slane %v221, 7
        %v302 = vsel %vm299, %v300, %v301
        %v303 = vrot.slane %v222, 7
        %v304 = vsel %vm299, %v301, %v303
        %305 = vrot.lane.b32.xlu0 %v302, 112
        %v306 = vpop.permute.xlu0 %305
        %307 = vrot.lane.b32.xlu0 %v304, 112
        %v308 = vpop.permute.xlu0 %307
        %v312 = vrot.slane %v223, 1
        %v313 = vsel %vm227, %v231, %v312
        %314 = vrot.lane.b32.xlu0 %v313, 16
        %v315 = vpop.permute.xlu0 %314
        %v317 = vrot.slane %v223, 2
        %v318 = vsel %vm239, %v243, %v317
        %319 = vrot.lane.b32.xlu0 %v318, 32
        %v320 = vpop.permute.xlu0 %319
        %v322 = vrot.slane %v223, 3
        %v323 = vsel %vm251, %v255, %v322
        %324 = vrot.lane.b32.xlu0 %v323, 48
        %v325 = vpop.permute.xlu0 %324
        %v327 = vrot.slane %v223, 4
        %v328 = vsel %vm263, %v267, %v327
        %329 = vrot.lane.b32.xlu0 %v328, 64
        %v330 = vpop.permute.xlu0 %329
        %v332 = vrot.slane %v223, 5
        %v333 = vsel %vm275, %v279, %v332
        %334 = vrot.lane.b32.xlu0 %v333, 80
        %v335 = vpop.permute.xlu0 %334
        %v337 = vrot.slane %v223, 6
        %v338 = vsel %vm287, %v291, %v337
        %339 = vrot.lane.b32.xlu0 %v338, 96
        %v340 = vpop.permute.xlu0 %339
        %v342 = vrot.slane %v223, 7
        %v343 = vsel %vm299, %v303, %v342
        %344 = vrot.lane.b32.xlu0 %v343, 112
        %v345 = vpop.permute.xlu0 %344
        %vm347 = vcmask 130048
        %v348 = vsel %vm347, %v220, %v234
        %v349 = vsel %vm347, %v221, %v236
        %vm350 = vcmask 261120
        %v351 = vsel %vm350, %v348, %v246
        %v352 = vsel %vm350, %v349, %v248
        %vm353 = vcmask 392192
        %v354 = vsel %vm353, %v351, %v258
        %v355 = vsel %vm353, %v352, %v260
        %vm356 = vcmask 523264
        %v357 = vsel %vm356, %v354, %v270
        %v358 = vsel %vm356, %v355, %v272
        %vm359 = vcmask 654336
        %v360 = vsel %vm359, %v357, %v282
        %v361 = vsel %vm359, %v358, %v284
        %vm362 = vcmask 785408
        %v363 = vsel %vm362, %v360, %v294
        %v364 = vsel %vm362, %v361, %v296
        %vm365 = vcmask 916480
        %v366 = vsel %vm365, %v363, %v306
        %v367 = vsel %vm365, %v364, %v308
        %v368 = vsel %vm347, %v222, %v315
        %v369 = vsel %vm350, %v368, %v320
        %v370 = vsel %vm353, %v369, %v325
        %v371 = vsel %vm356, %v370, %v330
        %v372 = vsel %vm359, %v371, %v335
        %v373 = vsel %vm362, %v372, %v340
        %v374 = vsel %vm365, %v373, %v345
        %375 = vrot.lane.b32.xlu0 %v220, 127
        %v376 = vpop.permute.xlu0 %375
        %377 = vrot.lane.b32.xlu0 %v221, 127
        %v378 = vpop.permute.xlu0 %377
        %381 = vrot.lane.b32.xlu0 %v230, 15
        %v382 = vpop.permute.xlu0 %381
        %383 = vrot.lane.b32.xlu0 %v232, 15
        %v384 = vpop.permute.xlu0 %383
        %387 = vrot.lane.b32.xlu0 %v242, 31
        %v388 = vpop.permute.xlu0 %387
        %389 = vrot.lane.b32.xlu0 %v244, 31
        %v390 = vpop.permute.xlu0 %389
        %393 = vrot.lane.b32.xlu0 %v254, 47
        %v394 = vpop.permute.xlu0 %393
        %395 = vrot.lane.b32.xlu0 %v256, 47
        %v396 = vpop.permute.xlu0 %395
        %399 = vrot.lane.b32.xlu0 %v266, 63
        %v400 = vpop.permute.xlu0 %399
        %401 = vrot.lane.b32.xlu0 %v268, 63
        %v402 = vpop.permute.xlu0 %401
        %405 = vrot.lane.b32.xlu0 %v278, 79
        %v406 = vpop.permute.xlu0 %405
        %407 = vrot.lane.b32.xlu0 %v280, 79
        %v408 = vpop.permute.xlu0 %407
        %411 = vrot.lane.b32.xlu0 %v290, 95
        %v412 = vpop.permute.xlu0 %411
        %413 = vrot.lane.b32.xlu0 %v292, 95
        %v414 = vpop.permute.xlu0 %413
        %417 = vrot.lane.b32.xlu0 %v302, 111
        %v418 = vpop.permute.xlu0 %417
        %419 = vrot.lane.b32.xlu0 %v304, 111
        %v420 = vpop.permute.xlu0 %419
        %423 = vrot.lane.b32.xlu0 %v222, 127
        %v424 = vpop.permute.xlu0 %423
        %426 = vrot.lane.b32.xlu0 %v313, 15
        %v427 = vpop.permute.xlu0 %426
        %429 = vrot.lane.b32.xlu0 %v318, 31
        %v430 = vpop.permute.xlu0 %429
        %432 = vrot.lane.b32.xlu0 %v323, 47
        %v433 = vpop.permute.xlu0 %432
        %435 = vrot.lane.b32.xlu0 %v328, 63
        %v436 = vpop.permute.xlu0 %435
        %438 = vrot.lane.b32.xlu0 %v333, 79
        %v439 = vpop.permute.xlu0 %438
        %441 = vrot.lane.b32.xlu0 %v338, 95
        %v442 = vpop.permute.xlu0 %441
        %444 = vrot.lane.b32.xlu0 %v343, 111
        %v445 = vpop.permute.xlu0 %444
        %v447 = vsel %vm347, %v376, %v382
        %v448 = vsel %vm347, %v378, %v384
        %v449 = vsel %vm350, %v447, %v388
        %v450 = vsel %vm350, %v448, %v390
        %v451 = vsel %vm353, %v449, %v394
        %v452 = vsel %vm353, %v450, %v396
        %v453 = vsel %vm356, %v451, %v400
        %v454 = vsel %vm356, %v452, %v402
        %v455 = vsel %vm359, %v453, %v406
        %v456 = vsel %vm359, %v454, %v408
        %v457 = vsel %vm362, %v455, %v412
        %v458 = vsel %vm362, %v456, %v414
        %v459 = vsel %vm365, %v457, %v418
        %v460 = vsel %vm365, %v458, %v420
        %v461 = vsel %vm347, %v424, %v427
        %v462 = vsel %vm350, %v461, %v430
        %v463 = vsel %vm353, %v462, %v433
        %v464 = vsel %vm356, %v463, %v436
        %v465 = vsel %vm359, %v464, %v439
        %v466 = vsel %vm362, %v465, %v442
        %v467 = vsel %vm365, %v466, %v445
        %468 = vrot.lane.b32.xlu0 %v220, 126
        %v469 = vpop.permute.xlu0 %468
        %470 = vrot.lane.b32.xlu0 %v221, 126
        %v471 = vpop.permute.xlu0 %470
        %474 = vrot.lane.b32.xlu0 %v230, 14
        %v475 = vpop.permute.xlu0 %474
        %476 = vrot.lane.b32.xlu0 %v232, 14
        %v477 = vpop.permute.xlu0 %476
        %480 = vrot.lane.b32.xlu0 %v242, 30
        %v481 = vpop.permute.xlu0 %480
        %482 = vrot.lane.b32.xlu0 %v244, 30
        %v483 = vpop.permute.xlu0 %482
        %486 = vrot.lane.b32.xlu0 %v254, 46
        %v487 = vpop.permute.xlu0 %486
        %488 = vrot.lane.b32.xlu0 %v256, 46
        %v489 = vpop.permute.xlu0 %488
        %492 = vrot.lane.b32.xlu0 %v266, 62
        %v493 = vpop.permute.xlu0 %492
        %494 = vrot.lane.b32.xlu0 %v268, 62
        %v495 = vpop.permute.xlu0 %494
        %498 = vrot.lane.b32.xlu0 %v278, 78
        %v499 = vpop.permute.xlu0 %498
        %500 = vrot.lane.b32.xlu0 %v280, 78
        %v501 = vpop.permute.xlu0 %500
        %504 = vrot.lane.b32.xlu0 %v290, 94
        %v505 = vpop.permute.xlu0 %504
        %506 = vrot.lane.b32.xlu0 %v292, 94
        %v507 = vpop.permute.xlu0 %506
        %510 = vrot.lane.b32.xlu0 %v302, 110
        %v511 = vpop.permute.xlu0 %510
        %512 = vrot.lane.b32.xlu0 %v304, 110
        %v513 = vpop.permute.xlu0 %512
        %516 = vrot.lane.b32.xlu0 %v222, 126
        %v517 = vpop.permute.xlu0 %516
        %519 = vrot.lane.b32.xlu0 %v313, 14
        %v520 = vpop.permute.xlu0 %519
        %522 = vrot.lane.b32.xlu0 %v318, 30
        %v523 = vpop.permute.xlu0 %522
        %525 = vrot.lane.b32.xlu0 %v323, 46
        %v526 = vpop.permute.xlu0 %525
        %528 = vrot.lane.b32.xlu0 %v328, 62
        %v529 = vpop.permute.xlu0 %528
        %531 = vrot.lane.b32.xlu0 %v333, 78
        %v532 = vpop.permute.xlu0 %531
        %534 = vrot.lane.b32.xlu0 %v338, 94
        %v535 = vpop.permute.xlu0 %534
        %537 = vrot.lane.b32.xlu0 %v343, 110
        %v538 = vpop.permute.xlu0 %537
        %v540 = vsel %vm347, %v469, %v475
        %v541 = vsel %vm347, %v471, %v477
        %v542 = vsel %vm350, %v540, %v481
        %v543 = vsel %vm350, %v541, %v483
        %v544 = vsel %vm353, %v542, %v487
        %v545 = vsel %vm353, %v543, %v489
        %v546 = vsel %vm356, %v544, %v493
        %v547 = vsel %vm356, %v545, %v495
        %v548 = vsel %vm359, %v546, %v499
        %v549 = vsel %vm359, %v547, %v501
        %v550 = vsel %vm362, %v548, %v505
        %v551 = vsel %vm362, %v549, %v507
        %v552 = vsel %vm365, %v550, %v511
        %v553 = vsel %vm365, %v551, %v513
        %v554 = vsel %vm347, %v517, %v520
        %v555 = vsel %vm350, %v554, %v523
        %v556 = vsel %vm353, %v555, %v526
        %v557 = vsel %vm356, %v556, %v529
        %v558 = vsel %vm359, %v557, %v532
        %v559 = vsel %vm362, %v558, %v535
        %v560 = vsel %vm365, %v559, %v538
        %561 = vrot.lane.b32.xlu0 %v220, 125
        %v562 = vpop.permute.xlu0 %561
        %563 = vrot.lane.b32.xlu0 %v221, 125
        %v564 = vpop.permute.xlu0 %563
        %567 = vrot.lane.b32.xlu0 %v230, 13
        %v568 = vpop.permute.xlu0 %567
        %569 = vrot.lane.b32.xlu0 %v232, 13
        %v570 = vpop.permute.xlu0 %569
        %573 = vrot.lane.b32.xlu0 %v242, 29
        %v574 = vpop.permute.xlu0 %573
        %575 = vrot.lane.b32.xlu0 %v244, 29
        %v576 = vpop.permute.xlu0 %575
        %579 = vrot.lane.b32.xlu0 %v254, 45
        %v580 = vpop.permute.xlu0 %579
        %581 = vrot.lane.b32.xlu0 %v256, 45
        %v582 = vpop.permute.xlu0 %581
        %585 = vrot.lane.b32.xlu0 %v266, 61
        %v586 = vpop.permute.xlu0 %585
        %587 = vrot.lane.b32.xlu0 %v268, 61
        %v588 = vpop.permute.xlu0 %587
        %591 = vrot.lane.b32.xlu0 %v278, 77
        %v592 = vpop.permute.xlu0 %591
        %593 = vrot.lane.b32.xlu0 %v280, 77
        %v594 = vpop.permute.xlu0 %593
        %597 = vrot.lane.b32.xlu0 %v290, 93
        %v598 = vpop.permute.xlu0 %597
        %599 = vrot.lane.b32.xlu0 %v292, 93
        %v600 = vpop.permute.xlu0 %599
        %603 = vrot.lane.b32.xlu0 %v302, 109
        %v604 = vpop.permute.xlu0 %603
        %605 = vrot.lane.b32.xlu0 %v304, 109
        %v606 = vpop.permute.xlu0 %605
        %609 = vrot.lane.b32.xlu0 %v222, 125
        %v610 = vpop.permute.xlu0 %609
        %612 = vrot.lane.b32.xlu0 %v313, 13
        %v613 = vpop.permute.xlu0 %612
        %615 = vrot.lane.b32.xlu0 %v318, 29
        %v616 = vpop.permute.xlu0 %615
        %618 = vrot.lane.b32.xlu0 %v323, 45
        %v619 = vpop.permute.xlu0 %618
        %621 = vrot.lane.b32.xlu0 %v328, 61
        %v622 = vpop.permute.xlu0 %621
        %624 = vrot.lane.b32.xlu0 %v333, 77
        %v625 = vpop.permute.xlu0 %624
        %627 = vrot.lane.b32.xlu0 %v338, 93
        %v628 = vpop.permute.xlu0 %627
        %630 = vrot.lane.b32.xlu0 %v343, 109
        %v631 = vpop.permute.xlu0 %630
        %v633 = vsel %vm347, %v562, %v568
        %v634 = vsel %vm347, %v564, %v570
        %v635 = vsel %vm350, %v633, %v574
        %v636 = vsel %vm350, %v634, %v576
        %v637 = vsel %vm353, %v635, %v580
        %v638 = vsel %vm353, %v636, %v582
        %v639 = vsel %vm356, %v637, %v586
        %v640 = vsel %vm356, %v638, %v588
        %v641 = vsel %vm359, %v639, %v592
        %v642 = vsel %vm359, %v640, %v594
        %v643 = vsel %vm362, %v641, %v598
        %v644 = vsel %vm362, %v642, %v600
        %v645 = vsel %vm365, %v643, %v604
        %v646 = vsel %vm365, %v644, %v606
        %v647 = vsel %vm347, %v610, %v613
        %v648 = vsel %vm350, %v647, %v616
        %v649 = vsel %vm353, %v648, %v619
        %v650 = vsel %vm356, %v649, %v622
        %v651 = vsel %vm359, %v650, %v625
        %v652 = vsel %vm362, %v651, %v628
        %v653 = vsel %vm365, %v652, %v631
        %654 = vrot.lane.b32.xlu0 %v220, 124
        %v655 = vpop.permute.xlu0 %654
        %656 = vrot.lane.b32.xlu0 %v221, 124
        %v657 = vpop.permute.xlu0 %656
        %660 = vrot.lane.b32.xlu0 %v230, 12
        %v661 = vpop.permute.xlu0 %660
        %662 = vrot.lane.b32.xlu0 %v232, 12
        %v663 = vpop.permute.xlu0 %662
        %666 = vrot.lane.b32.xlu0 %v242, 28
        %v667 = vpop.permute.xlu0 %666
        %668 = vrot.lane.b32.xlu0 %v244, 28
        %v669 = vpop.permute.xlu0 %668
        %672 = vrot.lane.b32.xlu0 %v254, 44
        %v673 = vpop.permute.xlu0 %672
        %674 = vrot.lane.b32.xlu0 %v256, 44
        %v675 = vpop.permute.xlu0 %674
        %678 = vrot.lane.b32.xlu0 %v266, 60
        %v679 = vpop.permute.xlu0 %678
        %680 = vrot.lane.b32.xlu0 %v268, 60
        %v681 = vpop.permute.xlu0 %680
        %684 = vrot.lane.b32.xlu0 %v278, 76
        %v685 = vpop.permute.xlu0 %684
        %686 = vrot.lane.b32.xlu0 %v280, 76
        %v687 = vpop.permute.xlu0 %686
        %690 = vrot.lane.b32.xlu0 %v290, 92
        %v691 = vpop.permute.xlu0 %690
        %692 = vrot.lane.b32.xlu0 %v292, 92
        %v693 = vpop.permute.xlu0 %692
        %696 = vrot.lane.b32.xlu0 %v302, 108
        %v697 = vpop.permute.xlu0 %696
        %698 = vrot.lane.b32.xlu0 %v304, 108
        %v699 = vpop.permute.xlu0 %698
        %702 = vrot.lane.b32.xlu0 %v222, 124
        %v703 = vpop.permute.xlu0 %702
        %705 = vrot.lane.b32.xlu0 %v313, 12
        %v706 = vpop.permute.xlu0 %705
        %708 = vrot.lane.b32.xlu0 %v318, 28
        %v709 = vpop.permute.xlu0 %708
        %711 = vrot.lane.b32.xlu0 %v323, 44
        %v712 = vpop.permute.xlu0 %711
        %714 = vrot.lane.b32.xlu0 %v328, 60
        %v715 = vpop.permute.xlu0 %714
        %717 = vrot.lane.b32.xlu0 %v333, 76
        %v718 = vpop.permute.xlu0 %717
        %720 = vrot.lane.b32.xlu0 %v338, 92
        %v721 = vpop.permute.xlu0 %720
        %723 = vrot.lane.b32.xlu0 %v343, 108
        %v724 = vpop.permute.xlu0 %723
        %v726 = vsel %vm347, %v655, %v661
        %v727 = vsel %vm347, %v657, %v663
        %v728 = vsel %vm350, %v726, %v667
        %v729 = vsel %vm350, %v727, %v669
        %v730 = vsel %vm353, %v728, %v673
        %v731 = vsel %vm353, %v729, %v675
        %v732 = vsel %vm356, %v730, %v679
        %v733 = vsel %vm356, %v731, %v681
        %v734 = vsel %vm359, %v732, %v685
        %v735 = vsel %vm359, %v733, %v687
        %v736 = vsel %vm362, %v734, %v691
        %v737 = vsel %vm362, %v735, %v693
        %v738 = vsel %vm365, %v736, %v697
        %v739 = vsel %vm365, %v737, %v699
        %v740 = vsel %vm347, %v703, %v706
        %v741 = vsel %vm350, %v740, %v709
        %v742 = vsel %vm353, %v741, %v712
        %v743 = vsel %vm356, %v742, %v715
        %v744 = vsel %vm359, %v743, %v718
        %v745 = vsel %vm362, %v744, %v721
        %v746 = vsel %vm365, %v745, %v724
        %747 = vrot.lane.b32.xlu0 %v220, 123
        %v748 = vpop.permute.xlu0 %747
        %749 = vrot.lane.b32.xlu0 %v221, 123
        %v750 = vpop.permute.xlu0 %749
        %753 = vrot.lane.b32.xlu0 %v230, 11
        %v754 = vpop.permute.xlu0 %753
        %755 = vrot.lane.b32.xlu0 %v232, 11
        %v756 = vpop.permute.xlu0 %755
        %759 = vrot.lane.b32.xlu0 %v242, 27
        %v760 = vpop.permute.xlu0 %759
        %761 = vrot.lane.b32.xlu0 %v244, 27
        %v762 = vpop.permute.xlu0 %761
        %765 = vrot.lane.b32.xlu0 %v254, 43
        %v766 = vpop.permute.xlu0 %765
        %767 = vrot.lane.b32.xlu0 %v256, 43
        %v768 = vpop.permute.xlu0 %767
        %771 = vrot.lane.b32.xlu0 %v266, 59
        %v772 = vpop.permute.xlu0 %771
        %773 = vrot.lane.b32.xlu0 %v268, 59
        %v774 = vpop.permute.xlu0 %773
        %777 = vrot.lane.b32.xlu0 %v278, 75
        %v778 = vpop.permute.xlu0 %777
        %779 = vrot.lane.b32.xlu0 %v280, 75
        %v780 = vpop.permute.xlu0 %779
        %783 = vrot.lane.b32.xlu0 %v290, 91
        %v784 = vpop.permute.xlu0 %783
        %785 = vrot.lane.b32.xlu0 %v292, 91
        %v786 = vpop.permute.xlu0 %785
        %789 = vrot.lane.b32.xlu0 %v302, 107
        %v790 = vpop.permute.xlu0 %789
        %791 = vrot.lane.b32.xlu0 %v304, 107
        %v792 = vpop.permute.xlu0 %791
        %795 = vrot.lane.b32.xlu0 %v222, 123
        %v796 = vpop.permute.xlu0 %795
        %798 = vrot.lane.b32.xlu0 %v313, 11
        %v799 = vpop.permute.xlu0 %798
        %801 = vrot.lane.b32.xlu0 %v318, 27
        %v802 = vpop.permute.xlu0 %801
        %804 = vrot.lane.b32.xlu0 %v323, 43
        %v805 = vpop.permute.xlu0 %804
        %807 = vrot.lane.b32.xlu0 %v328, 59
        %v808 = vpop.permute.xlu0 %807
        %810 = vrot.lane.b32.xlu0 %v333, 75
        %v811 = vpop.permute.xlu0 %810
        %813 = vrot.lane.b32.xlu0 %v338, 91
        %v814 = vpop.permute.xlu0 %813
        %816 = vrot.lane.b32.xlu0 %v343, 107
        %v817 = vpop.permute.xlu0 %816
        %v819 = vsel %vm347, %v748, %v754
        %v820 = vsel %vm347, %v750, %v756
        %v821 = vsel %vm350, %v819, %v760
        %v822 = vsel %vm350, %v820, %v762
        %v823 = vsel %vm353, %v821, %v766
        %v824 = vsel %vm353, %v822, %v768
        %v825 = vsel %vm356, %v823, %v772
        %v826 = vsel %vm356, %v824, %v774
        %v827 = vsel %vm359, %v825, %v778
        %v828 = vsel %vm359, %v826, %v780
        %v829 = vsel %vm362, %v827, %v784
        %v830 = vsel %vm362, %v828, %v786
        %v831 = vsel %vm365, %v829, %v790
        %v832 = vsel %vm365, %v830, %v792
        %v833 = vsel %vm347, %v796, %v799
        %v834 = vsel %vm350, %v833, %v802
        %v835 = vsel %vm353, %v834, %v805
        %v836 = vsel %vm356, %v835, %v808
        %v837 = vsel %vm359, %v836, %v811
        %v838 = vsel %vm362, %v837, %v814
        %v839 = vsel %vm365, %v838, %v817
        %840 = vrot.lane.b32.xlu0 %v220, 122
        %v841 = vpop.permute.xlu0 %840
        %842 = vrot.lane.b32.xlu0 %v221, 122
        %v843 = vpop.permute.xlu0 %842
        %846 = vrot.lane.b32.xlu0 %v230, 10
        %v847 = vpop.permute.xlu0 %846
        %848 = vrot.lane.b32.xlu0 %v232, 10
        %v849 = vpop.permute.xlu0 %848
        %852 = vrot.lane.b32.xlu0 %v242, 26
        %v853 = vpop.permute.xlu0 %852
        %854 = vrot.lane.b32.xlu0 %v244, 26
        %v855 = vpop.permute.xlu0 %854
        %858 = vrot.lane.b32.xlu0 %v254, 42
        %v859 = vpop.permute.xlu0 %858
        %860 = vrot.lane.b32.xlu0 %v256, 42
        %v861 = vpop.permute.xlu0 %860
        %864 = vrot.lane.b32.xlu0 %v266, 58
        %v865 = vpop.permute.xlu0 %864
        %866 = vrot.lane.b32.xlu0 %v268, 58
        %v867 = vpop.permute.xlu0 %866
        %870 = vrot.lane.b32.xlu0 %v278, 74
        %v871 = vpop.permute.xlu0 %870
        %872 = vrot.lane.b32.xlu0 %v280, 74
        %v873 = vpop.permute.xlu0 %872
        %876 = vrot.lane.b32.xlu0 %v290, 90
        %v877 = vpop.permute.xlu0 %876
        %878 = vrot.lane.b32.xlu0 %v292, 90
        %v879 = vpop.permute.xlu0 %878
        %882 = vrot.lane.b32.xlu0 %v302, 106
        %v883 = vpop.permute.xlu0 %882
        %884 = vrot.lane.b32.xlu0 %v304, 106
        %v885 = vpop.permute.xlu0 %884
        %888 = vrot.lane.b32.xlu0 %v222, 122
        %v889 = vpop.permute.xlu0 %888
        %891 = vrot.lane.b32.xlu0 %v313, 10
        %v892 = vpop.permute.xlu0 %891
        %894 = vrot.lane.b32.xlu0 %v318, 26
        %v895 = vpop.permute.xlu0 %894
        %897 = vrot.lane.b32.xlu0 %v323, 42
        %v898 = vpop.permute.xlu0 %897
        %900 = vrot.lane.b32.xlu0 %v328, 58
        %v901 = vpop.permute.xlu0 %900
        %903 = vrot.lane.b32.xlu0 %v333, 74
        %v904 = vpop.permute.xlu0 %903
        %906 = vrot.lane.b32.xlu0 %v338, 90
        %v907 = vpop.permute.xlu0 %906
        %909 = vrot.lane.b32.xlu0 %v343, 106
        %v910 = vpop.permute.xlu0 %909
        %v912 = vsel %vm347, %v841, %v847
        %v913 = vsel %vm347, %v843, %v849
        %v914 = vsel %vm350, %v912, %v853
        %v915 = vsel %vm350, %v913, %v855
        %v916 = vsel %vm353, %v914, %v859
        %v917 = vsel %vm353, %v915, %v861
        %v918 = vsel %vm356, %v916, %v865
        %v919 = vsel %vm356, %v917, %v867
        %v920 = vsel %vm359, %v918, %v871
        %v921 = vsel %vm359, %v919, %v873
        %v922 = vsel %vm362, %v920, %v877
        %v923 = vsel %vm362, %v921, %v879
        %v924 = vsel %vm365, %v922, %v883
        %v925 = vsel %vm365, %v923, %v885
        %v926 = vsel %vm347, %v889, %v892
        %v927 = vsel %vm350, %v926, %v895
        %v928 = vsel %vm353, %v927, %v898
        %v929 = vsel %vm356, %v928, %v901
        %v930 = vsel %vm359, %v929, %v904
        %v931 = vsel %vm362, %v930, %v907
        %v932 = vsel %vm365, %v931, %v910
        %933 = vrot.lane.b32.xlu0 %v220, 121
        %v934 = vpop.permute.xlu0 %933
        %935 = vrot.lane.b32.xlu0 %v221, 121
        %v936 = vpop.permute.xlu0 %935
        %939 = vrot.lane.b32.xlu0 %v230, 9
        %v940 = vpop.permute.xlu0 %939
        %941 = vrot.lane.b32.xlu0 %v232, 9
        %v942 = vpop.permute.xlu0 %941
        %945 = vrot.lane.b32.xlu0 %v242, 25
        %v946 = vpop.permute.xlu0 %945
        %947 = vrot.lane.b32.xlu0 %v244, 25
        %v948 = vpop.permute.xlu0 %947
        %951 = vrot.lane.b32.xlu0 %v254, 41
        %v952 = vpop.permute.xlu0 %951
        %953 = vrot.lane.b32.xlu0 %v256, 41
        %v954 = vpop.permute.xlu0 %953
        %957 = vrot.lane.b32.xlu0 %v266, 57
        %v958 = vpop.permute.xlu0 %957
        %959 = vrot.lane.b32.xlu0 %v268, 57
        %v960 = vpop.permute.xlu0 %959
        %963 = vrot.lane.b32.xlu0 %v278, 73
        %v964 = vpop.permute.xlu0 %963
        %965 = vrot.lane.b32.xlu0 %v280, 73
        %v966 = vpop.permute.xlu0 %965
        %969 = vrot.lane.b32.xlu0 %v290, 89
        %v970 = vpop.permute.xlu0 %969
        %971 = vrot.lane.b32.xlu0 %v292, 89
        %v972 = vpop.permute.xlu0 %971
        %975 = vrot.lane.b32.xlu0 %v302, 105
        %v976 = vpop.permute.xlu0 %975
        %977 = vrot.lane.b32.xlu0 %v304, 105
        %v978 = vpop.permute.xlu0 %977
        %981 = vrot.lane.b32.xlu0 %v222, 121
        %v982 = vpop.permute.xlu0 %981
        %984 = vrot.lane.b32.xlu0 %v313, 9
        %v985 = vpop.permute.xlu0 %984
        %987 = vrot.lane.b32.xlu0 %v318, 25
        %v988 = vpop.permute.xlu0 %987
        %990 = vrot.lane.b32.xlu0 %v323, 41
        %v991 = vpop.permute.xlu0 %990
        %993 = vrot.lane.b32.xlu0 %v328, 57
        %v994 = vpop.permute.xlu0 %993
        %996 = vrot.lane.b32.xlu0 %v333, 73
        %v997 = vpop.permute.xlu0 %996
        %999 = vrot.lane.b32.xlu0 %v338, 89
        %v1000 = vpop.permute.xlu0 %999
        %1002 = vrot.lane.b32.xlu0 %v343, 105
        %v1003 = vpop.permute.xlu0 %1002
        %v1005 = vsel %vm347, %v934, %v940
        %v1006 = vsel %vm347, %v936, %v942
        %v1007 = vsel %vm350, %v1005, %v946
        %v1008 = vsel %vm350, %v1006, %v948
        %v1009 = vsel %vm353, %v1007, %v952
        %v1010 = vsel %vm353, %v1008, %v954
        %v1011 = vsel %vm356, %v1009, %v958
        %v1012 = vsel %vm356, %v1010, %v960
        %v1013 = vsel %vm359, %v1011, %v964
        %v1014 = vsel %vm359, %v1012, %v966
        %v1015 = vsel %vm362, %v1013, %v970
        %v1016 = vsel %vm362, %v1014, %v972
        %v1017 = vsel %vm365, %v1015, %v976
        %v1018 = vsel %vm365, %v1016, %v978
        %v1019 = vsel %vm347, %v982, %v985
        %v1020 = vsel %vm350, %v1019, %v988
        %v1021 = vsel %vm353, %v1020, %v991
        %v1022 = vsel %vm356, %v1021, %v994
        %v1023 = vsel %vm359, %v1022, %v997
        %v1024 = vsel %vm362, %v1023, %v1000
        %v1025 = vsel %vm365, %v1024, %v1003
        %1026 = vrot.lane.b32.xlu0 %v220, 120
        %v1027 = vpop.permute.xlu0 %1026
        %1028 = vrot.lane.b32.xlu0 %v221, 120
        %v1029 = vpop.permute.xlu0 %1028
        %1032 = vrot.lane.b32.xlu0 %v230, 8
        %v1033 = vpop.permute.xlu0 %1032
        %1034 = vrot.lane.b32.xlu0 %v232, 8
        %v1035 = vpop.permute.xlu0 %1034
        %1038 = vrot.lane.b32.xlu0 %v242, 24
        %v1039 = vpop.permute.xlu0 %1038
        %1040 = vrot.lane.b32.xlu0 %v244, 24
        %v1041 = vpop.permute.xlu0 %1040
        %1044 = vrot.lane.b32.xlu0 %v254, 40
        %v1045 = vpop.permute.xlu0 %1044
        %1046 = vrot.lane.b32.xlu0 %v256, 40
        %v1047 = vpop.permute.xlu0 %1046
        %1050 = vrot.lane.b32.xlu0 %v266, 56
        %v1051 = vpop.permute.xlu0 %1050
        %1052 = vrot.lane.b32.xlu0 %v268, 56
        %v1053 = vpop.permute.xlu0 %1052
        %1056 = vrot.lane.b32.xlu0 %v278, 72
        %v1057 = vpop.permute.xlu0 %1056
        %1058 = vrot.lane.b32.xlu0 %v280, 72
        %v1059 = vpop.permute.xlu0 %1058
        %1062 = vrot.lane.b32.xlu0 %v290, 88
        %v1063 = vpop.permute.xlu0 %1062
        %1064 = vrot.lane.b32.xlu0 %v292, 88
        %v1065 = vpop.permute.xlu0 %1064
        %1068 = vrot.lane.b32.xlu0 %v302, 104
        %v1069 = vpop.permute.xlu0 %1068
        %1070 = vrot.lane.b32.xlu0 %v304, 104
        %v1071 = vpop.permute.xlu0 %1070
        %1074 = vrot.lane.b32.xlu0 %v222, 120
        %v1075 = vpop.permute.xlu0 %1074
        %1077 = vrot.lane.b32.xlu0 %v313, 8
        %v1078 = vpop.permute.xlu0 %1077
        %1080 = vrot.lane.b32.xlu0 %v318, 24
        %v1081 = vpop.permute.xlu0 %1080
        %1083 = vrot.lane.b32.xlu0 %v323, 40
        %v1084 = vpop.permute.xlu0 %1083
        %1086 = vrot.lane.b32.xlu0 %v328, 56
        %v1087 = vpop.permute.xlu0 %1086
        %1089 = vrot.lane.b32.xlu0 %v333, 72
        %v1090 = vpop.permute.xlu0 %1089
        %1092 = vrot.lane.b32.xlu0 %v338, 88
        %v1093 = vpop.permute.xlu0 %1092
        %1095 = vrot.lane.b32.xlu0 %v343, 104
        %v1096 = vpop.permute.xlu0 %1095
        %v1098 = vsel %vm347, %v1027, %v1033
        %v1099 = vsel %vm347, %v1029, %v1035
        %v1100 = vsel %vm350, %v1098, %v1039
        %v1101 = vsel %vm350, %v1099, %v1041
        %v1102 = vsel %vm353, %v1100, %v1045
        %v1103 = vsel %vm353, %v1101, %v1047
        %v1104 = vsel %vm356, %v1102, %v1051
        %v1105 = vsel %vm356, %v1103, %v1053
        %v1106 = vsel %vm359, %v1104, %v1057
        %v1107 = vsel %vm359, %v1105, %v1059
        %v1108 = vsel %vm362, %v1106, %v1063
        %v1109 = vsel %vm362, %v1107, %v1065
        %v1110 = vsel %vm365, %v1108, %v1069
        %v1111 = vsel %vm365, %v1109, %v1071
        %v1112 = vsel %vm347, %v1075, %v1078
        %v1113 = vsel %vm350, %v1112, %v1081
        %v1114 = vsel %vm353, %v1113, %v1084
        %v1115 = vsel %vm356, %v1114, %v1087
        %v1116 = vsel %vm359, %v1115, %v1090
        %v1117 = vsel %vm362, %v1116, %v1093
        %v1118 = vsel %vm365, %v1117, %v1096
        %1119 = vrot.lane.b32.xlu0 %v220, 119
        %v1120 = vpop.permute.xlu0 %1119
        %1121 = vrot.lane.b32.xlu0 %v221, 119
        %v1122 = vpop.permute.xlu0 %1121
        %1125 = vrot.lane.b32.xlu0 %v230, 7
        %v1126 = vpop.permute.xlu0 %1125
        %1127 = vrot.lane.b32.xlu0 %v232, 7
        %v1128 = vpop.permute.xlu0 %1127
        %1131 = vrot.lane.b32.xlu0 %v242, 23
        %v1132 = vpop.permute.xlu0 %1131
        %1133 = vrot.lane.b32.xlu0 %v244, 23
        %v1134 = vpop.permute.xlu0 %1133
        %1137 = vrot.lane.b32.xlu0 %v254, 39
        %v1138 = vpop.permute.xlu0 %1137
        %1139 = vrot.lane.b32.xlu0 %v256, 39
        %v1140 = vpop.permute.xlu0 %1139
        %1143 = vrot.lane.b32.xlu0 %v266, 55
        %v1144 = vpop.permute.xlu0 %1143
        %1145 = vrot.lane.b32.xlu0 %v268, 55
        %v1146 = vpop.permute.xlu0 %1145
        %1149 = vrot.lane.b32.xlu0 %v278, 71
        %v1150 = vpop.permute.xlu0 %1149
        %1151 = vrot.lane.b32.xlu0 %v280, 71
        %v1152 = vpop.permute.xlu0 %1151
        %1155 = vrot.lane.b32.xlu0 %v290, 87
        %v1156 = vpop.permute.xlu0 %1155
        %1157 = vrot.lane.b32.xlu0 %v292, 87
        %v1158 = vpop.permute.xlu0 %1157
        %1161 = vrot.lane.b32.xlu0 %v302, 103
        %v1162 = vpop.permute.xlu0 %1161
        %1163 = vrot.lane.b32.xlu0 %v304, 103
        %v1164 = vpop.permute.xlu0 %1163
        %1167 = vrot.lane.b32.xlu0 %v222, 119
        %v1168 = vpop.permute.xlu0 %1167
        %1170 = vrot.lane.b32.xlu0 %v313, 7
        %v1171 = vpop.permute.xlu0 %1170
        %1173 = vrot.lane.b32.xlu0 %v318, 23
        %v1174 = vpop.permute.xlu0 %1173
        %1176 = vrot.lane.b32.xlu0 %v323, 39
        %v1177 = vpop.permute.xlu0 %1176
        %1179 = vrot.lane.b32.xlu0 %v328, 55
        %v1180 = vpop.permute.xlu0 %1179
        %1182 = vrot.lane.b32.xlu0 %v333, 71
        %v1183 = vpop.permute.xlu0 %1182
        %1185 = vrot.lane.b32.xlu0 %v338, 87
        %v1186 = vpop.permute.xlu0 %1185
        %1188 = vrot.lane.b32.xlu0 %v343, 103
        %v1189 = vpop.permute.xlu0 %1188
        %v1191 = vsel %vm347, %v1120, %v1126
        %v1192 = vsel %vm347, %v1122, %v1128
        %v1193 = vsel %vm350, %v1191, %v1132
        %v1194 = vsel %vm350, %v1192, %v1134
        %v1195 = vsel %vm353, %v1193, %v1138
        %v1196 = vsel %vm353, %v1194, %v1140
        %v1197 = vsel %vm356, %v1195, %v1144
        %v1198 = vsel %vm356, %v1196, %v1146
        %v1199 = vsel %vm359, %v1197, %v1150
        %v1200 = vsel %vm359, %v1198, %v1152
        %v1201 = vsel %vm362, %v1199, %v1156
        %v1202 = vsel %vm362, %v1200, %v1158
        %v1203 = vsel %vm365, %v1201, %v1162
        %v1204 = vsel %vm365, %v1202, %v1164
        %v1205 = vsel %vm347, %v1168, %v1171
        %v1206 = vsel %vm350, %v1205, %v1174
        %v1207 = vsel %vm353, %v1206, %v1177
        %v1208 = vsel %vm356, %v1207, %v1180
        %v1209 = vsel %vm359, %v1208, %v1183
        %v1210 = vsel %vm362, %v1209, %v1186
        %v1211 = vsel %vm365, %v1210, %v1189
        %1212 = vrot.lane.b32.xlu0 %v220, 118
        %v1213 = vpop.permute.xlu0 %1212
        %1214 = vrot.lane.b32.xlu0 %v221, 118
        %v1215 = vpop.permute.xlu0 %1214
        %1218 = vrot.lane.b32.xlu0 %v230, 6
        %v1219 = vpop.permute.xlu0 %1218
        %1220 = vrot.lane.b32.xlu0 %v232, 6
        %v1221 = vpop.permute.xlu0 %1220
        %1224 = vrot.lane.b32.xlu0 %v242, 22
        %v1225 = vpop.permute.xlu0 %1224
        %1226 = vrot.lane.b32.xlu0 %v244, 22
        %v1227 = vpop.permute.xlu0 %1226
        %1230 = vrot.lane.b32.xlu0 %v254, 38
        %v1231 = vpop.permute.xlu0 %1230
        %1232 = vrot.lane.b32.xlu0 %v256, 38
        %v1233 = vpop.permute.xlu0 %1232
        %1236 = vrot.lane.b32.xlu0 %v266, 54
        %v1237 = vpop.permute.xlu0 %1236
        %1238 = vrot.lane.b32.xlu0 %v268, 54
        %v1239 = vpop.permute.xlu0 %1238
        %1242 = vrot.lane.b32.xlu0 %v278, 70
        %v1243 = vpop.permute.xlu0 %1242
        %1244 = vrot.lane.b32.xlu0 %v280, 70
        %v1245 = vpop.permute.xlu0 %1244
        %1248 = vrot.lane.b32.xlu0 %v290, 86
        %v1249 = vpop.permute.xlu0 %1248
        %1250 = vrot.lane.b32.xlu0 %v292, 86
        %v1251 = vpop.permute.xlu0 %1250
        %1254 = vrot.lane.b32.xlu0 %v302, 102
        %v1255 = vpop.permute.xlu0 %1254
        %1256 = vrot.lane.b32.xlu0 %v304, 102
        %v1257 = vpop.permute.xlu0 %1256
        %1260 = vrot.lane.b32.xlu0 %v222, 118
        %v1261 = vpop.permute.xlu0 %1260
        %1263 = vrot.lane.b32.xlu0 %v313, 6
        %v1264 = vpop.permute.xlu0 %1263
        %1266 = vrot.lane.b32.xlu0 %v318, 22
        %v1267 = vpop.permute.xlu0 %1266
        %1269 = vrot.lane.b32.xlu0 %v323, 38
        %v1270 = vpop.permute.xlu0 %1269
        %1272 = vrot.lane.b32.xlu0 %v328, 54
        %v1273 = vpop.permute.xlu0 %1272
        %1275 = vrot.lane.b32.xlu0 %v333, 70
        %v1276 = vpop.permute.xlu0 %1275
        %1278 = vrot.lane.b32.xlu0 %v338, 86
        %v1279 = vpop.permute.xlu0 %1278
        %1281 = vrot.lane.b32.xlu0 %v343, 102
        %v1282 = vpop.permute.xlu0 %1281
        %v1284 = vsel %vm347, %v1213, %v1219
        %v1285 = vsel %vm347, %v1215, %v1221
        %v1286 = vsel %vm350, %v1284, %v1225
        %v1287 = vsel %vm350, %v1285, %v1227
        %v1288 = vsel %vm353, %v1286, %v1231
        %v1289 = vsel %vm353, %v1287, %v1233
        %v1290 = vsel %vm356, %v1288, %v1237
        %v1291 = vsel %vm356, %v1289, %v1239
        %v1292 = vsel %vm359, %v1290, %v1243
        %v1293 = vsel %vm359, %v1291, %v1245
        %v1294 = vsel %vm362, %v1292, %v1249
        %v1295 = vsel %vm362, %v1293, %v1251
        %v1296 = vsel %vm365, %v1294, %v1255
        %v1297 = vsel %vm365, %v1295, %v1257
        %v1298 = vsel %vm347, %v1261, %v1264
        %v1299 = vsel %vm350, %v1298, %v1267
        %v1300 = vsel %vm353, %v1299, %v1270
        %v1301 = vsel %vm356, %v1300, %v1273
        %v1302 = vsel %vm359, %v1301, %v1276
        %v1303 = vsel %vm362, %v1302, %v1279
        %v1304 = vsel %vm365, %v1303, %v1282
        %1305 = vrot.lane.b32.xlu0 %v220, 117
        %v1306 = vpop.permute.xlu0 %1305
        %1307 = vrot.lane.b32.xlu0 %v221, 117
        %v1308 = vpop.permute.xlu0 %1307
        %1311 = vrot.lane.b32.xlu0 %v230, 5
        %v1312 = vpop.permute.xlu0 %1311
        %1313 = vrot.lane.b32.xlu0 %v232, 5
        %v1314 = vpop.permute.xlu0 %1313
        %1317 = vrot.lane.b32.xlu0 %v242, 21
        %v1318 = vpop.permute.xlu0 %1317
        %1319 = vrot.lane.b32.xlu0 %v244, 21
        %v1320 = vpop.permute.xlu0 %1319
        %1323 = vrot.lane.b32.xlu0 %v254, 37
        %v1324 = vpop.permute.xlu0 %1323
        %1325 = vrot.lane.b32.xlu0 %v256, 37
        %v1326 = vpop.permute.xlu0 %1325
        %1329 = vrot.lane.b32.xlu0 %v266, 53
        %v1330 = vpop.permute.xlu0 %1329
        %1331 = vrot.lane.b32.xlu0 %v268, 53
        %v1332 = vpop.permute.xlu0 %1331
        %1335 = vrot.lane.b32.xlu0 %v278, 69
        %v1336 = vpop.permute.xlu0 %1335
        %1337 = vrot.lane.b32.xlu0 %v280, 69
        %v1338 = vpop.permute.xlu0 %1337
        %1341 = vrot.lane.b32.xlu0 %v290, 85
        %v1342 = vpop.permute.xlu0 %1341
        %1343 = vrot.lane.b32.xlu0 %v292, 85
        %v1344 = vpop.permute.xlu0 %1343
        %1347 = vrot.lane.b32.xlu0 %v302, 101
        %v1348 = vpop.permute.xlu0 %1347
        %1349 = vrot.lane.b32.xlu0 %v304, 101
        %v1350 = vpop.permute.xlu0 %1349
        %1353 = vrot.lane.b32.xlu0 %v222, 117
        %v1354 = vpop.permute.xlu0 %1353
        %1356 = vrot.lane.b32.xlu0 %v313, 5
        %v1357 = vpop.permute.xlu0 %1356
        %1359 = vrot.lane.b32.xlu0 %v318, 21
        %v1360 = vpop.permute.xlu0 %1359
        %1362 = vrot.lane.b32.xlu0 %v323, 37
        %v1363 = vpop.permute.xlu0 %1362
        %1365 = vrot.lane.b32.xlu0 %v328, 53
        %v1366 = vpop.permute.xlu0 %1365
        %1368 = vrot.lane.b32.xlu0 %v333, 69
        %v1369 = vpop.permute.xlu0 %1368
        %1371 = vrot.lane.b32.xlu0 %v338, 85
        %v1372 = vpop.permute.xlu0 %1371
        %1374 = vrot.lane.b32.xlu0 %v343, 101
        %v1375 = vpop.permute.xlu0 %1374
        %v1377 = vsel %vm347, %v1306, %v1312
        %v1378 = vsel %vm347, %v1308, %v1314
        %v1379 = vsel %vm350, %v1377, %v1318
        %v1380 = vsel %vm350, %v1378, %v1320
        %v1381 = vsel %vm353, %v1379, %v1324
        %v1382 = vsel %vm353, %v1380, %v1326
        %v1383 = vsel %vm356, %v1381, %v1330
        %v1384 = vsel %vm356, %v1382, %v1332
        %v1385 = vsel %vm359, %v1383, %v1336
        %v1386 = vsel %vm359, %v1384, %v1338
        %v1387 = vsel %vm362, %v1385, %v1342
        %v1388 = vsel %vm362, %v1386, %v1344
        %v1389 = vsel %vm365, %v1387, %v1348
        %v1390 = vsel %vm365, %v1388, %v1350
        %v1391 = vsel %vm347, %v1354, %v1357
        %v1392 = vsel %vm350, %v1391, %v1360
        %v1393 = vsel %vm353, %v1392, %v1363
        %v1394 = vsel %vm356, %v1393, %v1366
        %v1395 = vsel %vm359, %v1394, %v1369
        %v1396 = vsel %vm362, %v1395, %v1372
        %v1397 = vsel %vm365, %v1396, %v1375
        %1398 = vrot.lane.b32.xlu0 %v220, 116
        %v1399 = vpop.permute.xlu0 %1398
        %1400 = vrot.lane.b32.xlu0 %v221, 116
        %v1401 = vpop.permute.xlu0 %1400
        %1404 = vrot.lane.b32.xlu0 %v230, 4
        %v1405 = vpop.permute.xlu0 %1404
        %1406 = vrot.lane.b32.xlu0 %v232, 4
        %v1407 = vpop.permute.xlu0 %1406
        %1410 = vrot.lane.b32.xlu0 %v242, 20
        %v1411 = vpop.permute.xlu0 %1410
        %1412 = vrot.lane.b32.xlu0 %v244, 20
        %v1413 = vpop.permute.xlu0 %1412
        %1416 = vrot.lane.b32.xlu0 %v254, 36
        %v1417 = vpop.permute.xlu0 %1416
        %1418 = vrot.lane.b32.xlu0 %v256, 36
        %v1419 = vpop.permute.xlu0 %1418
        %1422 = vrot.lane.b32.xlu0 %v266, 52
        %v1423 = vpop.permute.xlu0 %1422
        %1424 = vrot.lane.b32.xlu0 %v268, 52
        %v1425 = vpop.permute.xlu0 %1424
        %1428 = vrot.lane.b32.xlu0 %v278, 68
        %v1429 = vpop.permute.xlu0 %1428
        %1430 = vrot.lane.b32.xlu0 %v280, 68
        %v1431 = vpop.permute.xlu0 %1430
        %1434 = vrot.lane.b32.xlu0 %v290, 84
        %v1435 = vpop.permute.xlu0 %1434
        %1436 = vrot.lane.b32.xlu0 %v292, 84
        %v1437 = vpop.permute.xlu0 %1436
        %1440 = vrot.lane.b32.xlu0 %v302, 100
        %v1441 = vpop.permute.xlu0 %1440
        %1442 = vrot.lane.b32.xlu0 %v304, 100
        %v1443 = vpop.permute.xlu0 %1442
        %1446 = vrot.lane.b32.xlu0 %v222, 116
        %v1447 = vpop.permute.xlu0 %1446
        %1449 = vrot.lane.b32.xlu0 %v313, 4
        %v1450 = vpop.permute.xlu0 %1449
        %1452 = vrot.lane.b32.xlu0 %v318, 20
        %v1453 = vpop.permute.xlu0 %1452
        %1455 = vrot.lane.b32.xlu0 %v323, 36
        %v1456 = vpop.permute.xlu0 %1455
        %1458 = vrot.lane.b32.xlu0 %v328, 52
        %v1459 = vpop.permute.xlu0 %1458
        %1461 = vrot.lane.b32.xlu0 %v333, 68
        %v1462 = vpop.permute.xlu0 %1461
        %1464 = vrot.lane.b32.xlu0 %v338, 84
        %v1465 = vpop.permute.xlu0 %1464
        %1467 = vrot.lane.b32.xlu0 %v343, 100
        %v1468 = vpop.permute.xlu0 %1467
        %v1470 = vsel %vm347, %v1399, %v1405
        %v1471 = vsel %vm347, %v1401, %v1407
        %v1472 = vsel %vm350, %v1470, %v1411
        %v1473 = vsel %vm350, %v1471, %v1413
        %v1474 = vsel %vm353, %v1472, %v1417
        %v1475 = vsel %vm353, %v1473, %v1419
        %v1476 = vsel %vm356, %v1474, %v1423
        %v1477 = vsel %vm356, %v1475, %v1425
        %v1478 = vsel %vm359, %v1476, %v1429
        %v1479 = vsel %vm359, %v1477, %v1431
        %v1480 = vsel %vm362, %v1478, %v1435
        %v1481 = vsel %vm362, %v1479, %v1437
        %v1482 = vsel %vm365, %v1480, %v1441
        %v1483 = vsel %vm365, %v1481, %v1443
        %v1484 = vsel %vm347, %v1447, %v1450
        %v1485 = vsel %vm350, %v1484, %v1453
        %v1486 = vsel %vm353, %v1485, %v1456
        %v1487 = vsel %vm356, %v1486, %v1459
        %v1488 = vsel %vm359, %v1487, %v1462
        %v1489 = vsel %vm362, %v1488, %v1465
        %v1490 = vsel %vm365, %v1489, %v1468
        %v1492 = vsel %vm359, %v197, 0
        %v1495 = vsel %vm359, %v199, 0
        %v1498 = vsel %vm359, %v201, 0
        %v1501 = vsel %vm359, %v203, 0
        %v1504 = vsel %vm359, %v205, 0
        %v1507 = vsel %vm359, %v207, 0
        %v1510 = vsel %vm359, %v209, 0
        %v1513 = vsel %vm359, %v211, 0
        %v1516 = vsel %vm359, %v213, 0
        %v1519 = vsel %vm359, %v215, 0
        %v1522 = vsel %vm359, %v217, 0
        %v1525 = vsel %vm359, %v219, 0
        %1527 = vmatprep.subr.mxu0 %v1025
        %1528 = vmatpush1.msra.mxu0 %v1018
        %1529 = vmatprep.subr.mxu0 %v1018
        %1530 = vmatpush1.msra.mxu0 %v1017
        %1531 = vmatprep.subr.mxu0 %v932
        %1532 = vmatpush1.msra.mxu0 %v925
        %1533 = vmatprep.subr.mxu0 %v925
        %1534 = vmatpush1.msra.mxu0 %v924
        %1535 = vmatprep.subr.mxu0 %v839
        %1536 = vmatpush1.msra.mxu0 %v832
        %1537 = vmatprep.subr.mxu0 %v832
        %1538 = vmatpush1.msra.mxu0 %v831
        %1539 = vmatprep.subr.mxu0 %v746
        %1540 = vmatpush1.msra.mxu0 %v739
        %1541 = vmatprep.subr.mxu0 %v739
        %1542 = vmatpush1.msra.mxu0 %v738
        %1543 = vmatprep.subr.mxu0 %v653
        %1544 = vmatpush1.msra.mxu0 %v646
        %1545 = vmatprep.subr.mxu0 %v646
        %1546 = vmatpush1.msra.mxu0 %v645
        %1547 = vmatprep.subr.mxu0 %v560
        %1548 = vmatpush1.msra.mxu0 %v553
        %1549 = vmatprep.subr.mxu0 %v553
        %1550 = vmatpush1.msra.mxu0 %v552
        %1551 = vmatprep.subr.mxu0 %v467
        %1552 = vmatpush1.msra.mxu0 %v460
        %1553 = vmatprep.subr.mxu0 %v460
        %1554 = vmatpush1.msra.mxu0 %v459
        %1555 = vmatprep.subr.mxu0 %v374
        %1556 = vmatpush1.msra.mxu0 %v367
        %1557 = vmatprep.subr.mxu0 %v367
        %1558 = vmatpush1.msra.mxu0 %v366
        %1559 = vmatprep.subr.mxu0 0.0
        %1560 = vmatpush2.msra.mxu0 0.0
        %1561 = vmatprep.subr.mxu0 0.0
        %1562 = vmatpush2.msra.mxu0 0.0
        %1563 = vmatprep.subr.mxu0 0.0
        %1564 = vmatpush2.msra.mxu0 0.0
        %1565 = vmatprep.subr.mxu0 0.0
        %1566 = vmatpush2.msra.mxu0 0.0
        %1567 = vmatprep.subr.mxu0 0.0
        %1568 = vmatpush2.msra.mxu0 0.0
        %1569 = vmatprep.subr.mxu0 0.0
        %1570 = vmatpush2.msra.mxu0 0.0
        %1571 = vmatprep.subr.mxu0 %v1490
        %1572 = vmatpush2.msra.mxu0 %v1483
        %1573 = vmatprep.subr.mxu0 %v1483
        %1574 = vmatpush2.msra.mxu0 %v1482
        %1575 = vmatprep.subr.mxu0 %v1397
        %1576 = vmatpush2.msra.mxu0 %v1390
        %1577 = vmatprep.subr.mxu0 %v1390
        %1578 = vmatpush2.msra.mxu0 %v1389
        %1579 = vmatprep.subr.mxu0 %v1304
        %1580 = vmatpush2.msra.mxu0 %v1297
        %1581 = vmatprep.subr.mxu0 %v1297
        %1582 = vmatpush2.msra.mxu0 %v1296
        %1583 = vmatprep.subr.mxu0 %v1211
        %1584 = vmatpush2.msra.mxu0 %v1204
        %1585 = vmatprep.subr.mxu0 %v1204
        %1586 = vmatpush2.msra.mxu0 %v1203
        %1587 = vmatprep.subr.mxu0 %v1118
        %1588 = vmatpush2.msra.mxu0 %v1111
        %1589 = vmatprep.subr.mxu0 %v1111
        %1590 = vmatpush2.msra.mxu0 %v1110
        %1591 = vmatprep.mubr.f32.mxu0 %v1492
        %1592 = vmatmul.mubr.f32.gmra.mxu0 %v196
        %v1593 = vpop.f32.mrf.mxu0
        %v1594 = vadd.f32 0.0, %v1593
        %v1595 = vpop.f32.mrf.mxu0
        %v1596 = vadd.f32 0.0, %v1595
        %1597 = vmatprep.mubr.f32.mxu0 %v1495
        %1598 = vmatmul.mubr.f32.gmra.mxu0 %v198
        %v1599 = vpop.f32.mrf.mxu0
        %v1600 = vadd.f32 0.0, %v1599
        %v1601 = vpop.f32.mrf.mxu0
        %v1602 = vadd.f32 0.0, %v1601
        %1603 = vmatprep.mubr.f32.mxu0 %v1498
        %1604 = vmatmul.mubr.f32.gmra.mxu0 %v200
        %v1605 = vpop.f32.mrf.mxu0
        %v1606 = vadd.f32 0.0, %v1605
        %v1607 = vpop.f32.mrf.mxu0
        %v1608 = vadd.f32 0.0, %v1607
        %1609 = vmatprep.mubr.f32.mxu0 %v1501
        %1610 = vmatmul.mubr.f32.gmra.mxu0 %v202
        %v1611 = vpop.f32.mrf.mxu0
        %v1612 = vadd.f32 0.0, %v1611
        %v1613 = vpop.f32.mrf.mxu0
        %v1614 = vadd.f32 0.0, %v1613
        %1615 = vmatprep.mubr.f32.mxu0 %v1504
        %1616 = vmatmul.mubr.f32.gmra.mxu0 %v204
        %v1617 = vpop.f32.mrf.mxu0
        %v1618 = vadd.f32 0.0, %v1617
        %v1619 = vpop.f32.mrf.mxu0
        %v1620 = vadd.f32 0.0, %v1619
        %1621 = vmatprep.mubr.f32.mxu0 %v1507
        %1622 = vmatmul.mubr.f32.gmra.mxu0 %v206
        %v1623 = vpop.f32.mrf.mxu0
        %v1624 = vadd.f32 0.0, %v1623
        %v1625 = vpop.f32.mrf.mxu0
        %v1626 = vadd.f32 0.0, %v1625
        %1627 = vmatprep.mubr.f32.mxu0 %v1510
        %1628 = vmatmul.mubr.f32.gmra.mxu0 %v208
        %v1629 = vpop.f32.mrf.mxu0
        %v1630 = vadd.f32 0.0, %v1629
        %v1631 = vpop.f32.mrf.mxu0
        %v1632 = vadd.f32 0.0, %v1631
        %1633 = vmatprep.mubr.f32.mxu0 %v1513
        %1634 = vmatmul.mubr.f32.gmra.mxu0 %v210
        %v1635 = vpop.f32.mrf.mxu0
        %v1636 = vadd.f32 0.0, %v1635
        %v1637 = vpop.f32.mrf.mxu0
        %v1638 = vadd.f32 0.0, %v1637
        %1639 = vmatprep.mubr.f32.mxu0 %v1516
        %1640 = vmatmul.mubr.f32.gmra.mxu0 %v212
        %v1641 = vpop.f32.mrf.mxu0
        %v1642 = vadd.f32 0.0, %v1641
        %v1643 = vpop.f32.mrf.mxu0
        %v1644 = vadd.f32 0.0, %v1643
        %1645 = vmatprep.mubr.f32.mxu0 %v1519
        %1646 = vmatmul.mubr.f32.gmra.mxu0 %v214
        %v1647 = vpop.f32.mrf.mxu0
        %v1648 = vadd.f32 0.0, %v1647
        %v1649 = vpop.f32.mrf.mxu0
        %v1650 = vadd.f32 0.0, %v1649
        %1651 = vmatprep.mubr.f32.mxu0 %v1522
        %1652 = vmatmul.mubr.f32.gmra.mxu0 %v216
        %v1653 = vpop.f32.mrf.mxu0
        %v1654 = vadd.f32 0.0, %v1653
        %v1655 = vpop.f32.mrf.mxu0
        %v1656 = vadd.f32 0.0, %v1655
        %1657 = vmatprep.mubr.f32.mxu0 %v1525
        %1658 = vmatmul.mubr.f32.gmra.mxu0 %v218
        %v1659 = vpop.f32.mrf.mxu0
        %v1660 = vadd.f32 0.0, %v1659
        %v1661 = vpop.f32.mrf.mxu0
        %v1662 = vadd.f32 0.0, %v1661
        %1663 = vdwg.mxu0
        %v1664 = vmul.f32 %v1594, %v1594
        %v1665 = vmul.f32 %v1596, %v1596
        %v1666 = vmul.f32 %v1600, %v1600
        %v1667 = vmul.f32 %v1602, %v1602
        %v1668 = vmul.f32 %v1606, %v1606
        %v1669 = vmul.f32 %v1608, %v1608
        %v1670 = vmul.f32 %v1612, %v1612
        %v1671 = vmul.f32 %v1614, %v1614
        %v1672 = vmul.f32 %v1618, %v1618
        %v1673 = vmul.f32 %v1620, %v1620
        %v1674 = vmul.f32 %v1624, %v1624
        %v1675 = vmul.f32 %v1626, %v1626
        %v1676 = vmul.f32 %v1630, %v1630
        %v1677 = vmul.f32 %v1632, %v1632
        %v1678 = vmul.f32 %v1636, %v1636
        %v1679 = vmul.f32 %v1638, %v1638
        %v1680 = vmul.f32 %v1642, %v1642
        %v1681 = vmul.f32 %v1644, %v1644
        %v1682 = vmul.f32 %v1648, %v1648
        %v1683 = vmul.f32 %v1650, %v1650
        %v1684 = vmul.f32 %v1654, %v1654
        %v1685 = vmul.f32 %v1656, %v1656
        %v1686 = vmul.f32 %v1660, %v1660
        %v1687 = vmul.f32 %v1662, %v1662
        %v1688 = vadd.f32 %v1664, %v1676
        %v1689 = vadd.f32 %v1665, %v1677
        %v1690 = vadd.f32 %v1666, %v1678
        %v1691 = vadd.f32 %v1667, %v1679
        %v1692 = vadd.f32 %v1668, %v1680
        %v1693 = vadd.f32 %v1669, %v1681
        %v1694 = vadd.f32 %v1670, %v1682
        %v1695 = vadd.f32 %v1671, %v1683
        %v1696 = vadd.f32 %v1672, %v1684
        %v1697 = vadd.f32 %v1673, %v1685
        %v1698 = vadd.f32 %v1674, %v1686
        %v1699 = vadd.f32 %v1675, %v1687
        %v1700 = vrsqrt.pop %v1688
        %v1701 = vmul.f32 %v1688, %v1700
        %vm1702 = vcmp.eq.f32.partialorder %v1688, inf
        %v1703 = vsel %vm1702, %v1688, %v1701
        %vm1704 = vcmp.eq.f32.partialorder %v1688, 0.0
        %v1705 = vand.u32 %v1688, 2147483648
        %v1706 = vsel %vm1704, %v1705, %v1703
        %v1707 = vrsqrt.pop %v1689
        %v1708 = vmul.f32 %v1689, %v1707
        %vm1709 = vcmp.eq.f32.partialorder %v1689, inf
        %v1710 = vsel %vm1709, %v1689, %v1708
        %vm1711 = vcmp.eq.f32.partialorder %v1689, 0.0
        %v1712 = vand.u32 %v1689, 2147483648
        %v1713 = vsel %vm1711, %v1712, %v1710
        %v1714 = vrsqrt.pop %v1690
        %v1715 = vmul.f32 %v1690, %v1714
        %vm1716 = vcmp.eq.f32.partialorder %v1690, inf
        %v1717 = vsel %vm1716, %v1690, %v1715
        %vm1718 = vcmp.eq.f32.partialorder %v1690, 0.0
        %v1719 = vand.u32 %v1690, 2147483648
        %v1720 = vsel %vm1718, %v1719, %v1717
        %v1721 = vrsqrt.pop %v1691
        %v1722 = vmul.f32 %v1691, %v1721
        %vm1723 = vcmp.eq.f32.partialorder %v1691, inf
        %v1724 = vsel %vm1723, %v1691, %v1722
        %vm1725 = vcmp.eq.f32.partialorder %v1691, 0.0
        %v1726 = vand.u32 %v1691, 2147483648
        %v1727 = vsel %vm1725, %v1726, %v1724
        %v1728 = vrsqrt.pop %v1692
        %v1729 = vmul.f32 %v1692, %v1728
        %vm1730 = vcmp.eq.f32.partialorder %v1692, inf
        %v1731 = vsel %vm1730, %v1692, %v1729
        %vm1732 = vcmp.eq.f32.partialorder %v1692, 0.0
        %v1733 = vand.u32 %v1692, 2147483648
        %v1734 = vsel %vm1732, %v1733, %v1731
        %v1735 = vrsqrt.pop %v1693
        %v1736 = vmul.f32 %v1693, %v1735
        %vm1737 = vcmp.eq.f32.partialorder %v1693, inf
        %v1738 = vsel %vm1737, %v1693, %v1736
        %vm1739 = vcmp.eq.f32.partialorder %v1693, 0.0
        %v1740 = vand.u32 %v1693, 2147483648
        %v1741 = vsel %vm1739, %v1740, %v1738
        %v1742 = vrsqrt.pop %v1694
        %v1743 = vmul.f32 %v1694, %v1742
        %vm1744 = vcmp.eq.f32.partialorder %v1694, inf
        %v1745 = vsel %vm1744, %v1694, %v1743
        %vm1746 = vcmp.eq.f32.partialorder %v1694, 0.0
        %v1747 = vand.u32 %v1694, 2147483648
        %v1748 = vsel %vm1746, %v1747, %v1745
        %v1749 = vrsqrt.pop %v1695
        %v1750 = vmul.f32 %v1695, %v1749
        %vm1751 = vcmp.eq.f32.partialorder %v1695, inf
        %v1752 = vsel %vm1751, %v1695, %v1750
        %vm1753 = vcmp.eq.f32.partialorder %v1695, 0.0
        %v1754 = vand.u32 %v1695, 2147483648
        %v1755 = vsel %vm1753, %v1754, %v1752
        %v1756 = vrsqrt.pop %v1696
        %v1757 = vmul.f32 %v1696, %v1756
        %vm1758 = vcmp.eq.f32.partialorder %v1696, inf
        %v1759 = vsel %vm1758, %v1696, %v1757
        %vm1760 = vcmp.eq.f32.partialorder %v1696, 0.0
        %v1761 = vand.u32 %v1696, 2147483648
        %v1762 = vsel %vm1760, %v1761, %v1759
        %v1763 = vrsqrt.pop %v1697
        %v1764 = vmul.f32 %v1697, %v1763
        %vm1765 = vcmp.eq.f32.partialorder %v1697, inf
        %v1766 = vsel %vm1765, %v1697, %v1764
        %vm1767 = vcmp.eq.f32.partialorder %v1697, 0.0
        %v1768 = vand.u32 %v1697, 2147483648
        %v1769 = vsel %vm1767, %v1768, %v1766
        %v1770 = vrsqrt.pop %v1698
        %v1771 = vmul.f32 %v1698, %v1770
        %vm1772 = vcmp.eq.f32.partialorder %v1698, inf
        %v1773 = vsel %vm1772, %v1698, %v1771
        %vm1774 = vcmp.eq.f32.partialorder %v1698, 0.0
        %v1775 = vand.u32 %v1698, 2147483648
        %v1776 = vsel %vm1774, %v1775, %v1773
        %v1777 = vrsqrt.pop %v1699
        %v1778 = vmul.f32 %v1699, %v1777
        %vm1779 = vcmp.eq.f32.partialorder %v1699, inf
        %v1780 = vsel %vm1779, %v1699, %v1778
        %vm1781 = vcmp.eq.f32.partialorder %v1699, 0.0
        %v1782 = vand.u32 %v1699, 2147483648
        %v1783 = vsel %vm1781, %v1782, %v1780
        %v1790 = vcombine.high %v1706, %v1706
        %v1792 = vunpack.c.l.s4 1966171168
        %v1793 = vunpack.c.0.s8 %v1792
        %v1794 = vlaneseq
        %v1795 = vshrl.u32 %v1794, 7
        %v1796 = vsub.s32 %v1793, %v1795
        %v1797 = vrot.slane %v1706, %v1796
        %v1799 = vunpack.c.l.s4 1966171168
        %v1800 = vunpack.c.0.s8 %v1799
        %v1801 = vlaneseq
        %v1802 = vshrl.u32 %v1801, 7
        %v1803 = vsub.s32 %v1800, %v1802
        %v1804 = vrot.slane %v1790, %v1803
        %v1805 = vcombine.high %v1797, %v1797
        %v1806 = vcombine.high %v1804, %v1804
        %v1808 = vunpack.c.l.s4 1966171168
        %v1809 = vunpack.c.0.s8 %v1808
        %v1810 = vlaneseq
        %v1811 = vshrl.u32 %v1810, 7
        %v1812 = vsub.s32 %v1809, %v1811
        %v1813 = vrot.slane %v1797, %v1812
        %v1815 = vunpack.c.l.s4 1966171168
        %v1816 = vunpack.c.0.s8 %v1815
        %v1817 = vlaneseq
        %v1818 = vshrl.u32 %v1817, 7
        %v1819 = vsub.s32 %v1816, %v1818
        %v1820 = vrot.slane %v1804, %v1819
        %v1822 = vunpack.c.l.s4 1966171168
        %v1823 = vunpack.c.0.s8 %v1822
        %v1824 = vlaneseq
        %v1825 = vshrl.u32 %v1824, 7
        %v1826 = vsub.s32 %v1823, %v1825
        %v1827 = vrot.slane %v1805, %v1826
        %v1829 = vunpack.c.l.s4 1966171168
        %v1830 = vunpack.c.0.s8 %v1829
        %v1831 = vlaneseq
        %v1832 = vshrl.u32 %v1831, 7
        %v1833 = vsub.s32 %v1830, %v1832
        %v1834 = vrot.slane %v1806, %v1833
        %v1835 = vcombine.high %v1813, %v1813
        %v1836 = vcombine.high %v1820, %v1820
        %v1837 = vcombine.high %v1827, %v1827
        %v1838 = vcombine.high %v1834, %v1834
        %v1839 = vcombine.high %v1720, %v1720
        %v1841 = vunpack.c.l.s4 1966171168
        %v1842 = vunpack.c.0.s8 %v1841
        %v1843 = vlaneseq
        %v1844 = vshrl.u32 %v1843, 7
        %v1845 = vsub.s32 %v1842, %v1844
        %v1846 = vrot.slane %v1720, %v1845
        %v1848 = vunpack.c.l.s4 1966171168
        %v1849 = vunpack.c.0.s8 %v1848
        %v1850 = vlaneseq
        %v1851 = vshrl.u32 %v1850, 7
        %v1852 = vsub.s32 %v1849, %v1851
        %v1853 = vrot.slane %v1839, %v1852
        %v1854 = vcombine.high %v1846, %v1846
        %v1855 = vcombine.high %v1853, %v1853
        %v1857 = vunpack.c.l.s4 1966171168
        %v1858 = vunpack.c.0.s8 %v1857
        %v1859 = vlaneseq
        %v1860 = vshrl.u32 %v1859, 7
        %v1861 = vsub.s32 %v1858, %v1860
        %v1862 = vrot.slane %v1846, %v1861
        %v1864 = vunpack.c.l.s4 1966171168
        %v1865 = vunpack.c.0.s8 %v1864
        %v1866 = vlaneseq
        %v1867 = vshrl.u32 %v1866, 7
        %v1868 = vsub.s32 %v1865, %v1867
        %v1869 = vrot.slane %v1853, %v1868
        %v1871 = vunpack.c.l.s4 1966171168
        %v1872 = vunpack.c.0.s8 %v1871
        %v1873 = vlaneseq
        %v1874 = vshrl.u32 %v1873, 7
        %v1875 = vsub.s32 %v1872, %v1874
        %v1876 = vrot.slane %v1854, %v1875
        %v1878 = vunpack.c.l.s4 1966171168
        %v1879 = vunpack.c.0.s8 %v1878
        %v1880 = vlaneseq
        %v1881 = vshrl.u32 %v1880, 7
        %v1882 = vsub.s32 %v1879, %v1881
        %v1883 = vrot.slane %v1855, %v1882
        %v1884 = vcombine.high %v1862, %v1862
        %v1885 = vcombine.high %v1869, %v1869
        %v1886 = vcombine.high %v1876, %v1876
        %v1887 = vcombine.high %v1883, %v1883
        %v1888 = vcombine.high %v1734, %v1734
        %v1890 = vunpack.c.l.s4 1966171168
        %v1891 = vunpack.c.0.s8 %v1890
        %v1892 = vlaneseq
        %v1893 = vshrl.u32 %v1892, 7
        %v1894 = vsub.s32 %v1891, %v1893
        %v1895 = vrot.slane %v1734, %v1894
        %v1897 = vunpack.c.l.s4 1966171168
        %v1898 = vunpack.c.0.s8 %v1897
        %v1899 = vlaneseq
        %v1900 = vshrl.u32 %v1899, 7
        %v1901 = vsub.s32 %v1898, %v1900
        %v1902 = vrot.slane %v1888, %v1901
        %v1903 = vcombine.high %v1895, %v1895
        %v1904 = vcombine.high %v1902, %v1902
        %v1906 = vunpack.c.l.s4 1966171168
        %v1907 = vunpack.c.0.s8 %v1906
        %v1908 = vlaneseq
        %v1909 = vshrl.u32 %v1908, 7
        %v1910 = vsub.s32 %v1907, %v1909
        %v1911 = vrot.slane %v1895, %v1910
        %v1913 = vunpack.c.l.s4 1966171168
        %v1914 = vunpack.c.0.s8 %v1913
        %v1915 = vlaneseq
        %v1916 = vshrl.u32 %v1915, 7
        %v1917 = vsub.s32 %v1914, %v1916
        %v1918 = vrot.slane %v1902, %v1917
        %v1920 = vunpack.c.l.s4 1966171168
        %v1921 = vunpack.c.0.s8 %v1920
        %v1922 = vlaneseq
        %v1923 = vshrl.u32 %v1922, 7
        %v1924 = vsub.s32 %v1921, %v1923
        %v1925 = vrot.slane %v1903, %v1924
        %v1927 = vunpack.c.l.s4 1966171168
        %v1928 = vunpack.c.0.s8 %v1927
        %v1929 = vlaneseq
        %v1930 = vshrl.u32 %v1929, 7
        %v1931 = vsub.s32 %v1928, %v1930
        %v1932 = vrot.slane %v1904, %v1931
        %v1933 = vcombine.high %v1911, %v1911
        %v1934 = vcombine.high %v1918, %v1918
        %v1935 = vcombine.high %v1925, %v1925
        %v1936 = vcombine.high %v1932, %v1932
        %v1937 = vcombine.high %v1748, %v1748
        %v1939 = vunpack.c.l.s4 1966171168
        %v1940 = vunpack.c.0.s8 %v1939
        %v1941 = vlaneseq
        %v1942 = vshrl.u32 %v1941, 7
        %v1943 = vsub.s32 %v1940, %v1942
        %v1944 = vrot.slane %v1748, %v1943
        %v1946 = vunpack.c.l.s4 1966171168
        %v1947 = vunpack.c.0.s8 %v1946
        %v1948 = vlaneseq
        %v1949 = vshrl.u32 %v1948, 7
        %v1950 = vsub.s32 %v1947, %v1949
        %v1951 = vrot.slane %v1937, %v1950
        %v1952 = vcombine.high %v1944, %v1944
        %v1953 = vcombine.high %v1951, %v1951
        %v1955 = vunpack.c.l.s4 1966171168
        %v1956 = vunpack.c.0.s8 %v1955
        %v1957 = vlaneseq
        %v1958 = vshrl.u32 %v1957, 7
        %v1959 = vsub.s32 %v1956, %v1958
        %v1960 = vrot.slane %v1944, %v1959
        %v1962 = vunpack.c.l.s4 1966171168
        %v1963 = vunpack.c.0.s8 %v1962
        %v1964 = vlaneseq
        %v1965 = vshrl.u32 %v1964, 7
        %v1966 = vsub.s32 %v1963, %v1965
        %v1967 = vrot.slane %v1951, %v1966
        %v1969 = vunpack.c.l.s4 1966171168
        %v1970 = vunpack.c.0.s8 %v1969
        %v1971 = vlaneseq
        %v1972 = vshrl.u32 %v1971, 7
        %v1973 = vsub.s32 %v1970, %v1972
        %v1974 = vrot.slane %v1952, %v1973
        %v1976 = vunpack.c.l.s4 1966171168
        %v1977 = vunpack.c.0.s8 %v1976
        %v1978 = vlaneseq
        %v1979 = vshrl.u32 %v1978, 7
        %v1980 = vsub.s32 %v1977, %v1979
        %v1981 = vrot.slane %v1953, %v1980
        %v1982 = vcombine.high %v1960, %v1960
        %v1983 = vcombine.high %v1967, %v1967
        %v1984 = vcombine.high %v1974, %v1974
        %v1985 = vcombine.high %v1981, %v1981
        %v1986 = vcombine.high %v1762, %v1762
        %v1988 = vunpack.c.l.s4 1966171168
        %v1989 = vunpack.c.0.s8 %v1988
        %v1990 = vlaneseq
        %v1991 = vshrl.u32 %v1990, 7
        %v1992 = vsub.s32 %v1989, %v1991
        %v1993 = vrot.slane %v1762, %v1992
        %v1995 = vunpack.c.l.s4 1966171168
        %v1996 = vunpack.c.0.s8 %v1995
        %v1997 = vlaneseq
        %v1998 = vshrl.u32 %v1997, 7
        %v1999 = vsub.s32 %v1996, %v1998
        %v2000 = vrot.slane %v1986, %v1999
        %v2001 = vcombine.high %v1993, %v1993
        %v2002 = vcombine.high %v2000, %v2000
        %v2004 = vunpack.c.l.s4 1966171168
        %v2005 = vunpack.c.0.s8 %v2004
        %v2006 = vlaneseq
        %v2007 = vshrl.u32 %v2006, 7
        %v2008 = vsub.s32 %v2005, %v2007
        %v2009 = vrot.slane %v1993, %v2008
        %v2011 = vunpack.c.l.s4 1966171168
        %v2012 = vunpack.c.0.s8 %v2011
        %v2013 = vlaneseq
        %v2014 = vshrl.u32 %v2013, 7
        %v2015 = vsub.s32 %v2012, %v2014
        %v2016 = vrot.slane %v2000, %v2015
        %v2018 = vunpack.c.l.s4 1966171168
        %v2019 = vunpack.c.0.s8 %v2018
        %v2020 = vlaneseq
        %v2021 = vshrl.u32 %v2020, 7
        %v2022 = vsub.s32 %v2019, %v2021
        %v2023 = vrot.slane %v2001, %v2022
        %v2025 = vunpack.c.l.s4 1966171168
        %v2026 = vunpack.c.0.s8 %v2025
        %v2027 = vlaneseq
        %v2028 = vshrl.u32 %v2027, 7
        %v2029 = vsub.s32 %v2026, %v2028
        %v2030 = vrot.slane %v2002, %v2029
        %v2031 = vcombine.high %v2009, %v2009
        %v2032 = vcombine.high %v2016, %v2016
        %v2033 = vcombine.high %v2023, %v2023
        %v2034 = vcombine.high %v2030, %v2030
        %v2035 = vcombine.high %v1776, %v1776
        %v2037 = vunpack.c.l.s4 1966171168
        %v2038 = vunpack.c.0.s8 %v2037
        %v2039 = vlaneseq
        %v2040 = vshrl.u32 %v2039, 7
        %v2041 = vsub.s32 %v2038, %v2040
        %v2042 = vrot.slane %v1776, %v2041
        %v2044 = vunpack.c.l.s4 1966171168
        %v2045 = vunpack.c.0.s8 %v2044
        %v2046 = vlaneseq
        %v2047 = vshrl.u32 %v2046, 7
        %v2048 = vsub.s32 %v2045, %v2047
        %v2049 = vrot.slane %v2035, %v2048
        %v2050 = vcombine.high %v2042, %v2042
        %v2051 = vcombine.high %v2049, %v2049
        %v2053 = vunpack.c.l.s4 1966171168
        %v2054 = vunpack.c.0.s8 %v2053
        %v2055 = vlaneseq
        %v2056 = vshrl.u32 %v2055, 7
        %v2057 = vsub.s32 %v2054, %v2056
        %v2058 = vrot.slane %v2042, %v2057
        %v2060 = vunpack.c.l.s4 1966171168
        %v2061 = vunpack.c.0.s8 %v2060
        %v2062 = vlaneseq
        %v2063 = vshrl.u32 %v2062, 7
        %v2064 = vsub.s32 %v2061, %v2063
        %v2065 = vrot.slane %v2049, %v2064
        %v2067 = vunpack.c.l.s4 1966171168
        %v2068 = vunpack.c.0.s8 %v2067
        %v2069 = vlaneseq
        %v2070 = vshrl.u32 %v2069, 7
        %v2071 = vsub.s32 %v2068, %v2070
        %v2072 = vrot.slane %v2050, %v2071
        %v2074 = vunpack.c.l.s4 1966171168
        %v2075 = vunpack.c.0.s8 %v2074
        %v2076 = vlaneseq
        %v2077 = vshrl.u32 %v2076, 7
        %v2078 = vsub.s32 %v2075, %v2077
        %v2079 = vrot.slane %v2051, %v2078
        %v2080 = vcombine.high %v2058, %v2058
        %v2081 = vcombine.high %v2065, %v2065
        %v2082 = vcombine.high %v2072, %v2072
        %v2083 = vcombine.high %v2079, %v2079
        %vm2132 = vcmask 122880
        %2133 = vst.msk [vmem:[%s194] sm:$0x1] %vm2132, %v1813
        %2134 = vst.msk [vmem:[%s194 + $0x10] sm:$0x1] %vm2132, %v1827
        %2135 = vst.msk [vmem:[%s194 + $0x20] sm:$0x1] %vm2132, %v1835
        %2136 = vst.msk [vmem:[%s194 + $0x30] sm:$0x1] %vm2132, %v1837
        %2137 = vst.msk [vmem:[%s194 + $0x40] sm:$0x1] %vm2132, %v1820
        %2138 = vst.msk [vmem:[%s194 + $0x50] sm:$0x1] %vm2132, %v1834
        %2139 = vst.msk [vmem:[%s194 + $0x60] sm:$0x1] %vm2132, %v1836
        %2140 = vst.msk [vmem:[%s194 + $0x70] sm:$0x1] %vm2132, %v1838
        %2141 = vst.msk [vmem:[%s194 + $0x80] sm:$0x1] %vm2132, %v1862
        %2142 = vst.msk [vmem:[%s194 + $0x90] sm:$0x1] %vm2132, %v1876
        %2143 = vst.msk [vmem:[%s194 + $0xa0] sm:$0x1] %vm2132, %v1884
        %2144 = vst.msk [vmem:[%s194 + $0xb0] sm:$0x1] %vm2132, %v1886
        %2145 = vst.msk [vmem:[%s194 + $0xc0] sm:$0x1] %vm2132, %v1869
        %2146 = vst.msk [vmem:[%s194 + $0xd0] sm:$0x1] %vm2132, %v1883
        %2147 = vst.msk [vmem:[%s194 + $0xe0] sm:$0x1] %vm2132, %v1885
        %2148 = vst.msk [vmem:[%s194 + $0xf0] sm:$0x1] %vm2132, %v1887
        %2149 = vst.msk [vmem:[%s194 + $0x100] sm:$0x1] %vm2132, %v1911
        %2150 = vst.msk [vmem:[%s194 + $0x110] sm:$0x1] %vm2132, %v1925
        %2151 = vst.msk [vmem:[%s194 + $0x120] sm:$0x1] %vm2132, %v1933
        %2152 = vst.msk [vmem:[%s194 + $0x130] sm:$0x1] %vm2132, %v1935
        %2153 = vst.msk [vmem:[%s194 + $0x140] sm:$0x1] %vm2132, %v1918
        %2154 = vst.msk [vmem:[%s194 + $0x150] sm:$0x1] %vm2132, %v1932
        %2155 = vst.msk [vmem:[%s194 + $0x160] sm:$0x1] %vm2132, %v1934
        %2156 = vst.msk [vmem:[%s194 + $0x170] sm:$0x1] %vm2132, %v1936
        %2157 = vst.msk [vmem:[%s194 + $0x180] sm:$0x1] %vm2132, %v1960
        %2158 = vst.msk [vmem:[%s194 + $0x190] sm:$0x1] %vm2132, %v1974
        %2159 = vst.msk [vmem:[%s194 + $0x1a0] sm:$0x1] %vm2132, %v1982
        %2160 = vst.msk [vmem:[%s194 + $0x1b0] sm:$0x1] %vm2132, %v1984
        %2161 = vst.msk [vmem:[%s194 + $0x1c0] sm:$0x1] %vm2132, %v1967
        %2162 = vst.msk [vmem:[%s194 + $0x1d0] sm:$0x1] %vm2132, %v1981
        %2163 = vst.msk [vmem:[%s194 + $0x1e0] sm:$0x1] %vm2132, %v1983
        %2164 = vst.msk [vmem:[%s194 + $0x1f0] sm:$0x1] %vm2132, %v1985
        %2165 = vst.msk [vmem:[%s194 + $0x200] sm:$0x1] %vm2132, %v2009
        %2166 = vst.msk [vmem:[%s194 + $0x210] sm:$0x1] %vm2132, %v2023
        %2167 = vst.msk [vmem:[%s194 + $0x220] sm:$0x1] %vm2132, %v2031
        %2168 = vst.msk [vmem:[%s194 + $0x230] sm:$0x1] %vm2132, %v2033
        %2169 = vst.msk [vmem:[%s194 + $0x240] sm:$0x1] %vm2132, %v2016
        %2170 = vst.msk [vmem:[%s194 + $0x250] sm:$0x1] %vm2132, %v2030
        %2171 = vst.msk [vmem:[%s194 + $0x260] sm:$0x1] %vm2132, %v2032
        %2172 = vst.msk [vmem:[%s194 + $0x270] sm:$0x1] %vm2132, %v2034
        %2173 = vst.msk [vmem:[%s194 + $0x280] sm:$0x1] %vm2132, %v2058
        %2174 = vst.msk [vmem:[%s194 + $0x290] sm:$0x1] %vm2132, %v2072
        %2175 = vst.msk [vmem:[%s194 + $0x2a0] sm:$0x1] %vm2132, %v2080
        %2176 = vst.msk [vmem:[%s194 + $0x2b0] sm:$0x1] %vm2132, %v2082
        %2177 = vst.msk [vmem:[%s194 + $0x2c0] sm:$0x1] %vm2132, %v2065
        %2178 = vst.msk [vmem:[%s194 + $0x2d0] sm:$0x1] %vm2132, %v2079
        %2179 = vst.msk [vmem:[%s194 + $0x2e0] sm:$0x1] %vm2132, %v2081
        %2180 = vst.msk [vmem:[%s194 + $0x2f0] sm:$0x1] %vm2132, %v2083
        %v2181 = vlaneseq
        %v2182 = vshrl.u32 %v2181, 7
        %v2183 = vsub.s32 0, %v2182
        %v2184 = vrot.slane %v1813, %v2183
        %v2185 = vlaneseq
        %v2186 = vshrl.u32 %v2185, 7
        %v2187 = vsub.s32 0, %v2186
        %v2188 = vrot.slane %v1827, %v2187
        %v2189 = vlaneseq
        %v2190 = vshrl.u32 %v2189, 7
        %v2191 = vsub.s32 0, %v2190
        %v2192 = vrot.slane %v1835, %v2191
        %v2193 = vlaneseq
        %v2194 = vshrl.u32 %v2193, 7
        %v2195 = vsub.s32 0, %v2194
        %v2196 = vrot.slane %v1837, %v2195
        %v2197 = vlaneseq
        %v2198 = vshrl.u32 %v2197, 7
        %v2199 = vsub.s32 0, %v2198
        %v2200 = vrot.slane %v1820, %v2199
        %v2201 = vlaneseq
        %v2202 = vshrl.u32 %v2201, 7
        %v2203 = vsub.s32 0, %v2202
        %v2204 = vrot.slane %v1834, %v2203
        %v2205 = vlaneseq
        %v2206 = vshrl.u32 %v2205, 7
        %v2207 = vsub.s32 0, %v2206
        %v2208 = vrot.slane %v1836, %v2207
        %v2209 = vlaneseq
        %v2210 = vshrl.u32 %v2209, 7
        %v2211 = vsub.s32 0, %v2210
        %v2212 = vrot.slane %v1838, %v2211
        %v2213 = vlaneseq
        %v2214 = vshrl.u32 %v2213, 7
        %v2215 = vsub.s32 0, %v2214
        %v2216 = vrot.slane %v1862, %v2215
        %v2217 = vlaneseq
        %v2218 = vshrl.u32 %v2217, 7
        %v2219 = vsub.s32 0, %v2218
        %v2220 = vrot.slane %v1876, %v2219
        %v2221 = vlaneseq
        %v2222 = vshrl.u32 %v2221, 7
        %v2223 = vsub.s32 0, %v2222
        %v2224 = vrot.slane %v1884, %v2223
        %v2225 = vlaneseq
        %v2226 = vshrl.u32 %v2225, 7
        %v2227 = vsub.s32 0, %v2226
        %v2228 = vrot.slane %v1886, %v2227
        %v2229 = vlaneseq
        %v2230 = vshrl.u32 %v2229, 7
        %v2231 = vsub.s32 0, %v2230
        %v2232 = vrot.slane %v1869, %v2231
        %v2233 = vlaneseq
        %v2234 = vshrl.u32 %v2233, 7
        %v2235 = vsub.s32 0, %v2234
        %v2236 = vrot.slane %v1883, %v2235
        %v2237 = vlaneseq
        %v2238 = vshrl.u32 %v2237, 7
        %v2239 = vsub.s32 0, %v2238
        %v2240 = vrot.slane %v1885, %v2239
        %v2241 = vlaneseq
        %v2242 = vshrl.u32 %v2241, 7
        %v2243 = vsub.s32 0, %v2242
        %v2244 = vrot.slane %v1887, %v2243
        %v2245 = vlaneseq
        %v2246 = vshrl.u32 %v2245, 7
        %v2247 = vsub.s32 0, %v2246
        %v2248 = vrot.slane %v1911, %v2247
        %v2249 = vlaneseq
        %v2250 = vshrl.u32 %v2249, 7
        %v2251 = vsub.s32 0, %v2250
        %v2252 = vrot.slane %v1925, %v2251
        %v2253 = vlaneseq
        %v2254 = vshrl.u32 %v2253, 7
        %v2255 = vsub.s32 0, %v2254
        %v2256 = vrot.slane %v1933, %v2255
        %v2257 = vlaneseq
        %v2258 = vshrl.u32 %v2257, 7
        %v2259 = vsub.s32 0, %v2258
        %v2260 = vrot.slane %v1935, %v2259
        %v2261 = vlaneseq
        %v2262 = vshrl.u32 %v2261, 7
        %v2263 = vsub.s32 0, %v2262
        %v2264 = vrot.slane %v1918, %v2263
        %v2265 = vlaneseq
        %v2266 = vshrl.u32 %v2265, 7
        %v2267 = vsub.s32 0, %v2266
        %v2268 = vrot.slane %v1932, %v2267
        %v2269 = vlaneseq
        %v2270 = vshrl.u32 %v2269, 7
        %v2271 = vsub.s32 0, %v2270
        %v2272 = vrot.slane %v1934, %v2271
        %v2273 = vlaneseq
        %v2274 = vshrl.u32 %v2273, 7
        %v2275 = vsub.s32 0, %v2274
        %v2276 = vrot.slane %v1936, %v2275
        %v2277 = vlaneseq
        %v2278 = vshrl.u32 %v2277, 7
        %v2279 = vsub.s32 0, %v2278
        %v2280 = vrot.slane %v1960, %v2279
        %v2281 = vlaneseq
        %v2282 = vshrl.u32 %v2281, 7
        %v2283 = vsub.s32 0, %v2282
        %v2284 = vrot.slane %v1974, %v2283
        %v2285 = vlaneseq
        %v2286 = vshrl.u32 %v2285, 7
        %v2287 = vsub.s32 0, %v2286
        %v2288 = vrot.slane %v1982, %v2287
        %v2289 = vlaneseq
        %v2290 = vshrl.u32 %v2289, 7
        %v2291 = vsub.s32 0, %v2290
        %v2292 = vrot.slane %v1984, %v2291
        %v2293 = vlaneseq
        %v2294 = vshrl.u32 %v2293, 7
        %v2295 = vsub.s32 0, %v2294
        %v2296 = vrot.slane %v1967, %v2295
        %v2297 = vlaneseq
        %v2298 = vshrl.u32 %v2297, 7
        %v2299 = vsub.s32 0, %v2298
        %v2300 = vrot.slane %v1981, %v2299
        %v2301 = vlaneseq
        %v2302 = vshrl.u32 %v2301, 7
        %v2303 = vsub.s32 0, %v2302
        %v2304 = vrot.slane %v1983, %v2303
        %v2305 = vlaneseq
        %v2306 = vshrl.u32 %v2305, 7
        %v2307 = vsub.s32 0, %v2306
        %v2308 = vrot.slane %v1985, %v2307
        %v2309 = vlaneseq
        %v2310 = vshrl.u32 %v2309, 7
        %v2311 = vsub.s32 0, %v2310
        %v2312 = vrot.slane %v2009, %v2311
        %v2313 = vlaneseq
        %v2314 = vshrl.u32 %v2313, 7
        %v2315 = vsub.s32 0, %v2314
        %v2316 = vrot.slane %v2023, %v2315
        %v2317 = vlaneseq
        %v2318 = vshrl.u32 %v2317, 7
        %v2319 = vsub.s32 0, %v2318
        %v2320 = vrot.slane %v2031, %v2319
        %v2321 = vlaneseq
        %v2322 = vshrl.u32 %v2321, 7
        %v2323 = vsub.s32 0, %v2322
        %v2324 = vrot.slane %v2033, %v2323
        %v2325 = vlaneseq
        %v2326 = vshrl.u32 %v2325, 7
        %v2327 = vsub.s32 0, %v2326
        %v2328 = vrot.slane %v2016, %v2327
        %v2329 = vlaneseq
        %v2330 = vshrl.u32 %v2329, 7
        %v2331 = vsub.s32 0, %v2330
        %v2332 = vrot.slane %v2030, %v2331
        %v2333 = vlaneseq
        %v2334 = vshrl.u32 %v2333, 7
        %v2335 = vsub.s32 0, %v2334
        %v2336 = vrot.slane %v2032, %v2335
        %v2337 = vlaneseq
        %v2338 = vshrl.u32 %v2337, 7
        %v2339 = vsub.s32 0, %v2338
        %v2340 = vrot.slane %v2034, %v2339
        %v2341 = vlaneseq
        %v2342 = vshrl.u32 %v2341, 7
        %v2343 = vsub.s32 0, %v2342
        %v2344 = vrot.slane %v2058, %v2343
        %v2345 = vlaneseq
        %v2346 = vshrl.u32 %v2345, 7
        %v2347 = vsub.s32 0, %v2346
        %v2348 = vrot.slane %v2072, %v2347
        %v2349 = vlaneseq
        %v2350 = vshrl.u32 %v2349, 7
        %v2351 = vsub.s32 0, %v2350
        %v2352 = vrot.slane %v2080, %v2351
        %v2353 = vlaneseq
        %v2354 = vshrl.u32 %v2353, 7
        %v2355 = vsub.s32 0, %v2354
        %v2356 = vrot.slane %v2082, %v2355
        %v2357 = vlaneseq
        %v2358 = vshrl.u32 %v2357, 7
        %v2359 = vsub.s32 0, %v2358
        %v2360 = vrot.slane %v2065, %v2359
        %v2361 = vlaneseq
        %v2362 = vshrl.u32 %v2361, 7
        %v2363 = vsub.s32 0, %v2362
        %v2364 = vrot.slane %v2079, %v2363
        %v2365 = vlaneseq
        %v2366 = vshrl.u32 %v2365, 7
        %v2367 = vsub.s32 0, %v2366
        %v2368 = vrot.slane %v2081, %v2367
        %v2369 = vlaneseq
        %v2370 = vshrl.u32 %v2369, 7
        %v2371 = vsub.s32 0, %v2370
        %v2372 = vrot.slane %v2083, %v2371
        %2373 = vrot.lane.b32.xlu0 %v2184, 112
        %v2374 = vpop.permute.xlu0 %2373
        %2375 = vrot.lane.b32.xlu0 %v2188, 112
        %v2376 = vpop.permute.xlu0 %2375
        %2377 = vrot.lane.b32.xlu0 %v2192, 112
        %v2378 = vpop.permute.xlu0 %2377
        %2379 = vrot.lane.b32.xlu0 %v2196, 112
        %v2380 = vpop.permute.xlu0 %2379
        %2381 = vrot.lane.b32.xlu0 %v2200, 112
        %v2382 = vpop.permute.xlu0 %2381
        %2383 = vrot.lane.b32.xlu0 %v2204, 112
        %v2384 = vpop.permute.xlu0 %2383
        %2385 = vrot.lane.b32.xlu0 %v2208, 112
        %v2386 = vpop.permute.xlu0 %2385
        %2387 = vrot.lane.b32.xlu0 %v2212, 112
        %v2388 = vpop.permute.xlu0 %2387
        %2389 = vrot.lane.b32.xlu0 %v2216, 112
        %v2390 = vpop.permute.xlu0 %2389
        %2391 = vrot.lane.b32.xlu0 %v2220, 112
        %v2392 = vpop.permute.xlu0 %2391
        %2393 = vrot.lane.b32.xlu0 %v2224, 112
        %v2394 = vpop.permute.xlu0 %2393
        %2395 = vrot.lane.b32.xlu0 %v2228, 112
        %v2396 = vpop.permute.xlu0 %2395
        %2397 = vrot.lane.b32.xlu0 %v2232, 112
        %v2398 = vpop.permute.xlu0 %2397
        %2399 = vrot.lane.b32.xlu0 %v2236, 112
        %v2400 = vpop.permute.xlu0 %2399
        %2401 = vrot.lane.b32.xlu0 %v2240, 112
        %v2402 = vpop.permute.xlu0 %2401
        %2403 = vrot.lane.b32.xlu0 %v2244, 112
        %v2404 = vpop.permute.xlu0 %2403
        %2405 = vrot.lane.b32.xlu0 %v2248, 112
        %v2406 = vpop.permute.xlu0 %2405
        %2407 = vrot.lane.b32.xlu0 %v2252, 112
        %v2408 = vpop.permute.xlu0 %2407
        %2409 = vrot.lane.b32.xlu0 %v2256, 112
        %v2410 = vpop.permute.xlu0 %2409
        %2411 = vrot.lane.b32.xlu0 %v2260, 112
        %v2412 = vpop.permute.xlu0 %2411
        %2413 = vrot.lane.b32.xlu0 %v2264, 112
        %v2414 = vpop.permute.xlu0 %2413
        %2415 = vrot.lane.b32.xlu0 %v2268, 112
        %v2416 = vpop.permute.xlu0 %2415
        %2417 = vrot.lane.b32.xlu0 %v2272, 112
        %v2418 = vpop.permute.xlu0 %2417
        %2419 = vrot.lane.b32.xlu0 %v2276, 112
        %v2420 = vpop.permute.xlu0 %2419
        %2421 = vrot.lane.b32.xlu0 %v2280, 112
        %v2422 = vpop.permute.xlu0 %2421
        %2423 = vrot.lane.b32.xlu0 %v2284, 112
        %v2424 = vpop.permute.xlu0 %2423
        %2425 = vrot.lane.b32.xlu0 %v2288, 112
        %v2426 = vpop.permute.xlu0 %2425
        %2427 = vrot.lane.b32.xlu0 %v2292, 112
        %v2428 = vpop.permute.xlu0 %2427
        %2429 = vrot.lane.b32.xlu0 %v2296, 112
        %v2430 = vpop.permute.xlu0 %2429
        %2431 = vrot.lane.b32.xlu0 %v2300, 112
        %v2432 = vpop.permute.xlu0 %2431
        %2433 = vrot.lane.b32.xlu0 %v2304, 112
        %v2434 = vpop.permute.xlu0 %2433
        %2435 = vrot.lane.b32.xlu0 %v2308, 112
        %v2436 = vpop.permute.xlu0 %2435
        %2437 = vrot.lane.b32.xlu0 %v2312, 112
        %v2438 = vpop.permute.xlu0 %2437
        %2439 = vrot.lane.b32.xlu0 %v2316, 112
        %v2440 = vpop.permute.xlu0 %2439
        %2441 = vrot.lane.b32.xlu0 %v2320, 112
        %v2442 = vpop.permute.xlu0 %2441
        %2443 = vrot.lane.b32.xlu0 %v2324, 112
        %v2444 = vpop.permute.xlu0 %2443
        %2445 = vrot.lane.b32.xlu0 %v2328, 112
        %v2446 = vpop.permute.xlu0 %2445
        %2447 = vrot.lane.b32.xlu0 %v2332, 112
        %v2448 = vpop.permute.xlu0 %2447
        %2449 = vrot.lane.b32.xlu0 %v2336, 112
        %v2450 = vpop.permute.xlu0 %2449
        %2451 = vrot.lane.b32.xlu0 %v2340, 112
        %v2452 = vpop.permute.xlu0 %2451
        %2453 = vrot.lane.b32.xlu0 %v2344, 112
        %v2454 = vpop.permute.xlu0 %2453
        %2455 = vrot.lane.b32.xlu0 %v2348, 112
        %v2456 = vpop.permute.xlu0 %2455
        %2457 = vrot.lane.b32.xlu0 %v2352, 112
        %v2458 = vpop.permute.xlu0 %2457
        %2459 = vrot.lane.b32.xlu0 %v2356, 112
        %v2460 = vpop.permute.xlu0 %2459
        %2461 = vrot.lane.b32.xlu0 %v2360, 112
        %v2462 = vpop.permute.xlu0 %2461
        %2463 = vrot.lane.b32.xlu0 %v2364, 112
        %v2464 = vpop.permute.xlu0 %2463
        %2465 = vrot.lane.b32.xlu0 %v2368, 112
        %v2466 = vpop.permute.xlu0 %2465
        %2467 = vrot.lane.b32.xlu0 %v2372, 112
        %v2468 = vpop.permute.xlu0 %2467
        %2517 = vst.msk [vmem:[%s194 + $0x1] sm:$0x1] %vm2132, %v2374
        %2518 = vst.msk [vmem:[%s194 + $0x11] sm:$0x1] %vm2132, %v2376
        %2519 = vst.msk [vmem:[%s194 + $0x21] sm:$0x1] %vm2132, %v2378
        %2520 = vst.msk [vmem:[%s194 + $0x31] sm:$0x1] %vm2132, %v2380
        %2521 = vst.msk [vmem:[%s194 + $0x41] sm:$0x1] %vm2132, %v2382
        %2522 = vst.msk [vmem:[%s194 + $0x51] sm:$0x1] %vm2132, %v2384
        %2523 = vst.msk [vmem:[%s194 + $0x61] sm:$0x1] %vm2132, %v2386
        %2524 = vst.msk [vmem:[%s194 + $0x71] sm:$0x1] %vm2132, %v2388
        %2525 = vst.msk [vmem:[%s194 + $0x81] sm:$0x1] %vm2132, %v2390
        %2526 = vst.msk [vmem:[%s194 + $0x91] sm:$0x1] %vm2132, %v2392
        %2527 = vst.msk [vmem:[%s194 + $0xa1] sm:$0x1] %vm2132, %v2394
        %2528 = vst.msk [vmem:[%s194 + $0xb1] sm:$0x1] %vm2132, %v2396
        %2529 = vst.msk [vmem:[%s194 + $0xc1] sm:$0x1] %vm2132, %v2398
        %2530 = vst.msk [vmem:[%s194 + $0xd1] sm:$0x1] %vm2132, %v2400
        %2531 = vst.msk [vmem:[%s194 + $0xe1] sm:$0x1] %vm2132, %v2402
        %2532 = vst.msk [vmem:[%s194 + $0xf1] sm:$0x1] %vm2132, %v2404
        %2533 = vst.msk [vmem:[%s194 + $0x101] sm:$0x1] %vm2132, %v2406
        %2534 = vst.msk [vmem:[%s194 + $0x111] sm:$0x1] %vm2132, %v2408
        %2535 = vst.msk [vmem:[%s194 + $0x121] sm:$0x1] %vm2132, %v2410
        %2536 = vst.msk [vmem:[%s194 + $0x131] sm:$0x1] %vm2132, %v2412
        %2537 = vst.msk [vmem:[%s194 + $0x141] sm:$0x1] %vm2132, %v2414
        %2538 = vst.msk [vmem:[%s194 + $0x151] sm:$0x1] %vm2132, %v2416
        %2539 = vst.msk [vmem:[%s194 + $0x161] sm:$0x1] %vm2132, %v2418
        %2540 = vst.msk [vmem:[%s194 + $0x171] sm:$0x1] %vm2132, %v2420
        %2541 = vst.msk [vmem:[%s194 + $0x181] sm:$0x1] %vm2132, %v2422
        %2542 = vst.msk [vmem:[%s194 + $0x191] sm:$0x1] %vm2132, %v2424
        %2543 = vst.msk [vmem:[%s194 + $0x1a1] sm:$0x1] %vm2132, %v2426
        %2544 = vst.msk [vmem:[%s194 + $0x1b1] sm:$0x1] %vm2132, %v2428
        %2545 = vst.msk [vmem:[%s194 + $0x1c1] sm:$0x1] %vm2132, %v2430
        %2546 = vst.msk [vmem:[%s194 + $0x1d1] sm:$0x1] %vm2132, %v2432
        %2547 = vst.msk [vmem:[%s194 + $0x1e1] sm:$0x1] %vm2132, %v2434
        %2548 = vst.msk [vmem:[%s194 + $0x1f1] sm:$0x1] %vm2132, %v2436
        %2549 = vst.msk [vmem:[%s194 + $0x201] sm:$0x1] %vm2132, %v2438
        %2550 = vst.msk [vmem:[%s194 + $0x211] sm:$0x1] %vm2132, %v2440
        %2551 = vst.msk [vmem:[%s194 + $0x221] sm:$0x1] %vm2132, %v2442
        %2552 = vst.msk [vmem:[%s194 + $0x231] sm:$0x1] %vm2132, %v2444
        %2553 = vst.msk [vmem:[%s194 + $0x241] sm:$0x1] %vm2132, %v2446
        %2554 = vst.msk [vmem:[%s194 + $0x251] sm:$0x1] %vm2132, %v2448
        %2555 = vst.msk [vmem:[%s194 + $0x261] sm:$0x1] %vm2132, %v2450
        %2556 = vst.msk [vmem:[%s194 + $0x271] sm:$0x1] %vm2132, %v2452
        %2557 = vst.msk [vmem:[%s194 + $0x281] sm:$0x1] %vm2132, %v2454
        %2558 = vst.msk [vmem:[%s194 + $0x291] sm:$0x1] %vm2132, %v2456
        %2559 = vst.msk [vmem:[%s194 + $0x2a1] sm:$0x1] %vm2132, %v2458
        %2560 = vst.msk [vmem:[%s194 + $0x2b1] sm:$0x1] %vm2132, %v2460
        %2561 = vst.msk [vmem:[%s194 + $0x2c1] sm:$0x1] %vm2132, %v2462
        %2562 = vst.msk [vmem:[%s194 + $0x2d1] sm:$0x1] %vm2132, %v2464
        %2563 = vst.msk [vmem:[%s194 + $0x2e1] sm:$0x1] %vm2132, %v2466
        %2564 = vst.msk [vmem:[%s194 + $0x2f1] sm:$0x1] %vm2132, %v2468
        %2565 = vrot.lane.b32.xlu0 %v2184, 96
        %v2566 = vpop.permute.xlu0 %2565
        %2567 = vrot.lane.b32.xlu0 %v2188, 96
        %v2568 = vpop.permute.xlu0 %2567
        %2569 = vrot.lane.b32.xlu0 %v2192, 96
        %v2570 = vpop.permute.xlu0 %2569
        %2571 = vrot.lane.b32.xlu0 %v2196, 96
        %v2572 = vpop.permute.xlu0 %2571
        %2573 = vrot.lane.b32.xlu0 %v2200, 96
        %v2574 = vpop.permute.xlu0 %2573
        %2575 = vrot.lane.b32.xlu0 %v2204, 96
        %v2576 = vpop.permute.xlu0 %2575
        %2577 = vrot.lane.b32.xlu0 %v2208, 96
        %v2578 = vpop.permute.xlu0 %2577
        %2579 = vrot.lane.b32.xlu0 %v2212, 96
        %v2580 = vpop.permute.xlu0 %2579
        %2581 = vrot.lane.b32.xlu0 %v2216, 96
        %v2582 = vpop.permute.xlu0 %2581
        %2583 = vrot.lane.b32.xlu0 %v2220, 96
        %v2584 = vpop.permute.xlu0 %2583
        %2585 = vrot.lane.b32.xlu0 %v2224, 96
        %v2586 = vpop.permute.xlu0 %2585
        %2587 = vrot.lane.b32.xlu0 %v2228, 96
        %v2588 = vpop.permute.xlu0 %2587
        %2589 = vrot.lane.b32.xlu0 %v2232, 96
        %v2590 = vpop.permute.xlu0 %2589
        %2591 = vrot.lane.b32.xlu0 %v2236, 96
        %v2592 = vpop.permute.xlu0 %2591
        %2593 = vrot.lane.b32.xlu0 %v2240, 96
        %v2594 = vpop.permute.xlu0 %2593
        %2595 = vrot.lane.b32.xlu0 %v2244, 96
        %v2596 = vpop.permute.xlu0 %2595
        %2597 = vrot.lane.b32.xlu0 %v2248, 96
        %v2598 = vpop.permute.xlu0 %2597
        %2599 = vrot.lane.b32.xlu0 %v2252, 96
        %v2600 = vpop.permute.xlu0 %2599
        %2601 = vrot.lane.b32.xlu0 %v2256, 96
        %v2602 = vpop.permute.xlu0 %2601
        %2603 = vrot.lane.b32.xlu0 %v2260, 96
        %v2604 = vpop.permute.xlu0 %2603
        %2605 = vrot.lane.b32.xlu0 %v2264, 96
        %v2606 = vpop.permute.xlu0 %2605
        %2607 = vrot.lane.b32.xlu0 %v2268, 96
        %v2608 = vpop.permute.xlu0 %2607
        %2609 = vrot.lane.b32.xlu0 %v2272, 96
        %v2610 = vpop.permute.xlu0 %2609
        %2611 = vrot.lane.b32.xlu0 %v2276, 96
        %v2612 = vpop.permute.xlu0 %2611
        %2613 = vrot.lane.b32.xlu0 %v2280, 96
        %v2614 = vpop.permute.xlu0 %2613
        %2615 = vrot.lane.b32.xlu0 %v2284, 96
        %v2616 = vpop.permute.xlu0 %2615
        %2617 = vrot.lane.b32.xlu0 %v2288, 96
        %v2618 = vpop.permute.xlu0 %2617
        %2619 = vrot.lane.b32.xlu0 %v2292, 96
        %v2620 = vpop.permute.xlu0 %2619
        %2621 = vrot.lane.b32.xlu0 %v2296, 96
        %v2622 = vpop.permute.xlu0 %2621
        %2623 = vrot.lane.b32.xlu0 %v2300, 96
        %v2624 = vpop.permute.xlu0 %2623
        %2625 = vrot.lane.b32.xlu0 %v2304, 96
        %v2626 = vpop.permute.xlu0 %2625
        %2627 = vrot.lane.b32.xlu0 %v2308, 96
        %v2628 = vpop.permute.xlu0 %2627
        %2629 = vrot.lane.b32.xlu0 %v2312, 96
        %v2630 = vpop.permute.xlu0 %2629
        %2631 = vrot.lane.b32.xlu0 %v2316, 96
        %v2632 = vpop.permute.xlu0 %2631
        %2633 = vrot.lane.b32.xlu0 %v2320, 96
        %v2634 = vpop.permute.xlu0 %2633
        %2635 = vrot.lane.b32.xlu0 %v2324, 96
        %v2636 = vpop.permute.xlu0 %2635
        %2637 = vrot.lane.b32.xlu0 %v2328, 96
        %v2638 = vpop.permute.xlu0 %2637
        %2639 = vrot.lane.b32.xlu0 %v2332, 96
        %v2640 = vpop.permute.xlu0 %2639
        %2641 = vrot.lane.b32.xlu0 %v2336, 96
        %v2642 = vpop.permute.xlu0 %2641
        %2643 = vrot.lane.b32.xlu0 %v2340, 96
        %v2644 = vpop.permute.xlu0 %2643
        %2645 = vrot.lane.b32.xlu0 %v2344, 96
        %v2646 = vpop.permute.xlu0 %2645
        %2647 = vrot.lane.b32.xlu0 %v2348, 96
        %v2648 = vpop.permute.xlu0 %2647
        %2649 = vrot.lane.b32.xlu0 %v2352, 96
        %v2650 = vpop.permute.xlu0 %2649
        %2651 = vrot.lane.b32.xlu0 %v2356, 96
        %v2652 = vpop.permute.xlu0 %2651
        %2653 = vrot.lane.b32.xlu0 %v2360, 96
        %v2654 = vpop.permute.xlu0 %2653
        %2655 = vrot.lane.b32.xlu0 %v2364, 96
        %v2656 = vpop.permute.xlu0 %2655
        %2657 = vrot.lane.b32.xlu0 %v2368, 96
        %v2658 = vpop.permute.xlu0 %2657
        %2659 = vrot.lane.b32.xlu0 %v2372, 96
        %v2660 = vpop.permute.xlu0 %2659
        %2709 = vst.msk [vmem:[%s194 + $0x2] sm:$0x1] %vm2132, %v2566
        %2710 = vst.msk [vmem:[%s194 + $0x12] sm:$0x1] %vm2132, %v2568
        %2711 = vst.msk [vmem:[%s194 + $0x22] sm:$0x1] %vm2132, %v2570
        %2712 = vst.msk [vmem:[%s194 + $0x32] sm:$0x1] %vm2132, %v2572
        %2713 = vst.msk [vmem:[%s194 + $0x42] sm:$0x1] %vm2132, %v2574
        %2714 = vst.msk [vmem:[%s194 + $0x52] sm:$0x1] %vm2132, %v2576
        %2715 = vst.msk [vmem:[%s194 + $0x62] sm:$0x1] %vm2132, %v2578
        %2716 = vst.msk [vmem:[%s194 + $0x72] sm:$0x1] %vm2132, %v2580
        %2717 = vst.msk [vmem:[%s194 + $0x82] sm:$0x1] %vm2132, %v2582
        %2718 = vst.msk [vmem:[%s194 + $0x92] sm:$0x1] %vm2132, %v2584
        %2719 = vst.msk [vmem:[%s194 + $0xa2] sm:$0x1] %vm2132, %v2586
        %2720 = vst.msk [vmem:[%s194 + $0xb2] sm:$0x1] %vm2132, %v2588
        %2721 = vst.msk [vmem:[%s194 + $0xc2] sm:$0x1] %vm2132, %v2590
        %2722 = vst.msk [vmem:[%s194 + $0xd2] sm:$0x1] %vm2132, %v2592
        %2723 = vst.msk [vmem:[%s194 + $0xe2] sm:$0x1] %vm2132, %v2594
        %2724 = vst.msk [vmem:[%s194 + $0xf2] sm:$0x1] %vm2132, %v2596
        %2725 = vst.msk [vmem:[%s194 + $0x102] sm:$0x1] %vm2132, %v2598
        %2726 = vst.msk [vmem:[%s194 + $0x112] sm:$0x1] %vm2132, %v2600
        %2727 = vst.msk [vmem:[%s194 + $0x122] sm:$0x1] %vm2132, %v2602
        %2728 = vst.msk [vmem:[%s194 + $0x132] sm:$0x1] %vm2132, %v2604
        %2729 = vst.msk [vmem:[%s194 + $0x142] sm:$0x1] %vm2132, %v2606
        %2730 = vst.msk [vmem:[%s194 + $0x152] sm:$0x1] %vm2132, %v2608
        %2731 = vst.msk [vmem:[%s194 + $0x162] sm:$0x1] %vm2132, %v2610
        %2732 = vst.msk [vmem:[%s194 + $0x172] sm:$0x1] %vm2132, %v2612
        %2733 = vst.msk [vmem:[%s194 + $0x182] sm:$0x1] %vm2132, %v2614
        %2734 = vst.msk [vmem:[%s194 + $0x192] sm:$0x1] %vm2132, %v2616
        %2735 = vst.msk [vmem:[%s194 + $0x1a2] sm:$0x1] %vm2132, %v2618
        %2736 = vst.msk [vmem:[%s194 + $0x1b2] sm:$0x1] %vm2132, %v2620
        %2737 = vst.msk [vmem:[%s194 + $0x1c2] sm:$0x1] %vm2132, %v2622
        %2738 = vst.msk [vmem:[%s194 + $0x1d2] sm:$0x1] %vm2132, %v2624
        %2739 = vst.msk [vmem:[%s194 + $0x1e2] sm:$0x1] %vm2132, %v2626
        %2740 = vst.msk [vmem:[%s194 + $0x1f2] sm:$0x1] %vm2132, %v2628
        %2741 = vst.msk [vmem:[%s194 + $0x202] sm:$0x1] %vm2132, %v2630
        %2742 = vst.msk [vmem:[%s194 + $0x212] sm:$0x1] %vm2132, %v2632
        %2743 = vst.msk [vmem:[%s194 + $0x222] sm:$0x1] %vm2132, %v2634
        %2744 = vst.msk [vmem:[%s194 + $0x232] sm:$0x1] %vm2132, %v2636
        %2745 = vst.msk [vmem:[%s194 + $0x242] sm:$0x1] %vm2132, %v2638
        %2746 = vst.msk [vmem:[%s194 + $0x252] sm:$0x1] %vm2132, %v2640
        %2747 = vst.msk [vmem:[%s194 + $0x262] sm:$0x1] %vm2132, %v2642
        %2748 = vst.msk [vmem:[%s194 + $0x272] sm:$0x1] %vm2132, %v2644
        %2749 = vst.msk [vmem:[%s194 + $0x282] sm:$0x1] %vm2132, %v2646
        %2750 = vst.msk [vmem:[%s194 + $0x292] sm:$0x1] %vm2132, %v2648
        %2751 = vst.msk [vmem:[%s194 + $0x2a2] sm:$0x1] %vm2132, %v2650
        %2752 = vst.msk [vmem:[%s194 + $0x2b2] sm:$0x1] %vm2132, %v2652
        %2753 = vst.msk [vmem:[%s194 + $0x2c2] sm:$0x1] %vm2132, %v2654
        %2754 = vst.msk [vmem:[%s194 + $0x2d2] sm:$0x1] %vm2132, %v2656
        %2755 = vst.msk [vmem:[%s194 + $0x2e2] sm:$0x1] %vm2132, %v2658
        %2756 = vst.msk [vmem:[%s194 + $0x2f2] sm:$0x1] %vm2132, %v2660
        %2757 = vrot.lane.b32.xlu0 %v2184, 80
        %v2758 = vpop.permute.xlu0 %2757
        %2759 = vrot.lane.b32.xlu0 %v2188, 80
        %v2760 = vpop.permute.xlu0 %2759
        %2761 = vrot.lane.b32.xlu0 %v2192, 80
        %v2762 = vpop.permute.xlu0 %2761
        %2763 = vrot.lane.b32.xlu0 %v2196, 80
        %v2764 = vpop.permute.xlu0 %2763
        %2765 = vrot.lane.b32.xlu0 %v2200, 80
        %v2766 = vpop.permute.xlu0 %2765
        %2767 = vrot.lane.b32.xlu0 %v2204, 80
        %v2768 = vpop.permute.xlu0 %2767
        %2769 = vrot.lane.b32.xlu0 %v2208, 80
        %v2770 = vpop.permute.xlu0 %2769
        %2771 = vrot.lane.b32.xlu0 %v2212, 80
        %v2772 = vpop.permute.xlu0 %2771
        %2773 = vrot.lane.b32.xlu0 %v2216, 80
        %v2774 = vpop.permute.xlu0 %2773
        %2775 = vrot.lane.b32.xlu0 %v2220, 80
        %v2776 = vpop.permute.xlu0 %2775
        %2777 = vrot.lane.b32.xlu0 %v2224, 80
        %v2778 = vpop.permute.xlu0 %2777
        %2779 = vrot.lane.b32.xlu0 %v2228, 80
        %v2780 = vpop.permute.xlu0 %2779
        %2781 = vrot.lane.b32.xlu0 %v2232, 80
        %v2782 = vpop.permute.xlu0 %2781
        %2783 = vrot.lane.b32.xlu0 %v2236, 80
        %v2784 = vpop.permute.xlu0 %2783
        %2785 = vrot.lane.b32.xlu0 %v2240, 80
        %v2786 = vpop.permute.xlu0 %2785
        %2787 = vrot.lane.b32.xlu0 %v2244, 80
        %v2788 = vpop.permute.xlu0 %2787
        %2789 = vrot.lane.b32.xlu0 %v2248, 80
        %v2790 = vpop.permute.xlu0 %2789
        %2791 = vrot.lane.b32.xlu0 %v2252, 80
        %v2792 = vpop.permute.xlu0 %2791
        %2793 = vrot.lane.b32.xlu0 %v2256, 80
        %v2794 = vpop.permute.xlu0 %2793
        %2795 = vrot.lane.b32.xlu0 %v2260, 80
        %v2796 = vpop.permute.xlu0 %2795
        %2797 = vrot.lane.b32.xlu0 %v2264, 80
        %v2798 = vpop.permute.xlu0 %2797
        %2799 = vrot.lane.b32.xlu0 %v2268, 80
        %v2800 = vpop.permute.xlu0 %2799
        %2801 = vrot.lane.b32.xlu0 %v2272, 80
        %v2802 = vpop.permute.xlu0 %2801
        %2803 = vrot.lane.b32.xlu0 %v2276, 80
        %v2804 = vpop.permute.xlu0 %2803
        %2805 = vrot.lane.b32.xlu0 %v2280, 80
        %v2806 = vpop.permute.xlu0 %2805
        %2807 = vrot.lane.b32.xlu0 %v2284, 80
        %v2808 = vpop.permute.xlu0 %2807
        %2809 = vrot.lane.b32.xlu0 %v2288, 80
        %v2810 = vpop.permute.xlu0 %2809
        %2811 = vrot.lane.b32.xlu0 %v2292, 80
        %v2812 = vpop.permute.xlu0 %2811
        %2813 = vrot.lane.b32.xlu0 %v2296, 80
        %v2814 = vpop.permute.xlu0 %2813
        %2815 = vrot.lane.b32.xlu0 %v2300, 80
        %v2816 = vpop.permute.xlu0 %2815
        %2817 = vrot.lane.b32.xlu0 %v2304, 80
        %v2818 = vpop.permute.xlu0 %2817
        %2819 = vrot.lane.b32.xlu0 %v2308, 80
        %v2820 = vpop.permute.xlu0 %2819
        %2821 = vrot.lane.b32.xlu0 %v2312, 80
        %v2822 = vpop.permute.xlu0 %2821
        %2823 = vrot.lane.b32.xlu0 %v2316, 80
        %v2824 = vpop.permute.xlu0 %2823
        %2825 = vrot.lane.b32.xlu0 %v2320, 80
        %v2826 = vpop.permute.xlu0 %2825
        %2827 = vrot.lane.b32.xlu0 %v2324, 80
        %v2828 = vpop.permute.xlu0 %2827
        %2829 = vrot.lane.b32.xlu0 %v2328, 80
        %v2830 = vpop.permute.xlu0 %2829
        %2831 = vrot.lane.b32.xlu0 %v2332, 80
        %v2832 = vpop.permute.xlu0 %2831
        %2833 = vrot.lane.b32.xlu0 %v2336, 80
        %v2834 = vpop.permute.xlu0 %2833
        %2835 = vrot.lane.b32.xlu0 %v2340, 80
        %v2836 = vpop.permute.xlu0 %2835
        %2837 = vrot.lane.b32.xlu0 %v2344, 80
        %v2838 = vpop.permute.xlu0 %2837
        %2839 = vrot.lane.b32.xlu0 %v2348, 80
        %v2840 = vpop.permute.xlu0 %2839
        %2841 = vrot.lane.b32.xlu0 %v2352, 80
        %v2842 = vpop.permute.xlu0 %2841
        %2843 = vrot.lane.b32.xlu0 %v2356, 80
        %v2844 = vpop.permute.xlu0 %2843
        %2845 = vrot.lane.b32.xlu0 %v2360, 80
        %v2846 = vpop.permute.xlu0 %2845
        %2847 = vrot.lane.b32.xlu0 %v2364, 80
        %v2848 = vpop.permute.xlu0 %2847
        %2849 = vrot.lane.b32.xlu0 %v2368, 80
        %v2850 = vpop.permute.xlu0 %2849
        %2851 = vrot.lane.b32.xlu0 %v2372, 80
        %v2852 = vpop.permute.xlu0 %2851
        %2901 = vst.msk [vmem:[%s194 + $0x3] sm:$0x1] %vm2132, %v2758
        %2902 = vst.msk [vmem:[%s194 + $0x13] sm:$0x1] %vm2132, %v2760
        %2903 = vst.msk [vmem:[%s194 + $0x23] sm:$0x1] %vm2132, %v2762
        %2904 = vst.msk [vmem:[%s194 + $0x33] sm:$0x1] %vm2132, %v2764
        %2905 = vst.msk [vmem:[%s194 + $0x43] sm:$0x1] %vm2132, %v2766
        %2906 = vst.msk [vmem:[%s194 + $0x53] sm:$0x1] %vm2132, %v2768
        %2907 = vst.msk [vmem:[%s194 + $0x63] sm:$0x1] %vm2132, %v2770
        %2908 = vst.msk [vmem:[%s194 + $0x73] sm:$0x1] %vm2132, %v2772
        %2909 = vst.msk [vmem:[%s194 + $0x83] sm:$0x1] %vm2132, %v2774
        %2910 = vst.msk [vmem:[%s194 + $0x93] sm:$0x1] %vm2132, %v2776
        %2911 = vst.msk [vmem:[%s194 + $0xa3] sm:$0x1] %vm2132, %v2778
        %2912 = vst.msk [vmem:[%s194 + $0xb3] sm:$0x1] %vm2132, %v2780
        %2913 = vst.msk [vmem:[%s194 + $0xc3] sm:$0x1] %vm2132, %v2782
        %2914 = vst.msk [vmem:[%s194 + $0xd3] sm:$0x1] %vm2132, %v2784
        %2915 = vst.msk [vmem:[%s194 + $0xe3] sm:$0x1] %vm2132, %v2786
        %2916 = vst.msk [vmem:[%s194 + $0xf3] sm:$0x1] %vm2132, %v2788
        %2917 = vst.msk [vmem:[%s194 + $0x103] sm:$0x1] %vm2132, %v2790
        %2918 = vst.msk [vmem:[%s194 + $0x113] sm:$0x1] %vm2132, %v2792
        %2919 = vst.msk [vmem:[%s194 + $0x123] sm:$0x1] %vm2132, %v2794
        %2920 = vst.msk [vmem:[%s194 + $0x133] sm:$0x1] %vm2132, %v2796
        %2921 = vst.msk [vmem:[%s194 + $0x143] sm:$0x1] %vm2132, %v2798
        %2922 = vst.msk [vmem:[%s194 + $0x153] sm:$0x1] %vm2132, %v2800
        %2923 = vst.msk [vmem:[%s194 + $0x163] sm:$0x1] %vm2132, %v2802
        %2924 = vst.msk [vmem:[%s194 + $0x173] sm:$0x1] %vm2132, %v2804
        %2925 = vst.msk [vmem:[%s194 + $0x183] sm:$0x1] %vm2132, %v2806
        %2926 = vst.msk [vmem:[%s194 + $0x193] sm:$0x1] %vm2132, %v2808
        %2927 = vst.msk [vmem:[%s194 + $0x1a3] sm:$0x1] %vm2132, %v2810
        %2928 = vst.msk [vmem:[%s194 + $0x1b3] sm:$0x1] %vm2132, %v2812
        %2929 = vst.msk [vmem:[%s194 + $0x1c3] sm:$0x1] %vm2132, %v2814
        %2930 = vst.msk [vmem:[%s194 + $0x1d3] sm:$0x1] %vm2132, %v2816
        %2931 = vst.msk [vmem:[%s194 + $0x1e3] sm:$0x1] %vm2132, %v2818
        %2932 = vst.msk [vmem:[%s194 + $0x1f3] sm:$0x1] %vm2132, %v2820
        %2933 = vst.msk [vmem:[%s194 + $0x203] sm:$0x1] %vm2132, %v2822
        %2934 = vst.msk [vmem:[%s194 + $0x213] sm:$0x1] %vm2132, %v2824
        %2935 = vst.msk [vmem:[%s194 + $0x223] sm:$0x1] %vm2132, %v2826
        %2936 = vst.msk [vmem:[%s194 + $0x233] sm:$0x1] %vm2132, %v2828
        %2937 = vst.msk [vmem:[%s194 + $0x243] sm:$0x1] %vm2132, %v2830
        %2938 = vst.msk [vmem:[%s194 + $0x253] sm:$0x1] %vm2132, %v2832
        %2939 = vst.msk [vmem:[%s194 + $0x263] sm:$0x1] %vm2132, %v2834
        %2940 = vst.msk [vmem:[%s194 + $0x273] sm:$0x1] %vm2132, %v2836
        %2941 = vst.msk [vmem:[%s194 + $0x283] sm:$0x1] %vm2132, %v2838
        %2942 = vst.msk [vmem:[%s194 + $0x293] sm:$0x1] %vm2132, %v2840
        %2943 = vst.msk [vmem:[%s194 + $0x2a3] sm:$0x1] %vm2132, %v2842
        %2944 = vst.msk [vmem:[%s194 + $0x2b3] sm:$0x1] %vm2132, %v2844
        %2945 = vst.msk [vmem:[%s194 + $0x2c3] sm:$0x1] %vm2132, %v2846
        %2946 = vst.msk [vmem:[%s194 + $0x2d3] sm:$0x1] %vm2132, %v2848
        %2947 = vst.msk [vmem:[%s194 + $0x2e3] sm:$0x1] %vm2132, %v2850
        %2948 = vst.msk [vmem:[%s194 + $0x2f3] sm:$0x1] %vm2132, %v2852
        %2949 = vrot.lane.b32.xlu0 %v2184, 64
        %v2950 = vpop.permute.xlu0 %2949
        %2951 = vrot.lane.b32.xlu0 %v2188, 64
        %v2952 = vpop.permute.xlu0 %2951
        %2953 = vrot.lane.b32.xlu0 %v2192, 64
        %v2954 = vpop.permute.xlu0 %2953
        %2955 = vrot.lane.b32.xlu0 %v2196, 64
        %v2956 = vpop.permute.xlu0 %2955
        %2957 = vrot.lane.b32.xlu0 %v2200, 64
        %v2958 = vpop.permute.xlu0 %2957
        %2959 = vrot.lane.b32.xlu0 %v2204, 64
        %v2960 = vpop.permute.xlu0 %2959
        %2961 = vrot.lane.b32.xlu0 %v2208, 64
        %v2962 = vpop.permute.xlu0 %2961
        %2963 = vrot.lane.b32.xlu0 %v2212, 64
        %v2964 = vpop.permute.xlu0 %2963
        %2965 = vrot.lane.b32.xlu0 %v2216, 64
        %v2966 = vpop.permute.xlu0 %2965
        %2967 = vrot.lane.b32.xlu0 %v2220, 64
        %v2968 = vpop.permute.xlu0 %2967
        %2969 = vrot.lane.b32.xlu0 %v2224, 64
        %v2970 = vpop.permute.xlu0 %2969
        %2971 = vrot.lane.b32.xlu0 %v2228, 64
        %v2972 = vpop.permute.xlu0 %2971
        %2973 = vrot.lane.b32.xlu0 %v2232, 64
        %v2974 = vpop.permute.xlu0 %2973
        %2975 = vrot.lane.b32.xlu0 %v2236, 64
        %v2976 = vpop.permute.xlu0 %2975
        %2977 = vrot.lane.b32.xlu0 %v2240, 64
        %v2978 = vpop.permute.xlu0 %2977
        %2979 = vrot.lane.b32.xlu0 %v2244, 64
        %v2980 = vpop.permute.xlu0 %2979
        %2981 = vrot.lane.b32.xlu0 %v2248, 64
        %v2982 = vpop.permute.xlu0 %2981
        %2983 = vrot.lane.b32.xlu0 %v2252, 64
        %v2984 = vpop.permute.xlu0 %2983
        %2985 = vrot.lane.b32.xlu0 %v2256, 64
        %v2986 = vpop.permute.xlu0 %2985
        %2987 = vrot.lane.b32.xlu0 %v2260, 64
        %v2988 = vpop.permute.xlu0 %2987
        %2989 = vrot.lane.b32.xlu0 %v2264, 64
        %v2990 = vpop.permute.xlu0 %2989
        %2991 = vrot.lane.b32.xlu0 %v2268, 64
        %v2992 = vpop.permute.xlu0 %2991
        %2993 = vrot.lane.b32.xlu0 %v2272, 64
        %v2994 = vpop.permute.xlu0 %2993
        %2995 = vrot.lane.b32.xlu0 %v2276, 64
        %v2996 = vpop.permute.xlu0 %2995
        %2997 = vrot.lane.b32.xlu0 %v2280, 64
        %v2998 = vpop.permute.xlu0 %2997
        %2999 = vrot.lane.b32.xlu0 %v2284, 64
        %v3000 = vpop.permute.xlu0 %2999
        %3001 = vrot.lane.b32.xlu0 %v2288, 64
        %v3002 = vpop.permute.xlu0 %3001
        %3003 = vrot.lane.b32.xlu0 %v2292, 64
        %v3004 = vpop.permute.xlu0 %3003
        %3005 = vrot.lane.b32.xlu0 %v2296, 64
        %v3006 = vpop.permute.xlu0 %3005
        %3007 = vrot.lane.b32.xlu0 %v2300, 64
        %v3008 = vpop.permute.xlu0 %3007
        %3009 = vrot.lane.b32.xlu0 %v2304, 64
        %v3010 = vpop.permute.xlu0 %3009
        %3011 = vrot.lane.b32.xlu0 %v2308, 64
        %v3012 = vpop.permute.xlu0 %3011
        %3013 = vrot.lane.b32.xlu0 %v2312, 64
        %v3014 = vpop.permute.xlu0 %3013
        %3015 = vrot.lane.b32.xlu0 %v2316, 64
        %v3016 = vpop.permute.xlu0 %3015
        %3017 = vrot.lane.b32.xlu0 %v2320, 64
        %v3018 = vpop.permute.xlu0 %3017
        %3019 = vrot.lane.b32.xlu0 %v2324, 64
        %v3020 = vpop.permute.xlu0 %3019
        %3021 = vrot.lane.b32.xlu0 %v2328, 64
        %v3022 = vpop.permute.xlu0 %3021
        %3023 = vrot.lane.b32.xlu0 %v2332, 64
        %v3024 = vpop.permute.xlu0 %3023
        %3025 = vrot.lane.b32.xlu0 %v2336, 64
        %v3026 = vpop.permute.xlu0 %3025
        %3027 = vrot.lane.b32.xlu0 %v2340, 64
        %v3028 = vpop.permute.xlu0 %3027
        %3029 = vrot.lane.b32.xlu0 %v2344, 64
        %v3030 = vpop.permute.xlu0 %3029
        %3031 = vrot.lane.b32.xlu0 %v2348, 64
        %v3032 = vpop.permute.xlu0 %3031
        %3033 = vrot.lane.b32.xlu0 %v2352, 64
        %v3034 = vpop.permute.xlu0 %3033
        %3035 = vrot.lane.b32.xlu0 %v2356, 64
        %v3036 = vpop.permute.xlu0 %3035
        %3037 = vrot.lane.b32.xlu0 %v2360, 64
        %v3038 = vpop.permute.xlu0 %3037
        %3039 = vrot.lane.b32.xlu0 %v2364, 64
        %v3040 = vpop.permute.xlu0 %3039
        %3041 = vrot.lane.b32.xlu0 %v2368, 64
        %v3042 = vpop.permute.xlu0 %3041
        %3043 = vrot.lane.b32.xlu0 %v2372, 64
        %v3044 = vpop.permute.xlu0 %3043
        %3093 = vst.msk [vmem:[%s194 + $0x4] sm:$0x1] %vm2132, %v2950
        %3094 = vst.msk [vmem:[%s194 + $0x14] sm:$0x1] %vm2132, %v2952
        %3095 = vst.msk [vmem:[%s194 + $0x24] sm:$0x1] %vm2132, %v2954
        %3096 = vst.msk [vmem:[%s194 + $0x34] sm:$0x1] %vm2132, %v2956
        %3097 = vst.msk [vmem:[%s194 + $0x44] sm:$0x1] %vm2132, %v2958
        %3098 = vst.msk [vmem:[%s194 + $0x54] sm:$0x1] %vm2132, %v2960
        %3099 = vst.msk [vmem:[%s194 + $0x64] sm:$0x1] %vm2132, %v2962
        %3100 = vst.msk [vmem:[%s194 + $0x74] sm:$0x1] %vm2132, %v2964
        %3101 = vst.msk [vmem:[%s194 + $0x84] sm:$0x1] %vm2132, %v2966
        %3102 = vst.msk [vmem:[%s194 + $0x94] sm:$0x1] %vm2132, %v2968
        %3103 = vst.msk [vmem:[%s194 + $0xa4] sm:$0x1] %vm2132, %v2970
        %3104 = vst.msk [vmem:[%s194 + $0xb4] sm:$0x1] %vm2132, %v2972
        %3105 = vst.msk [vmem:[%s194 + $0xc4] sm:$0x1] %vm2132, %v2974
        %3106 = vst.msk [vmem:[%s194 + $0xd4] sm:$0x1] %vm2132, %v2976
        %3107 = vst.msk [vmem:[%s194 + $0xe4] sm:$0x1] %vm2132, %v2978
        %3108 = vst.msk [vmem:[%s194 + $0xf4] sm:$0x1] %vm2132, %v2980
        %3109 = vst.msk [vmem:[%s194 + $0x104] sm:$0x1] %vm2132, %v2982
        %3110 = vst.msk [vmem:[%s194 + $0x114] sm:$0x1] %vm2132, %v2984
        %3111 = vst.msk [vmem:[%s194 + $0x124] sm:$0x1] %vm2132, %v2986
        %3112 = vst.msk [vmem:[%s194 + $0x134] sm:$0x1] %vm2132, %v2988
        %3113 = vst.msk [vmem:[%s194 + $0x144] sm:$0x1] %vm2132, %v2990
        %3114 = vst.msk [vmem:[%s194 + $0x154] sm:$0x1] %vm2132, %v2992
        %3115 = vst.msk [vmem:[%s194 + $0x164] sm:$0x1] %vm2132, %v2994
        %3116 = vst.msk [vmem:[%s194 + $0x174] sm:$0x1] %vm2132, %v2996
        %3117 = vst.msk [vmem:[%s194 + $0x184] sm:$0x1] %vm2132, %v2998
        %3118 = vst.msk [vmem:[%s194 + $0x194] sm:$0x1] %vm2132, %v3000
        %3119 = vst.msk [vmem:[%s194 + $0x1a4] sm:$0x1] %vm2132, %v3002
        %3120 = vst.msk [vmem:[%s194 + $0x1b4] sm:$0x1] %vm2132, %v3004
        %3121 = vst.msk [vmem:[%s194 + $0x1c4] sm:$0x1] %vm2132, %v3006
        %3122 = vst.msk [vmem:[%s194 + $0x1d4] sm:$0x1] %vm2132, %v3008
        %3123 = vst.msk [vmem:[%s194 + $0x1e4] sm:$0x1] %vm2132, %v3010
        %3124 = vst.msk [vmem:[%s194 + $0x1f4] sm:$0x1] %vm2132, %v3012
        %3125 = vst.msk [vmem:[%s194 + $0x204] sm:$0x1] %vm2132, %v3014
        %3126 = vst.msk [vmem:[%s194 + $0x214] sm:$0x1] %vm2132, %v3016
        %3127 = vst.msk [vmem:[%s194 + $0x224] sm:$0x1] %vm2132, %v3018
        %3128 = vst.msk [vmem:[%s194 + $0x234] sm:$0x1] %vm2132, %v3020
        %3129 = vst.msk [vmem:[%s194 + $0x244] sm:$0x1] %vm2132, %v3022
        %3130 = vst.msk [vmem:[%s194 + $0x254] sm:$0x1] %vm2132, %v3024
        %3131 = vst.msk [vmem:[%s194 + $0x264] sm:$0x1] %vm2132, %v3026
        %3132 = vst.msk [vmem:[%s194 + $0x274] sm:$0x1] %vm2132, %v3028
        %3133 = vst.msk [vmem:[%s194 + $0x284] sm:$0x1] %vm2132, %v3030
        %3134 = vst.msk [vmem:[%s194 + $0x294] sm:$0x1] %vm2132, %v3032
        %3135 = vst.msk [vmem:[%s194 + $0x2a4] sm:$0x1] %vm2132, %v3034
        %3136 = vst.msk [vmem:[%s194 + $0x2b4] sm:$0x1] %vm2132, %v3036
        %3137 = vst.msk [vmem:[%s194 + $0x2c4] sm:$0x1] %vm2132, %v3038
        %3138 = vst.msk [vmem:[%s194 + $0x2d4] sm:$0x1] %vm2132, %v3040
        %3139 = vst.msk [vmem:[%s194 + $0x2e4] sm:$0x1] %vm2132, %v3042
        %3140 = vst.msk [vmem:[%s194 + $0x2f4] sm:$0x1] %vm2132, %v3044
        %3141 = vrot.lane.b32.xlu0 %v2184, 48
        %v3142 = vpop.permute.xlu0 %3141
        %3143 = vrot.lane.b32.xlu0 %v2188, 48
        %v3144 = vpop.permute.xlu0 %3143
        %3145 = vrot.lane.b32.xlu0 %v2192, 48
        %v3146 = vpop.permute.xlu0 %3145
        %3147 = vrot.lane.b32.xlu0 %v2196, 48
        %v3148 = vpop.permute.xlu0 %3147
        %3149 = vrot.lane.b32.xlu0 %v2200, 48
        %v3150 = vpop.permute.xlu0 %3149
        %3151 = vrot.lane.b32.xlu0 %v2204, 48
        %v3152 = vpop.permute.xlu0 %3151
        %3153 = vrot.lane.b32.xlu0 %v2208, 48
        %v3154 = vpop.permute.xlu0 %3153
        %3155 = vrot.lane.b32.xlu0 %v2212, 48
        %v3156 = vpop.permute.xlu0 %3155
        %3157 = vrot.lane.b32.xlu0 %v2216, 48
        %v3158 = vpop.permute.xlu0 %3157
        %3159 = vrot.lane.b32.xlu0 %v2220, 48
        %v3160 = vpop.permute.xlu0 %3159
        %3161 = vrot.lane.b32.xlu0 %v2224, 48
        %v3162 = vpop.permute.xlu0 %3161
        %3163 = vrot.lane.b32.xlu0 %v2228, 48
        %v3164 = vpop.permute.xlu0 %3163
        %3165 = vrot.lane.b32.xlu0 %v2232, 48
        %v3166 = vpop.permute.xlu0 %3165
        %3167 = vrot.lane.b32.xlu0 %v2236, 48
        %v3168 = vpop.permute.xlu0 %3167
        %3169 = vrot.lane.b32.xlu0 %v2240, 48
        %v3170 = vpop.permute.xlu0 %3169
        %3171 = vrot.lane.b32.xlu0 %v2244, 48
        %v3172 = vpop.permute.xlu0 %3171
        %3173 = vrot.lane.b32.xlu0 %v2248, 48
        %v3174 = vpop.permute.xlu0 %3173
        %3175 = vrot.lane.b32.xlu0 %v2252, 48
        %v3176 = vpop.permute.xlu0 %3175
        %3177 = vrot.lane.b32.xlu0 %v2256, 48
        %v3178 = vpop.permute.xlu0 %3177
        %3179 = vrot.lane.b32.xlu0 %v2260, 48
        %v3180 = vpop.permute.xlu0 %3179
        %3181 = vrot.lane.b32.xlu0 %v2264, 48
        %v3182 = vpop.permute.xlu0 %3181
        %3183 = vrot.lane.b32.xlu0 %v2268, 48
        %v3184 = vpop.permute.xlu0 %3183
        %3185 = vrot.lane.b32.xlu0 %v2272, 48
        %v3186 = vpop.permute.xlu0 %3185
        %3187 = vrot.lane.b32.xlu0 %v2276, 48
        %v3188 = vpop.permute.xlu0 %3187
        %3189 = vrot.lane.b32.xlu0 %v2280, 48
        %v3190 = vpop.permute.xlu0 %3189
        %3191 = vrot.lane.b32.xlu0 %v2284, 48
        %v3192 = vpop.permute.xlu0 %3191
        %3193 = vrot.lane.b32.xlu0 %v2288, 48
        %v3194 = vpop.permute.xlu0 %3193
        %3195 = vrot.lane.b32.xlu0 %v2292, 48
        %v3196 = vpop.permute.xlu0 %3195
        %3197 = vrot.lane.b32.xlu0 %v2296, 48
        %v3198 = vpop.permute.xlu0 %3197
        %3199 = vrot.lane.b32.xlu0 %v2300, 48
        %v3200 = vpop.permute.xlu0 %3199
        %3201 = vrot.lane.b32.xlu0 %v2304, 48
        %v3202 = vpop.permute.xlu0 %3201
        %3203 = vrot.lane.b32.xlu0 %v2308, 48
        %v3204 = vpop.permute.xlu0 %3203
        %3205 = vrot.lane.b32.xlu0 %v2312, 48
        %v3206 = vpop.permute.xlu0 %3205
        %3207 = vrot.lane.b32.xlu0 %v2316, 48
        %v3208 = vpop.permute.xlu0 %3207
        %3209 = vrot.lane.b32.xlu0 %v2320, 48
        %v3210 = vpop.permute.xlu0 %3209
        %3211 = vrot.lane.b32.xlu0 %v2324, 48
        %v3212 = vpop.permute.xlu0 %3211
        %3213 = vrot.lane.b32.xlu0 %v2328, 48
        %v3214 = vpop.permute.xlu0 %3213
        %3215 = vrot.lane.b32.xlu0 %v2332, 48
        %v3216 = vpop.permute.xlu0 %3215
        %3217 = vrot.lane.b32.xlu0 %v2336, 48
        %v3218 = vpop.permute.xlu0 %3217
        %3219 = vrot.lane.b32.xlu0 %v2340, 48
        %v3220 = vpop.permute.xlu0 %3219
        %3221 = vrot.lane.b32.xlu0 %v2344, 48
        %v3222 = vpop.permute.xlu0 %3221
        %3223 = vrot.lane.b32.xlu0 %v2348, 48
        %v3224 = vpop.permute.xlu0 %3223
        %3225 = vrot.lane.b32.xlu0 %v2352, 48
        %v3226 = vpop.permute.xlu0 %3225
        %3227 = vrot.lane.b32.xlu0 %v2356, 48
        %v3228 = vpop.permute.xlu0 %3227
        %3229 = vrot.lane.b32.xlu0 %v2360, 48
        %v3230 = vpop.permute.xlu0 %3229
        %3231 = vrot.lane.b32.xlu0 %v2364, 48
        %v3232 = vpop.permute.xlu0 %3231
        %3233 = vrot.lane.b32.xlu0 %v2368, 48
        %v3234 = vpop.permute.xlu0 %3233
        %3235 = vrot.lane.b32.xlu0 %v2372, 48
        %v3236 = vpop.permute.xlu0 %3235
        %3285 = vst.msk [vmem:[%s194 + $0x5] sm:$0x1] %vm2132, %v3142
        %3286 = vst.msk [vmem:[%s194 + $0x15] sm:$0x1] %vm2132, %v3144
        %3287 = vst.msk [vmem:[%s194 + $0x25] sm:$0x1] %vm2132, %v3146
        %3288 = vst.msk [vmem:[%s194 + $0x35] sm:$0x1] %vm2132, %v3148
        %3289 = vst.msk [vmem:[%s194 + $0x45] sm:$0x1] %vm2132, %v3150
        %3290 = vst.msk [vmem:[%s194 + $0x55] sm:$0x1] %vm2132, %v3152
        %3291 = vst.msk [vmem:[%s194 + $0x65] sm:$0x1] %vm2132, %v3154
        %3292 = vst.msk [vmem:[%s194 + $0x75] sm:$0x1] %vm2132, %v3156
        %3293 = vst.msk [vmem:[%s194 + $0x85] sm:$0x1] %vm2132, %v3158
        %3294 = vst.msk [vmem:[%s194 + $0x95] sm:$0x1] %vm2132, %v3160
        %3295 = vst.msk [vmem:[%s194 + $0xa5] sm:$0x1] %vm2132, %v3162
        %3296 = vst.msk [vmem:[%s194 + $0xb5] sm:$0x1] %vm2132, %v3164
        %3297 = vst.msk [vmem:[%s194 + $0xc5] sm:$0x1] %vm2132, %v3166
        %3298 = vst.msk [vmem:[%s194 + $0xd5] sm:$0x1] %vm2132, %v3168
        %3299 = vst.msk [vmem:[%s194 + $0xe5] sm:$0x1] %vm2132, %v3170
        %3300 = vst.msk [vmem:[%s194 + $0xf5] sm:$0x1] %vm2132, %v3172
        %3301 = vst.msk [vmem:[%s194 + $0x105] sm:$0x1] %vm2132, %v3174
        %3302 = vst.msk [vmem:[%s194 + $0x115] sm:$0x1] %vm2132, %v3176
        %3303 = vst.msk [vmem:[%s194 + $0x125] sm:$0x1] %vm2132, %v3178
        %3304 = vst.msk [vmem:[%s194 + $0x135] sm:$0x1] %vm2132, %v3180
        %3305 = vst.msk [vmem:[%s194 + $0x145] sm:$0x1] %vm2132, %v3182
        %3306 = vst.msk [vmem:[%s194 + $0x155] sm:$0x1] %vm2132, %v3184
        %3307 = vst.msk [vmem:[%s194 + $0x165] sm:$0x1] %vm2132, %v3186
        %3308 = vst.msk [vmem:[%s194 + $0x175] sm:$0x1] %vm2132, %v3188
        %3309 = vst.msk [vmem:[%s194 + $0x185] sm:$0x1] %vm2132, %v3190
        %3310 = vst.msk [vmem:[%s194 + $0x195] sm:$0x1] %vm2132, %v3192
        %3311 = vst.msk [vmem:[%s194 + $0x1a5] sm:$0x1] %vm2132, %v3194
        %3312 = vst.msk [vmem:[%s194 + $0x1b5] sm:$0x1] %vm2132, %v3196
        %3313 = vst.msk [vmem:[%s194 + $0x1c5] sm:$0x1] %vm2132, %v3198
        %3314 = vst.msk [vmem:[%s194 + $0x1d5] sm:$0x1] %vm2132, %v3200
        %3315 = vst.msk [vmem:[%s194 + $0x1e5] sm:$0x1] %vm2132, %v3202
        %3316 = vst.msk [vmem:[%s194 + $0x1f5] sm:$0x1] %vm2132, %v3204
        %3317 = vst.msk [vmem:[%s194 + $0x205] sm:$0x1] %vm2132, %v3206
        %3318 = vst.msk [vmem:[%s194 + $0x215] sm:$0x1] %vm2132, %v3208
        %3319 = vst.msk [vmem:[%s194 + $0x225] sm:$0x1] %vm2132, %v3210
        %3320 = vst.msk [vmem:[%s194 + $0x235] sm:$0x1] %vm2132, %v3212
        %3321 = vst.msk [vmem:[%s194 + $0x245] sm:$0x1] %vm2132, %v3214
        %3322 = vst.msk [vmem:[%s194 + $0x255] sm:$0x1] %vm2132, %v3216
        %3323 = vst.msk [vmem:[%s194 + $0x265] sm:$0x1] %vm2132, %v3218
        %3324 = vst.msk [vmem:[%s194 + $0x275] sm:$0x1] %vm2132, %v3220
        %3325 = vst.msk [vmem:[%s194 + $0x285] sm:$0x1] %vm2132, %v3222
        %3326 = vst.msk [vmem:[%s194 + $0x295] sm:$0x1] %vm2132, %v3224
        %3327 = vst.msk [vmem:[%s194 + $0x2a5] sm:$0x1] %vm2132, %v3226
        %3328 = vst.msk [vmem:[%s194 + $0x2b5] sm:$0x1] %vm2132, %v3228
        %3329 = vst.msk [vmem:[%s194 + $0x2c5] sm:$0x1] %vm2132, %v3230
        %3330 = vst.msk [vmem:[%s194 + $0x2d5] sm:$0x1] %vm2132, %v3232
        %3331 = vst.msk [vmem:[%s194 + $0x2e5] sm:$0x1] %vm2132, %v3234
        %3332 = vst.msk [vmem:[%s194 + $0x2f5] sm:$0x1] %vm2132, %v3236
        %3333 = vrot.lane.b32.xlu0 %v2184, 32
        %v3334 = vpop.permute.xlu0 %3333
        %3335 = vrot.lane.b32.xlu0 %v2188, 32
        %v3336 = vpop.permute.xlu0 %3335
        %3337 = vrot.lane.b32.xlu0 %v2192, 32
        %v3338 = vpop.permute.xlu0 %3337
        %3339 = vrot.lane.b32.xlu0 %v2196, 32
        %v3340 = vpop.permute.xlu0 %3339
        %3341 = vrot.lane.b32.xlu0 %v2200, 32
        %v3342 = vpop.permute.xlu0 %3341
        %3343 = vrot.lane.b32.xlu0 %v2204, 32
        %v3344 = vpop.permute.xlu0 %3343
        %3345 = vrot.lane.b32.xlu0 %v2208, 32
        %v3346 = vpop.permute.xlu0 %3345
        %3347 = vrot.lane.b32.xlu0 %v2212, 32
        %v3348 = vpop.permute.xlu0 %3347
        %3349 = vrot.lane.b32.xlu0 %v2216, 32
        %v3350 = vpop.permute.xlu0 %3349
        %3351 = vrot.lane.b32.xlu0 %v2220, 32
        %v3352 = vpop.permute.xlu0 %3351
        %3353 = vrot.lane.b32.xlu0 %v2224, 32
        %v3354 = vpop.permute.xlu0 %3353
        %3355 = vrot.lane.b32.xlu0 %v2228, 32
        %v3356 = vpop.permute.xlu0 %3355
        %3357 = vrot.lane.b32.xlu0 %v2232, 32
        %v3358 = vpop.permute.xlu0 %3357
        %3359 = vrot.lane.b32.xlu0 %v2236, 32
        %v3360 = vpop.permute.xlu0 %3359
        %3361 = vrot.lane.b32.xlu0 %v2240, 32
        %v3362 = vpop.permute.xlu0 %3361
        %3363 = vrot.lane.b32.xlu0 %v2244, 32
        %v3364 = vpop.permute.xlu0 %3363
        %3365 = vrot.lane.b32.xlu0 %v2248, 32
        %v3366 = vpop.permute.xlu0 %3365
        %3367 = vrot.lane.b32.xlu0 %v2252, 32
        %v3368 = vpop.permute.xlu0 %3367
        %3369 = vrot.lane.b32.xlu0 %v2256, 32
        %v3370 = vpop.permute.xlu0 %3369
        %3371 = vrot.lane.b32.xlu0 %v2260, 32
        %v3372 = vpop.permute.xlu0 %3371
        %3373 = vrot.lane.b32.xlu0 %v2264, 32
        %v3374 = vpop.permute.xlu0 %3373
        %3375 = vrot.lane.b32.xlu0 %v2268, 32
        %v3376 = vpop.permute.xlu0 %3375
        %3377 = vrot.lane.b32.xlu0 %v2272, 32
        %v3378 = vpop.permute.xlu0 %3377
        %3379 = vrot.lane.b32.xlu0 %v2276, 32
        %v3380 = vpop.permute.xlu0 %3379
        %3381 = vrot.lane.b32.xlu0 %v2280, 32
        %v3382 = vpop.permute.xlu0 %3381
        %3383 = vrot.lane.b32.xlu0 %v2284, 32
        %v3384 = vpop.permute.xlu0 %3383
        %3385 = vrot.lane.b32.xlu0 %v2288, 32
        %v3386 = vpop.permute.xlu0 %3385
        %3387 = vrot.lane.b32.xlu0 %v2292, 32
        %v3388 = vpop.permute.xlu0 %3387
        %3389 = vrot.lane.b32.xlu0 %v2296, 32
        %v3390 = vpop.permute.xlu0 %3389
        %3391 = vrot.lane.b32.xlu0 %v2300, 32
        %v3392 = vpop.permute.xlu0 %3391
        %3393 = vrot.lane.b32.xlu0 %v2304, 32
        %v3394 = vpop.permute.xlu0 %3393
        %3395 = vrot.lane.b32.xlu0 %v2308, 32
        %v3396 = vpop.permute.xlu0 %3395
        %3397 = vrot.lane.b32.xlu0 %v2312, 32
        %v3398 = vpop.permute.xlu0 %3397
        %3399 = vrot.lane.b32.xlu0 %v2316, 32
        %v3400 = vpop.permute.xlu0 %3399
        %3401 = vrot.lane.b32.xlu0 %v2320, 32
        %v3402 = vpop.permute.xlu0 %3401
        %3403 = vrot.lane.b32.xlu0 %v2324, 32
        %v3404 = vpop.permute.xlu0 %3403
        %3405 = vrot.lane.b32.xlu0 %v2328, 32
        %v3406 = vpop.permute.xlu0 %3405
        %3407 = vrot.lane.b32.xlu0 %v2332, 32
        %v3408 = vpop.permute.xlu0 %3407
        %3409 = vrot.lane.b32.xlu0 %v2336, 32
        %v3410 = vpop.permute.xlu0 %3409
        %3411 = vrot.lane.b32.xlu0 %v2340, 32
        %v3412 = vpop.permute.xlu0 %3411
        %3413 = vrot.lane.b32.xlu0 %v2344, 32
        %v3414 = vpop.permute.xlu0 %3413
        %3415 = vrot.lane.b32.xlu0 %v2348, 32
        %v3416 = vpop.permute.xlu0 %3415
        %3417 = vrot.lane.b32.xlu0 %v2352, 32
        %v3418 = vpop.permute.xlu0 %3417
        %3419 = vrot.lane.b32.xlu0 %v2356, 32
        %v3420 = vpop.permute.xlu0 %3419
        %3421 = vrot.lane.b32.xlu0 %v2360, 32
        %v3422 = vpop.permute.xlu0 %3421
        %3423 = vrot.lane.b32.xlu0 %v2364, 32
        %v3424 = vpop.permute.xlu0 %3423
        %3425 = vrot.lane.b32.xlu0 %v2368, 32
        %v3426 = vpop.permute.xlu0 %3425
        %3427 = vrot.lane.b32.xlu0 %v2372, 32
        %v3428 = vpop.permute.xlu0 %3427
        %3477 = vst.msk [vmem:[%s194 + $0x6] sm:$0x1] %vm2132, %v3334
        %3478 = vst.msk [vmem:[%s194 + $0x16] sm:$0x1] %vm2132, %v3336
        %3479 = vst.msk [vmem:[%s194 + $0x26] sm:$0x1] %vm2132, %v3338
        %3480 = vst.msk [vmem:[%s194 + $0x36] sm:$0x1] %vm2132, %v3340
        %3481 = vst.msk [vmem:[%s194 + $0x46] sm:$0x1] %vm2132, %v3342
        %3482 = vst.msk [vmem:[%s194 + $0x56] sm:$0x1] %vm2132, %v3344
        %3483 = vst.msk [vmem:[%s194 + $0x66] sm:$0x1] %vm2132, %v3346
        %3484 = vst.msk [vmem:[%s194 + $0x76] sm:$0x1] %vm2132, %v3348
        %3485 = vst.msk [vmem:[%s194 + $0x86] sm:$0x1] %vm2132, %v3350
        %3486 = vst.msk [vmem:[%s194 + $0x96] sm:$0x1] %vm2132, %v3352
        %3487 = vst.msk [vmem:[%s194 + $0xa6] sm:$0x1] %vm2132, %v3354
        %3488 = vst.msk [vmem:[%s194 + $0xb6] sm:$0x1] %vm2132, %v3356
        %3489 = vst.msk [vmem:[%s194 + $0xc6] sm:$0x1] %vm2132, %v3358
        %3490 = vst.msk [vmem:[%s194 + $0xd6] sm:$0x1] %vm2132, %v3360
        %3491 = vst.msk [vmem:[%s194 + $0xe6] sm:$0x1] %vm2132, %v3362
        %3492 = vst.msk [vmem:[%s194 + $0xf6] sm:$0x1] %vm2132, %v3364
        %3493 = vst.msk [vmem:[%s194 + $0x106] sm:$0x1] %vm2132, %v3366
        %3494 = vst.msk [vmem:[%s194 + $0x116] sm:$0x1] %vm2132, %v3368
        %3495 = vst.msk [vmem:[%s194 + $0x126] sm:$0x1] %vm2132, %v3370
        %3496 = vst.msk [vmem:[%s194 + $0x136] sm:$0x1] %vm2132, %v3372
        %3497 = vst.msk [vmem:[%s194 + $0x146] sm:$0x1] %vm2132, %v3374
        %3498 = vst.msk [vmem:[%s194 + $0x156] sm:$0x1] %vm2132, %v3376
        %3499 = vst.msk [vmem:[%s194 + $0x166] sm:$0x1] %vm2132, %v3378
        %3500 = vst.msk [vmem:[%s194 + $0x176] sm:$0x1] %vm2132, %v3380
        %3501 = vst.msk [vmem:[%s194 + $0x186] sm:$0x1] %vm2132, %v3382
        %3502 = vst.msk [vmem:[%s194 + $0x196] sm:$0x1] %vm2132, %v3384
        %3503 = vst.msk [vmem:[%s194 + $0x1a6] sm:$0x1] %vm2132, %v3386
        %3504 = vst.msk [vmem:[%s194 + $0x1b6] sm:$0x1] %vm2132, %v3388
        %3505 = vst.msk [vmem:[%s194 + $0x1c6] sm:$0x1] %vm2132, %v3390
        %3506 = vst.msk [vmem:[%s194 + $0x1d6] sm:$0x1] %vm2132, %v3392
        %3507 = vst.msk [vmem:[%s194 + $0x1e6] sm:$0x1] %vm2132, %v3394
        %3508 = vst.msk [vmem:[%s194 + $0x1f6] sm:$0x1] %vm2132, %v3396
        %3509 = vst.msk [vmem:[%s194 + $0x206] sm:$0x1] %vm2132, %v3398
        %3510 = vst.msk [vmem:[%s194 + $0x216] sm:$0x1] %vm2132, %v3400
        %3511 = vst.msk [vmem:[%s194 + $0x226] sm:$0x1] %vm2132, %v3402
        %3512 = vst.msk [vmem:[%s194 + $0x236] sm:$0x1] %vm2132, %v3404
        %3513 = vst.msk [vmem:[%s194 + $0x246] sm:$0x1] %vm2132, %v3406
        %3514 = vst.msk [vmem:[%s194 + $0x256] sm:$0x1] %vm2132, %v3408
        %3515 = vst.msk [vmem:[%s194 + $0x266] sm:$0x1] %vm2132, %v3410
        %3516 = vst.msk [vmem:[%s194 + $0x276] sm:$0x1] %vm2132, %v3412
        %3517 = vst.msk [vmem:[%s194 + $0x286] sm:$0x1] %vm2132, %v3414
        %3518 = vst.msk [vmem:[%s194 + $0x296] sm:$0x1] %vm2132, %v3416
        %3519 = vst.msk [vmem:[%s194 + $0x2a6] sm:$0x1] %vm2132, %v3418
        %3520 = vst.msk [vmem:[%s194 + $0x2b6] sm:$0x1] %vm2132, %v3420
        %3521 = vst.msk [vmem:[%s194 + $0x2c6] sm:$0x1] %vm2132, %v3422
        %3522 = vst.msk [vmem:[%s194 + $0x2d6] sm:$0x1] %vm2132, %v3424
        %3523 = vst.msk [vmem:[%s194 + $0x2e6] sm:$0x1] %vm2132, %v3426
        %3524 = vst.msk [vmem:[%s194 + $0x2f6] sm:$0x1] %vm2132, %v3428
        %3525 = vrot.lane.b32.xlu0 %v2184, 16
        %v3526 = vpop.permute.xlu0 %3525
        %3527 = vrot.lane.b32.xlu0 %v2188, 16
        %v3528 = vpop.permute.xlu0 %3527
        %3529 = vrot.lane.b32.xlu0 %v2192, 16
        %v3530 = vpop.permute.xlu0 %3529
        %3531 = vrot.lane.b32.xlu0 %v2196, 16
        %v3532 = vpop.permute.xlu0 %3531
        %3533 = vrot.lane.b32.xlu0 %v2200, 16
        %v3534 = vpop.permute.xlu0 %3533
        %3535 = vrot.lane.b32.xlu0 %v2204, 16
        %v3536 = vpop.permute.xlu0 %3535
        %3537 = vrot.lane.b32.xlu0 %v2208, 16
        %v3538 = vpop.permute.xlu0 %3537
        %3539 = vrot.lane.b32.xlu0 %v2212, 16
        %v3540 = vpop.permute.xlu0 %3539
        %3541 = vrot.lane.b32.xlu0 %v2216, 16
        %v3542 = vpop.permute.xlu0 %3541
        %3543 = vrot.lane.b32.xlu0 %v2220, 16
        %v3544 = vpop.permute.xlu0 %3543
        %3545 = vrot.lane.b32.xlu0 %v2224, 16
        %v3546 = vpop.permute.xlu0 %3545
        %3547 = vrot.lane.b32.xlu0 %v2228, 16
        %v3548 = vpop.permute.xlu0 %3547
        %3549 = vrot.lane.b32.xlu0 %v2232, 16
        %v3550 = vpop.permute.xlu0 %3549
        %3551 = vrot.lane.b32.xlu0 %v2236, 16
        %v3552 = vpop.permute.xlu0 %3551
        %3553 = vrot.lane.b32.xlu0 %v2240, 16
        %v3554 = vpop.permute.xlu0 %3553
        %3555 = vrot.lane.b32.xlu0 %v2244, 16
        %v3556 = vpop.permute.xlu0 %3555
        %3557 = vrot.lane.b32.xlu0 %v2248, 16
        %v3558 = vpop.permute.xlu0 %3557
        %3559 = vrot.lane.b32.xlu0 %v2252, 16
        %v3560 = vpop.permute.xlu0 %3559
        %3561 = vrot.lane.b32.xlu0 %v2256, 16
        %v3562 = vpop.permute.xlu0 %3561
        %3563 = vrot.lane.b32.xlu0 %v2260, 16
        %v3564 = vpop.permute.xlu0 %3563
        %3565 = vrot.lane.b32.xlu0 %v2264, 16
        %v3566 = vpop.permute.xlu0 %3565
        %3567 = vrot.lane.b32.xlu0 %v2268, 16
        %v3568 = vpop.permute.xlu0 %3567
        %3569 = vrot.lane.b32.xlu0 %v2272, 16
        %v3570 = vpop.permute.xlu0 %3569
        %3571 = vrot.lane.b32.xlu0 %v2276, 16
        %v3572 = vpop.permute.xlu0 %3571
        %3573 = vrot.lane.b32.xlu0 %v2280, 16
        %v3574 = vpop.permute.xlu0 %3573
        %3575 = vrot.lane.b32.xlu0 %v2284, 16
        %v3576 = vpop.permute.xlu0 %3575
        %3577 = vrot.lane.b32.xlu0 %v2288, 16
        %v3578 = vpop.permute.xlu0 %3577
        %3579 = vrot.lane.b32.xlu0 %v2292, 16
        %v3580 = vpop.permute.xlu0 %3579
        %3581 = vrot.lane.b32.xlu0 %v2296, 16
        %v3582 = vpop.permute.xlu0 %3581
        %3583 = vrot.lane.b32.xlu0 %v2300, 16
        %v3584 = vpop.permute.xlu0 %3583
        %3585 = vrot.lane.b32.xlu0 %v2304, 16
        %v3586 = vpop.permute.xlu0 %3585
        %3587 = vrot.lane.b32.xlu0 %v2308, 16
        %v3588 = vpop.permute.xlu0 %3587
        %3589 = vrot.lane.b32.xlu0 %v2312, 16
        %v3590 = vpop.permute.xlu0 %3589
        %3591 = vrot.lane.b32.xlu0 %v2316, 16
        %v3592 = vpop.permute.xlu0 %3591
        %3593 = vrot.lane.b32.xlu0 %v2320, 16
        %v3594 = vpop.permute.xlu0 %3593
        %3595 = vrot.lane.b32.xlu0 %v2324, 16
        %v3596 = vpop.permute.xlu0 %3595
        %3597 = vrot.lane.b32.xlu0 %v2328, 16
        %v3598 = vpop.permute.xlu0 %3597
        %3599 = vrot.lane.b32.xlu0 %v2332, 16
        %v3600 = vpop.permute.xlu0 %3599
        %3601 = vrot.lane.b32.xlu0 %v2336, 16
        %v3602 = vpop.permute.xlu0 %3601
        %3603 = vrot.lane.b32.xlu0 %v2340, 16
        %v3604 = vpop.permute.xlu0 %3603
        %3605 = vrot.lane.b32.xlu0 %v2344, 16
        %v3606 = vpop.permute.xlu0 %3605
        %3607 = vrot.lane.b32.xlu0 %v2348, 16
        %v3608 = vpop.permute.xlu0 %3607
        %3609 = vrot.lane.b32.xlu0 %v2352, 16
        %v3610 = vpop.permute.xlu0 %3609
        %3611 = vrot.lane.b32.xlu0 %v2356, 16
        %v3612 = vpop.permute.xlu0 %3611
        %3613 = vrot.lane.b32.xlu0 %v2360, 16
        %v3614 = vpop.permute.xlu0 %3613
        %3615 = vrot.lane.b32.xlu0 %v2364, 16
        %v3616 = vpop.permute.xlu0 %3615
        %3617 = vrot.lane.b32.xlu0 %v2368, 16
        %v3618 = vpop.permute.xlu0 %3617
        %3619 = vrot.lane.b32.xlu0 %v2372, 16
        %v3620 = vpop.permute.xlu0 %3619
        %3669 = vst.msk [vmem:[%s194 + $0x7] sm:$0x1] %vm2132, %v3526
        %3670 = vst.msk [vmem:[%s194 + $0x17] sm:$0x1] %vm2132, %v3528
        %3671 = vst.msk [vmem:[%s194 + $0x27] sm:$0x1] %vm2132, %v3530
        %3672 = vst.msk [vmem:[%s194 + $0x37] sm:$0x1] %vm2132, %v3532
        %3673 = vst.msk [vmem:[%s194 + $0x47] sm:$0x1] %vm2132, %v3534
        %3674 = vst.msk [vmem:[%s194 + $0x57] sm:$0x1] %vm2132, %v3536
        %3675 = vst.msk [vmem:[%s194 + $0x67] sm:$0x1] %vm2132, %v3538
        %3676 = vst.msk [vmem:[%s194 + $0x77] sm:$0x1] %vm2132, %v3540
        %3677 = vst.msk [vmem:[%s194 + $0x87] sm:$0x1] %vm2132, %v3542
        %3678 = vst.msk [vmem:[%s194 + $0x97] sm:$0x1] %vm2132, %v3544
        %3679 = vst.msk [vmem:[%s194 + $0xa7] sm:$0x1] %vm2132, %v3546
        %3680 = vst.msk [vmem:[%s194 + $0xb7] sm:$0x1] %vm2132, %v3548
        %3681 = vst.msk [vmem:[%s194 + $0xc7] sm:$0x1] %vm2132, %v3550
        %3682 = vst.msk [vmem:[%s194 + $0xd7] sm:$0x1] %vm2132, %v3552
        %3683 = vst.msk [vmem:[%s194 + $0xe7] sm:$0x1] %vm2132, %v3554
        %3684 = vst.msk [vmem:[%s194 + $0xf7] sm:$0x1] %vm2132, %v3556
        %3685 = vst.msk [vmem:[%s194 + $0x107] sm:$0x1] %vm2132, %v3558
        %3686 = vst.msk [vmem:[%s194 + $0x117] sm:$0x1] %vm2132, %v3560
        %3687 = vst.msk [vmem:[%s194 + $0x127] sm:$0x1] %vm2132, %v3562
        %3688 = vst.msk [vmem:[%s194 + $0x137] sm:$0x1] %vm2132, %v3564
        %3689 = vst.msk [vmem:[%s194 + $0x147] sm:$0x1] %vm2132, %v3566
        %3690 = vst.msk [vmem:[%s194 + $0x157] sm:$0x1] %vm2132, %v3568
        %3691 = vst.msk [vmem:[%s194 + $0x167] sm:$0x1] %vm2132, %v3570
        %3692 = vst.msk [vmem:[%s194 + $0x177] sm:$0x1] %vm2132, %v3572
        %3693 = vst.msk [vmem:[%s194 + $0x187] sm:$0x1] %vm2132, %v3574
        %3694 = vst.msk [vmem:[%s194 + $0x197] sm:$0x1] %vm2132, %v3576
        %3695 = vst.msk [vmem:[%s194 + $0x1a7] sm:$0x1] %vm2132, %v3578
        %3696 = vst.msk [vmem:[%s194 + $0x1b7] sm:$0x1] %vm2132, %v3580
        %3697 = vst.msk [vmem:[%s194 + $0x1c7] sm:$0x1] %vm2132, %v3582
        %3698 = vst.msk [vmem:[%s194 + $0x1d7] sm:$0x1] %vm2132, %v3584
        %3699 = vst.msk [vmem:[%s194 + $0x1e7] sm:$0x1] %vm2132, %v3586
        %3700 = vst.msk [vmem:[%s194 + $0x1f7] sm:$0x1] %vm2132, %v3588
        %3701 = vst.msk [vmem:[%s194 + $0x207] sm:$0x1] %vm2132, %v3590
        %3702 = vst.msk [vmem:[%s194 + $0x217] sm:$0x1] %vm2132, %v3592
        %3703 = vst.msk [vmem:[%s194 + $0x227] sm:$0x1] %vm2132, %v3594
        %3704 = vst.msk [vmem:[%s194 + $0x237] sm:$0x1] %vm2132, %v3596
        %3705 = vst.msk [vmem:[%s194 + $0x247] sm:$0x1] %vm2132, %v3598
        %3706 = vst.msk [vmem:[%s194 + $0x257] sm:$0x1] %vm2132, %v3600
        %3707 = vst.msk [vmem:[%s194 + $0x267] sm:$0x1] %vm2132, %v3602
        %3708 = vst.msk [vmem:[%s194 + $0x277] sm:$0x1] %vm2132, %v3604
        %3709 = vst.msk [vmem:[%s194 + $0x287] sm:$0x1] %vm2132, %v3606
        %3710 = vst.msk [vmem:[%s194 + $0x297] sm:$0x1] %vm2132, %v3608
        %3711 = vst.msk [vmem:[%s194 + $0x2a7] sm:$0x1] %vm2132, %v3610
        %3712 = vst.msk [vmem:[%s194 + $0x2b7] sm:$0x1] %vm2132, %v3612
        %3713 = vst.msk [vmem:[%s194 + $0x2c7] sm:$0x1] %vm2132, %v3614
        %3714 = vst.msk [vmem:[%s194 + $0x2d7] sm:$0x1] %vm2132, %v3616
        %3715 = vst.msk [vmem:[%s194 + $0x2e7] sm:$0x1] %vm2132, %v3618
        %3716 = vst.msk [vmem:[%s194 + $0x2f7] sm:$0x1] %vm2132, %v3620
        %v3723 = vcombine.high %v1713, %v1713
        %v3725 = vunpack.c.l.s4 1966171168
        %v3726 = vunpack.c.0.s8 %v3725
        %v3727 = vlaneseq
        %v3728 = vshrl.u32 %v3727, 7
        %v3729 = vsub.s32 %v3726, %v3728
        %v3730 = vrot.slane %v1713, %v3729
        %v3732 = vunpack.c.l.s4 1966171168
        %v3733 = vunpack.c.0.s8 %v3732
        %v3734 = vlaneseq
        %v3735 = vshrl.u32 %v3734, 7
        %v3736 = vsub.s32 %v3733, %v3735
        %v3737 = vrot.slane %v3723, %v3736
        %v3738 = vcombine.high %v3730, %v3730
        %v3739 = vcombine.high %v3737, %v3737
        %v3741 = vunpack.c.l.s4 1966171168
        %v3742 = vunpack.c.0.s8 %v3741
        %v3743 = vlaneseq
        %v3744 = vshrl.u32 %v3743, 7
        %v3745 = vsub.s32 %v3742, %v3744
        %v3746 = vrot.slane %v3730, %v3745
        %v3748 = vunpack.c.l.s4 1966171168
        %v3749 = vunpack.c.0.s8 %v3748
        %v3750 = vlaneseq
        %v3751 = vshrl.u32 %v3750, 7
        %v3752 = vsub.s32 %v3749, %v3751
        %v3753 = vrot.slane %v3737, %v3752
        %v3755 = vunpack.c.l.s4 1966171168
        %v3756 = vunpack.c.0.s8 %v3755
        %v3757 = vlaneseq
        %v3758 = vshrl.u32 %v3757, 7
        %v3759 = vsub.s32 %v3756, %v3758
        %v3760 = vrot.slane %v3738, %v3759
        %v3762 = vunpack.c.l.s4 1966171168
        %v3763 = vunpack.c.0.s8 %v3762
        %v3764 = vlaneseq
        %v3765 = vshrl.u32 %v3764, 7
        %v3766 = vsub.s32 %v3763, %v3765
        %v3767 = vrot.slane %v3739, %v3766
        %v3768 = vcombine.high %v3746, %v3746
        %v3769 = vcombine.high %v3753, %v3753
        %v3770 = vcombine.high %v3760, %v3760
        %v3771 = vcombine.high %v3767, %v3767
        %v3772 = vcombine.high %v1727, %v1727
        %v3774 = vunpack.c.l.s4 1966171168
        %v3775 = vunpack.c.0.s8 %v3774
        %v3776 = vlaneseq
        %v3777 = vshrl.u32 %v3776, 7
        %v3778 = vsub.s32 %v3775, %v3777
        %v3779 = vrot.slane %v1727, %v3778
        %v3781 = vunpack.c.l.s4 1966171168
        %v3782 = vunpack.c.0.s8 %v3781
        %v3783 = vlaneseq
        %v3784 = vshrl.u32 %v3783, 7
        %v3785 = vsub.s32 %v3782, %v3784
        %v3786 = vrot.slane %v3772, %v3785
        %v3787 = vcombine.high %v3779, %v3779
        %v3788 = vcombine.high %v3786, %v3786
        %v3790 = vunpack.c.l.s4 1966171168
        %v3791 = vunpack.c.0.s8 %v3790
        %v3792 = vlaneseq
        %v3793 = vshrl.u32 %v3792, 7
        %v3794 = vsub.s32 %v3791, %v3793
        %v3795 = vrot.slane %v3779, %v3794
        %v3797 = vunpack.c.l.s4 1966171168
        %v3798 = vunpack.c.0.s8 %v3797
        %v3799 = vlaneseq
        %v3800 = vshrl.u32 %v3799, 7
        %v3801 = vsub.s32 %v3798, %v3800
        %v3802 = vrot.slane %v3786, %v3801
        %v3804 = vunpack.c.l.s4 1966171168
        %v3805 = vunpack.c.0.s8 %v3804
        %v3806 = vlaneseq
        %v3807 = vshrl.u32 %v3806, 7
        %v3808 = vsub.s32 %v3805, %v3807
        %v3809 = vrot.slane %v3787, %v3808
        %v3811 = vunpack.c.l.s4 1966171168
        %v3812 = vunpack.c.0.s8 %v3811
        %v3813 = vlaneseq
        %v3814 = vshrl.u32 %v3813, 7
        %v3815 = vsub.s32 %v3812, %v3814
        %v3816 = vrot.slane %v3788, %v3815
        %v3817 = vcombine.high %v3795, %v3795
        %v3818 = vcombine.high %v3802, %v3802
        %v3819 = vcombine.high %v3809, %v3809
        %v3820 = vcombine.high %v3816, %v3816
        %v3821 = vcombine.high %v1741, %v1741
        %v3823 = vunpack.c.l.s4 1966171168
        %v3824 = vunpack.c.0.s8 %v3823
        %v3825 = vlaneseq
        %v3826 = vshrl.u32 %v3825, 7
        %v3827 = vsub.s32 %v3824, %v3826
        %v3828 = vrot.slane %v1741, %v3827
        %v3830 = vunpack.c.l.s4 1966171168
        %v3831 = vunpack.c.0.s8 %v3830
        %v3832 = vlaneseq
        %v3833 = vshrl.u32 %v3832, 7
        %v3834 = vsub.s32 %v3831, %v3833
        %v3835 = vrot.slane %v3821, %v3834
        %v3836 = vcombine.high %v3828, %v3828
        %v3837 = vcombine.high %v3835, %v3835
        %v3839 = vunpack.c.l.s4 1966171168
        %v3840 = vunpack.c.0.s8 %v3839
        %v3841 = vlaneseq
        %v3842 = vshrl.u32 %v3841, 7
        %v3843 = vsub.s32 %v3840, %v3842
        %v3844 = vrot.slane %v3828, %v3843
        %v3846 = vunpack.c.l.s4 1966171168
        %v3847 = vunpack.c.0.s8 %v3846
        %v3848 = vlaneseq
        %v3849 = vshrl.u32 %v3848, 7
        %v3850 = vsub.s32 %v3847, %v3849
        %v3851 = vrot.slane %v3835, %v3850
        %v3853 = vunpack.c.l.s4 1966171168
        %v3854 = vunpack.c.0.s8 %v3853
        %v3855 = vlaneseq
        %v3856 = vshrl.u32 %v3855, 7
        %v3857 = vsub.s32 %v3854, %v3856
        %v3858 = vrot.slane %v3836, %v3857
        %v3860 = vunpack.c.l.s4 1966171168
        %v3861 = vunpack.c.0.s8 %v3860
        %v3862 = vlaneseq
        %v3863 = vshrl.u32 %v3862, 7
        %v3864 = vsub.s32 %v3861, %v3863
        %v3865 = vrot.slane %v3837, %v3864
        %v3866 = vcombine.high %v3844, %v3844
        %v3867 = vcombine.high %v3851, %v3851
        %v3868 = vcombine.high %v3858, %v3858
        %v3869 = vcombine.high %v3865, %v3865
        %v3870 = vcombine.high %v1755, %v1755
        %v3872 = vunpack.c.l.s4 1966171168
        %v3873 = vunpack.c.0.s8 %v3872
        %v3874 = vlaneseq
        %v3875 = vshrl.u32 %v3874, 7
        %v3876 = vsub.s32 %v3873, %v3875
        %v3877 = vrot.slane %v1755, %v3876
        %v3879 = vunpack.c.l.s4 1966171168
        %v3880 = vunpack.c.0.s8 %v3879
        %v3881 = vlaneseq
        %v3882 = vshrl.u32 %v3881, 7
        %v3883 = vsub.s32 %v3880, %v3882
        %v3884 = vrot.slane %v3870, %v3883
        %v3885 = vcombine.high %v3877, %v3877
        %v3886 = vcombine.high %v3884, %v3884
        %v3888 = vunpack.c.l.s4 1966171168
        %v3889 = vunpack.c.0.s8 %v3888
        %v3890 = vlaneseq
        %v3891 = vshrl.u32 %v3890, 7
        %v3892 = vsub.s32 %v3889, %v3891
        %v3893 = vrot.slane %v3877, %v3892
        %v3895 = vunpack.c.l.s4 1966171168
        %v3896 = vunpack.c.0.s8 %v3895
        %v3897 = vlaneseq
        %v3898 = vshrl.u32 %v3897, 7
        %v3899 = vsub.s32 %v3896, %v3898
        %v3900 = vrot.slane %v3884, %v3899
        %v3902 = vunpack.c.l.s4 1966171168
        %v3903 = vunpack.c.0.s8 %v3902
        %v3904 = vlaneseq
        %v3905 = vshrl.u32 %v3904, 7
        %v3906 = vsub.s32 %v3903, %v3905
        %v3907 = vrot.slane %v3885, %v3906
        %v3909 = vunpack.c.l.s4 1966171168
        %v3910 = vunpack.c.0.s8 %v3909
        %v3911 = vlaneseq
        %v3912 = vshrl.u32 %v3911, 7
        %v3913 = vsub.s32 %v3910, %v3912
        %v3914 = vrot.slane %v3886, %v3913
        %v3915 = vcombine.high %v3893, %v3893
        %v3916 = vcombine.high %v3900, %v3900
        %v3917 = vcombine.high %v3907, %v3907
        %v3918 = vcombine.high %v3914, %v3914
        %v3919 = vcombine.high %v1769, %v1769
        %v3921 = vunpack.c.l.s4 1966171168
        %v3922 = vunpack.c.0.s8 %v3921
        %v3923 = vlaneseq
        %v3924 = vshrl.u32 %v3923, 7
        %v3925 = vsub.s32 %v3922, %v3924
        %v3926 = vrot.slane %v1769, %v3925
        %v3928 = vunpack.c.l.s4 1966171168
        %v3929 = vunpack.c.0.s8 %v3928
        %v3930 = vlaneseq
        %v3931 = vshrl.u32 %v3930, 7
        %v3932 = vsub.s32 %v3929, %v3931
        %v3933 = vrot.slane %v3919, %v3932
        %v3934 = vcombine.high %v3926, %v3926
        %v3935 = vcombine.high %v3933, %v3933
        %v3937 = vunpack.c.l.s4 1966171168
        %v3938 = vunpack.c.0.s8 %v3937
        %v3939 = vlaneseq
        %v3940 = vshrl.u32 %v3939, 7
        %v3941 = vsub.s32 %v3938, %v3940
        %v3942 = vrot.slane %v3926, %v3941
        %v3944 = vunpack.c.l.s4 1966171168
        %v3945 = vunpack.c.0.s8 %v3944
        %v3946 = vlaneseq
        %v3947 = vshrl.u32 %v3946, 7
        %v3948 = vsub.s32 %v3945, %v3947
        %v3949 = vrot.slane %v3933, %v3948
        %v3951 = vunpack.c.l.s4 1966171168
        %v3952 = vunpack.c.0.s8 %v3951
        %v3953 = vlaneseq
        %v3954 = vshrl.u32 %v3953, 7
        %v3955 = vsub.s32 %v3952, %v3954
        %v3956 = vrot.slane %v3934, %v3955
        %v3958 = vunpack.c.l.s4 1966171168
        %v3959 = vunpack.c.0.s8 %v3958
        %v3960 = vlaneseq
        %v3961 = vshrl.u32 %v3960, 7
        %v3962 = vsub.s32 %v3959, %v3961
        %v3963 = vrot.slane %v3935, %v3962
        %v3964 = vcombine.high %v3942, %v3942
        %v3965 = vcombine.high %v3949, %v3949
        %v3966 = vcombine.high %v3956, %v3956
        %v3967 = vcombine.high %v3963, %v3963
        %v3968 = vcombine.high %v1783, %v1783
        %v3970 = vunpack.c.l.s4 1966171168
        %v3971 = vunpack.c.0.s8 %v3970
        %v3972 = vlaneseq
        %v3973 = vshrl.u32 %v3972, 7
        %v3974 = vsub.s32 %v3971, %v3973
        %v3975 = vrot.slane %v1783, %v3974
        %v3977 = vunpack.c.l.s4 1966171168
        %v3978 = vunpack.c.0.s8 %v3977
        %v3979 = vlaneseq
        %v3980 = vshrl.u32 %v3979, 7
        %v3981 = vsub.s32 %v3978, %v3980
        %v3982 = vrot.slane %v3968, %v3981
        %v3983 = vcombine.high %v3975, %v3975
        %v3984 = vcombine.high %v3982, %v3982
        %v3986 = vunpack.c.l.s4 1966171168
        %v3987 = vunpack.c.0.s8 %v3986
        %v3988 = vlaneseq
        %v3989 = vshrl.u32 %v3988, 7
        %v3990 = vsub.s32 %v3987, %v3989
        %v3991 = vrot.slane %v3975, %v3990
        %v3993 = vunpack.c.l.s4 1966171168
        %v3994 = vunpack.c.0.s8 %v3993
        %v3995 = vlaneseq
        %v3996 = vshrl.u32 %v3995, 7
        %v3997 = vsub.s32 %v3994, %v3996
        %v3998 = vrot.slane %v3982, %v3997
        %v4000 = vunpack.c.l.s4 1966171168
        %v4001 = vunpack.c.0.s8 %v4000
        %v4002 = vlaneseq
        %v4003 = vshrl.u32 %v4002, 7
        %v4004 = vsub.s32 %v4001, %v4003
        %v4005 = vrot.slane %v3983, %v4004
        %v4007 = vunpack.c.l.s4 1966171168
        %v4008 = vunpack.c.0.s8 %v4007
        %v4009 = vlaneseq
        %v4010 = vshrl.u32 %v4009, 7
        %v4011 = vsub.s32 %v4008, %v4010
        %v4012 = vrot.slane %v3984, %v4011
        %v4013 = vcombine.high %v3991, %v3991
        %v4014 = vcombine.high %v3998, %v3998
        %v4015 = vcombine.high %v4005, %v4005
        %v4016 = vcombine.high %v4012, %v4012
        %4065 = vst.msk [vmem:[%s194 + $0x8] sm:$0x1] %vm2132, %v3746
        %4066 = vst.msk [vmem:[%s194 + $0x18] sm:$0x1] %vm2132, %v3760
        %4067 = vst.msk [vmem:[%s194 + $0x28] sm:$0x1] %vm2132, %v3768
        %4068 = vst.msk [vmem:[%s194 + $0x38] sm:$0x1] %vm2132, %v3770
        %4069 = vst.msk [vmem:[%s194 + $0x48] sm:$0x1] %vm2132, %v3753
        %4070 = vst.msk [vmem:[%s194 + $0x58] sm:$0x1] %vm2132, %v3767
        %4071 = vst.msk [vmem:[%s194 + $0x68] sm:$0x1] %vm2132, %v3769
        %4072 = vst.msk [vmem:[%s194 + $0x78] sm:$0x1] %vm2132, %v3771
        %4073 = vst.msk [vmem:[%s194 + $0x88] sm:$0x1] %vm2132, %v3795
        %4074 = vst.msk [vmem:[%s194 + $0x98] sm:$0x1] %vm2132, %v3809
        %4075 = vst.msk [vmem:[%s194 + $0xa8] sm:$0x1] %vm2132, %v3817
        %4076 = vst.msk [vmem:[%s194 + $0xb8] sm:$0x1] %vm2132, %v3819
        %4077 = vst.msk [vmem:[%s194 + $0xc8] sm:$0x1] %vm2132, %v3802
        %4078 = vst.msk [vmem:[%s194 + $0xd8] sm:$0x1] %vm2132, %v3816
        %4079 = vst.msk [vmem:[%s194 + $0xe8] sm:$0x1] %vm2132, %v3818
        %4080 = vst.msk [vmem:[%s194 + $0xf8] sm:$0x1] %vm2132, %v3820
        %4081 = vst.msk [vmem:[%s194 + $0x108] sm:$0x1] %vm2132, %v3844
        %4082 = vst.msk [vmem:[%s194 + $0x118] sm:$0x1] %vm2132, %v3858
        %4083 = vst.msk [vmem:[%s194 + $0x128] sm:$0x1] %vm2132, %v3866
        %4084 = vst.msk [vmem:[%s194 + $0x138] sm:$0x1] %vm2132, %v3868
        %4085 = vst.msk [vmem:[%s194 + $0x148] sm:$0x1] %vm2132, %v3851
        %4086 = vst.msk [vmem:[%s194 + $0x158] sm:$0x1] %vm2132, %v3865
        %4087 = vst.msk [vmem:[%s194 + $0x168] sm:$0x1] %vm2132, %v3867
        %4088 = vst.msk [vmem:[%s194 + $0x178] sm:$0x1] %vm2132, %v3869
        %4089 = vst.msk [vmem:[%s194 + $0x188] sm:$0x1] %vm2132, %v3893
        %4090 = vst.msk [vmem:[%s194 + $0x198] sm:$0x1] %vm2132, %v3907
        %4091 = vst.msk [vmem:[%s194 + $0x1a8] sm:$0x1] %vm2132, %v3915
        %4092 = vst.msk [vmem:[%s194 + $0x1b8] sm:$0x1] %vm2132, %v3917
        %4093 = vst.msk [vmem:[%s194 + $0x1c8] sm:$0x1] %vm2132, %v3900
        %4094 = vst.msk [vmem:[%s194 + $0x1d8] sm:$0x1] %vm2132, %v3914
        %4095 = vst.msk [vmem:[%s194 + $0x1e8] sm:$0x1] %vm2132, %v3916
        %4096 = vst.msk [vmem:[%s194 + $0x1f8] sm:$0x1] %vm2132, %v3918
        %4097 = vst.msk [vmem:[%s194 + $0x208] sm:$0x1] %vm2132, %v3942
        %4098 = vst.msk [vmem:[%s194 + $0x218] sm:$0x1] %vm2132, %v3956
        %4099 = vst.msk [vmem:[%s194 + $0x228] sm:$0x1] %vm2132, %v3964
        %4100 = vst.msk [vmem:[%s194 + $0x238] sm:$0x1] %vm2132, %v3966
        %4101 = vst.msk [vmem:[%s194 + $0x248] sm:$0x1] %vm2132, %v3949
        %4102 = vst.msk [vmem:[%s194 + $0x258] sm:$0x1] %vm2132, %v3963
        %4103 = vst.msk [vmem:[%s194 + $0x268] sm:$0x1] %vm2132, %v3965
        %4104 = vst.msk [vmem:[%s194 + $0x278] sm:$0x1] %vm2132, %v3967
        %4105 = vst.msk [vmem:[%s194 + $0x288] sm:$0x1] %vm2132, %v3991
        %4106 = vst.msk [vmem:[%s194 + $0x298] sm:$0x1] %vm2132, %v4005
        %4107 = vst.msk [vmem:[%s194 + $0x2a8] sm:$0x1] %vm2132, %v4013
        %4108 = vst.msk [vmem:[%s194 + $0x2b8] sm:$0x1] %vm2132, %v4015
        %4109 = vst.msk [vmem:[%s194 + $0x2c8] sm:$0x1] %vm2132, %v3998
        %4110 = vst.msk [vmem:[%s194 + $0x2d8] sm:$0x1] %vm2132, %v4012
        %4111 = vst.msk [vmem:[%s194 + $0x2e8] sm:$0x1] %vm2132, %v4014
        %4112 = vst.msk [vmem:[%s194 + $0x2f8] sm:$0x1] %vm2132, %v4016
        %v4113 = vlaneseq
        %v4114 = vshrl.u32 %v4113, 7
        %v4115 = vsub.s32 0, %v4114
        %v4116 = vrot.slane %v3746, %v4115
        %v4117 = vlaneseq
        %v4118 = vshrl.u32 %v4117, 7
        %v4119 = vsub.s32 0, %v4118
        %v4120 = vrot.slane %v3760, %v4119
        %v4121 = vlaneseq
        %v4122 = vshrl.u32 %v4121, 7
        %v4123 = vsub.s32 0, %v4122
        %v4124 = vrot.slane %v3768, %v4123
        %v4125 = vlaneseq
        %v4126 = vshrl.u32 %v4125, 7
        %v4127 = vsub.s32 0, %v4126
        %v4128 = vrot.slane %v3770, %v4127
        %v4129 = vlaneseq
        %v4130 = vshrl.u32 %v4129, 7
        %v4131 = vsub.s32 0, %v4130
        %v4132 = vrot.slane %v3753, %v4131
        %v4133 = vlaneseq
        %v4134 = vshrl.u32 %v4133, 7
        %v4135 = vsub.s32 0, %v4134
        %v4136 = vrot.slane %v3767, %v4135
        %v4137 = vlaneseq
        %v4138 = vshrl.u32 %v4137, 7
        %v4139 = vsub.s32 0, %v4138
        %v4140 = vrot.slane %v3769, %v4139
        %v4141 = vlaneseq
        %v4142 = vshrl.u32 %v4141, 7
        %v4143 = vsub.s32 0, %v4142
        %v4144 = vrot.slane %v3771, %v4143
        %v4145 = vlaneseq
        %v4146 = vshrl.u32 %v4145, 7
        %v4147 = vsub.s32 0, %v4146
        %v4148 = vrot.slane %v3795, %v4147
        %v4149 = vlaneseq
        %v4150 = vshrl.u32 %v4149, 7
        %v4151 = vsub.s32 0, %v4150
        %v4152 = vrot.slane %v3809, %v4151
        %v4153 = vlaneseq
        %v4154 = vshrl.u32 %v4153, 7
        %v4155 = vsub.s32 0, %v4154
        %v4156 = vrot.slane %v3817, %v4155
        %v4157 = vlaneseq
        %v4158 = vshrl.u32 %v4157, 7
        %v4159 = vsub.s32 0, %v4158
        %v4160 = vrot.slane %v3819, %v4159
        %v4161 = vlaneseq
        %v4162 = vshrl.u32 %v4161, 7
        %v4163 = vsub.s32 0, %v4162
        %v4164 = vrot.slane %v3802, %v4163
        %v4165 = vlaneseq
        %v4166 = vshrl.u32 %v4165, 7
        %v4167 = vsub.s32 0, %v4166
        %v4168 = vrot.slane %v3816, %v4167
        %v4169 = vlaneseq
        %v4170 = vshrl.u32 %v4169, 7
        %v4171 = vsub.s32 0, %v4170
        %v4172 = vrot.slane %v3818, %v4171
        %v4173 = vlaneseq
        %v4174 = vshrl.u32 %v4173, 7
        %v4175 = vsub.s32 0, %v4174
        %v4176 = vrot.slane %v3820, %v4175
        %v4177 = vlaneseq
        %v4178 = vshrl.u32 %v4177, 7
        %v4179 = vsub.s32 0, %v4178
        %v4180 = vrot.slane %v3844, %v4179
        %v4181 = vlaneseq
        %v4182 = vshrl.u32 %v4181, 7
        %v4183 = vsub.s32 0, %v4182
        %v4184 = vrot.slane %v3858, %v4183
        %v4185 = vlaneseq
        %v4186 = vshrl.u32 %v4185, 7
        %v4187 = vsub.s32 0, %v4186
        %v4188 = vrot.slane %v3866, %v4187
        %v4189 = vlaneseq
        %v4190 = vshrl.u32 %v4189, 7
        %v4191 = vsub.s32 0, %v4190
        %v4192 = vrot.slane %v3868, %v4191
        %v4193 = vlaneseq
        %v4194 = vshrl.u32 %v4193, 7
        %v4195 = vsub.s32 0, %v4194
        %v4196 = vrot.slane %v3851, %v4195
        %v4197 = vlaneseq
        %v4198 = vshrl.u32 %v4197, 7
        %v4199 = vsub.s32 0, %v4198
        %v4200 = vrot.slane %v3865, %v4199
        %v4201 = vlaneseq
        %v4202 = vshrl.u32 %v4201, 7
        %v4203 = vsub.s32 0, %v4202
        %v4204 = vrot.slane %v3867, %v4203
        %v4205 = vlaneseq
        %v4206 = vshrl.u32 %v4205, 7
        %v4207 = vsub.s32 0, %v4206
        %v4208 = vrot.slane %v3869, %v4207
        %v4209 = vlaneseq
        %v4210 = vshrl.u32 %v4209, 7
        %v4211 = vsub.s32 0, %v4210
        %v4212 = vrot.slane %v3893, %v4211
        %v4213 = vlaneseq
        %v4214 = vshrl.u32 %v4213, 7
        %v4215 = vsub.s32 0, %v4214
        %v4216 = vrot.slane %v3907, %v4215
        %v4217 = vlaneseq
        %v4218 = vshrl.u32 %v4217, 7
        %v4219 = vsub.s32 0, %v4218
        %v4220 = vrot.slane %v3915, %v4219
        %v4221 = vlaneseq
        %v4222 = vshrl.u32 %v4221, 7
        %v4223 = vsub.s32 0, %v4222
        %v4224 = vrot.slane %v3917, %v4223
        %v4225 = vlaneseq
        %v4226 = vshrl.u32 %v4225, 7
        %v4227 = vsub.s32 0, %v4226
        %v4228 = vrot.slane %v3900, %v4227
        %v4229 = vlaneseq
        %v4230 = vshrl.u32 %v4229, 7
        %v4231 = vsub.s32 0, %v4230
        %v4232 = vrot.slane %v3914, %v4231
        %v4233 = vlaneseq
        %v4234 = vshrl.u32 %v4233, 7
        %v4235 = vsub.s32 0, %v4234
        %v4236 = vrot.slane %v3916, %v4235
        %v4237 = vlaneseq
        %v4238 = vshrl.u32 %v4237, 7
        %v4239 = vsub.s32 0, %v4238
        %v4240 = vrot.slane %v3918, %v4239
        %v4241 = vlaneseq
        %v4242 = vshrl.u32 %v4241, 7
        %v4243 = vsub.s32 0, %v4242
        %v4244 = vrot.slane %v3942, %v4243
        %v4245 = vlaneseq
        %v4246 = vshrl.u32 %v4245, 7
        %v4247 = vsub.s32 0, %v4246
        %v4248 = vrot.slane %v3956, %v4247
        %v4249 = vlaneseq
        %v4250 = vshrl.u32 %v4249, 7
        %v4251 = vsub.s32 0, %v4250
        %v4252 = vrot.slane %v3964, %v4251
        %v4253 = vlaneseq
        %v4254 = vshrl.u32 %v4253, 7
        %v4255 = vsub.s32 0, %v4254
        %v4256 = vrot.slane %v3966, %v4255
        %v4257 = vlaneseq
        %v4258 = vshrl.u32 %v4257, 7
        %v4259 = vsub.s32 0, %v4258
        %v4260 = vrot.slane %v3949, %v4259
        %v4261 = vlaneseq
        %v4262 = vshrl.u32 %v4261, 7
        %v4263 = vsub.s32 0, %v4262
        %v4264 = vrot.slane %v3963, %v4263
        %v4265 = vlaneseq
        %v4266 = vshrl.u32 %v4265, 7
        %v4267 = vsub.s32 0, %v4266
        %v4268 = vrot.slane %v3965, %v4267
        %v4269 = vlaneseq
        %v4270 = vshrl.u32 %v4269, 7
        %v4271 = vsub.s32 0, %v4270
        %v4272 = vrot.slane %v3967, %v4271
        %v4273 = vlaneseq
        %v4274 = vshrl.u32 %v4273, 7
        %v4275 = vsub.s32 0, %v4274
        %v4276 = vrot.slane %v3991, %v4275
        %v4277 = vlaneseq
        %v4278 = vshrl.u32 %v4277, 7
        %v4279 = vsub.s32 0, %v4278
        %v4280 = vrot.slane %v4005, %v4279
        %v4281 = vlaneseq
        %v4282 = vshrl.u32 %v4281, 7
        %v4283 = vsub.s32 0, %v4282
        %v4284 = vrot.slane %v4013, %v4283
        %v4285 = vlaneseq
        %v4286 = vshrl.u32 %v4285, 7
        %v4287 = vsub.s32 0, %v4286
        %v4288 = vrot.slane %v4015, %v4287
        %v4289 = vlaneseq
        %v4290 = vshrl.u32 %v4289, 7
        %v4291 = vsub.s32 0, %v4290
        %v4292 = vrot.slane %v3998, %v4291
        %v4293 = vlaneseq
        %v4294 = vshrl.u32 %v4293, 7
        %v4295 = vsub.s32 0, %v4294
        %v4296 = vrot.slane %v4012, %v4295
        %v4297 = vlaneseq
        %v4298 = vshrl.u32 %v4297, 7
        %v4299 = vsub.s32 0, %v4298
        %v4300 = vrot.slane %v4014, %v4299
        %v4301 = vlaneseq
        %v4302 = vshrl.u32 %v4301, 7
        %v4303 = vsub.s32 0, %v4302
        %v4304 = vrot.slane %v4016, %v4303
        %4305 = vrot.lane.b32.xlu0 %v4116, 112
        %v4306 = vpop.permute.xlu0 %4305
        %4307 = vrot.lane.b32.xlu0 %v4120, 112
        %v4308 = vpop.permute.xlu0 %4307
        %4309 = vrot.lane.b32.xlu0 %v4124, 112
        %v4310 = vpop.permute.xlu0 %4309
        %4311 = vrot.lane.b32.xlu0 %v4128, 112
        %v4312 = vpop.permute.xlu0 %4311
        %4313 = vrot.lane.b32.xlu0 %v4132, 112
        %v4314 = vpop.permute.xlu0 %4313
        %4315 = vrot.lane.b32.xlu0 %v4136, 112
        %v4316 = vpop.permute.xlu0 %4315
        %4317 = vrot.lane.b32.xlu0 %v4140, 112
        %v4318 = vpop.permute.xlu0 %4317
        %4319 = vrot.lane.b32.xlu0 %v4144, 112
        %v4320 = vpop.permute.xlu0 %4319
        %4321 = vrot.lane.b32.xlu0 %v4148, 112
        %v4322 = vpop.permute.xlu0 %4321
        %4323 = vrot.lane.b32.xlu0 %v4152, 112
        %v4324 = vpop.permute.xlu0 %4323
        %4325 = vrot.lane.b32.xlu0 %v4156, 112
        %v4326 = vpop.permute.xlu0 %4325
        %4327 = vrot.lane.b32.xlu0 %v4160, 112
        %v4328 = vpop.permute.xlu0 %4327
        %4329 = vrot.lane.b32.xlu0 %v4164, 112
        %v4330 = vpop.permute.xlu0 %4329
        %4331 = vrot.lane.b32.xlu0 %v4168, 112
        %v4332 = vpop.permute.xlu0 %4331
        %4333 = vrot.lane.b32.xlu0 %v4172, 112
        %v4334 = vpop.permute.xlu0 %4333
        %4335 = vrot.lane.b32.xlu0 %v4176, 112
        %v4336 = vpop.permute.xlu0 %4335
        %4337 = vrot.lane.b32.xlu0 %v4180, 112
        %v4338 = vpop.permute.xlu0 %4337
        %4339 = vrot.lane.b32.xlu0 %v4184, 112
        %v4340 = vpop.permute.xlu0 %4339
        %4341 = vrot.lane.b32.xlu0 %v4188, 112
        %v4342 = vpop.permute.xlu0 %4341
        %4343 = vrot.lane.b32.xlu0 %v4192, 112
        %v4344 = vpop.permute.xlu0 %4343
        %4345 = vrot.lane.b32.xlu0 %v4196, 112
        %v4346 = vpop.permute.xlu0 %4345
        %4347 = vrot.lane.b32.xlu0 %v4200, 112
        %v4348 = vpop.permute.xlu0 %4347
        %4349 = vrot.lane.b32.xlu0 %v4204, 112
        %v4350 = vpop.permute.xlu0 %4349
        %4351 = vrot.lane.b32.xlu0 %v4208, 112
        %v4352 = vpop.permute.xlu0 %4351
        %4353 = vrot.lane.b32.xlu0 %v4212, 112
        %v4354 = vpop.permute.xlu0 %4353
        %4355 = vrot.lane.b32.xlu0 %v4216, 112
        %v4356 = vpop.permute.xlu0 %4355
        %4357 = vrot.lane.b32.xlu0 %v4220, 112
        %v4358 = vpop.permute.xlu0 %4357
        %4359 = vrot.lane.b32.xlu0 %v4224, 112
        %v4360 = vpop.permute.xlu0 %4359
        %4361 = vrot.lane.b32.xlu0 %v4228, 112
        %v4362 = vpop.permute.xlu0 %4361
        %4363 = vrot.lane.b32.xlu0 %v4232, 112
        %v4364 = vpop.permute.xlu0 %4363
        %4365 = vrot.lane.b32.xlu0 %v4236, 112
        %v4366 = vpop.permute.xlu0 %4365
        %4367 = vrot.lane.b32.xlu0 %v4240, 112
        %v4368 = vpop.permute.xlu0 %4367
        %4369 = vrot.lane.b32.xlu0 %v4244, 112
        %v4370 = vpop.permute.xlu0 %4369
        %4371 = vrot.lane.b32.xlu0 %v4248, 112
        %v4372 = vpop.permute.xlu0 %4371
        %4373 = vrot.lane.b32.xlu0 %v4252, 112
        %v4374 = vpop.permute.xlu0 %4373
        %4375 = vrot.lane.b32.xlu0 %v4256, 112
        %v4376 = vpop.permute.xlu0 %4375
        %4377 = vrot.lane.b32.xlu0 %v4260, 112
        %v4378 = vpop.permute.xlu0 %4377
        %4379 = vrot.lane.b32.xlu0 %v4264, 112
        %v4380 = vpop.permute.xlu0 %4379
        %4381 = vrot.lane.b32.xlu0 %v4268, 112
        %v4382 = vpop.permute.xlu0 %4381
        %4383 = vrot.lane.b32.xlu0 %v4272, 112
        %v4384 = vpop.permute.xlu0 %4383
        %4385 = vrot.lane.b32.xlu0 %v4276, 112
        %v4386 = vpop.permute.xlu0 %4385
        %4387 = vrot.lane.b32.xlu0 %v4280, 112
        %v4388 = vpop.permute.xlu0 %4387
        %4389 = vrot.lane.b32.xlu0 %v4284, 112
        %v4390 = vpop.permute.xlu0 %4389
        %4391 = vrot.lane.b32.xlu0 %v4288, 112
        %v4392 = vpop.permute.xlu0 %4391
        %4393 = vrot.lane.b32.xlu0 %v4292, 112
        %v4394 = vpop.permute.xlu0 %4393
        %4395 = vrot.lane.b32.xlu0 %v4296, 112
        %v4396 = vpop.permute.xlu0 %4395
        %4397 = vrot.lane.b32.xlu0 %v4300, 112
        %v4398 = vpop.permute.xlu0 %4397
        %4399 = vrot.lane.b32.xlu0 %v4304, 112
        %v4400 = vpop.permute.xlu0 %4399
        %4449 = vst.msk [vmem:[%s194 + $0x9] sm:$0x1] %vm2132, %v4306
        %4450 = vst.msk [vmem:[%s194 + $0x19] sm:$0x1] %vm2132, %v4308
        %4451 = vst.msk [vmem:[%s194 + $0x29] sm:$0x1] %vm2132, %v4310
        %4452 = vst.msk [vmem:[%s194 + $0x39] sm:$0x1] %vm2132, %v4312
        %4453 = vst.msk [vmem:[%s194 + $0x49] sm:$0x1] %vm2132, %v4314
        %4454 = vst.msk [vmem:[%s194 + $0x59] sm:$0x1] %vm2132, %v4316
        %4455 = vst.msk [vmem:[%s194 + $0x69] sm:$0x1] %vm2132, %v4318
        %4456 = vst.msk [vmem:[%s194 + $0x79] sm:$0x1] %vm2132, %v4320
        %4457 = vst.msk [vmem:[%s194 + $0x89] sm:$0x1] %vm2132, %v4322
        %4458 = vst.msk [vmem:[%s194 + $0x99] sm:$0x1] %vm2132, %v4324
        %4459 = vst.msk [vmem:[%s194 + $0xa9] sm:$0x1] %vm2132, %v4326
        %4460 = vst.msk [vmem:[%s194 + $0xb9] sm:$0x1] %vm2132, %v4328
        %4461 = vst.msk [vmem:[%s194 + $0xc9] sm:$0x1] %vm2132, %v4330
        %4462 = vst.msk [vmem:[%s194 + $0xd9] sm:$0x1] %vm2132, %v4332
        %4463 = vst.msk [vmem:[%s194 + $0xe9] sm:$0x1] %vm2132, %v4334
        %4464 = vst.msk [vmem:[%s194 + $0xf9] sm:$0x1] %vm2132, %v4336
        %4465 = vst.msk [vmem:[%s194 + $0x109] sm:$0x1] %vm2132, %v4338
        %4466 = vst.msk [vmem:[%s194 + $0x119] sm:$0x1] %vm2132, %v4340
        %4467 = vst.msk [vmem:[%s194 + $0x129] sm:$0x1] %vm2132, %v4342
        %4468 = vst.msk [vmem:[%s194 + $0x139] sm:$0x1] %vm2132, %v4344
        %4469 = vst.msk [vmem:[%s194 + $0x149] sm:$0x1] %vm2132, %v4346
        %4470 = vst.msk [vmem:[%s194 + $0x159] sm:$0x1] %vm2132, %v4348
        %4471 = vst.msk [vmem:[%s194 + $0x169] sm:$0x1] %vm2132, %v4350
        %4472 = vst.msk [vmem:[%s194 + $0x179] sm:$0x1] %vm2132, %v4352
        %4473 = vst.msk [vmem:[%s194 + $0x189] sm:$0x1] %vm2132, %v4354
        %4474 = vst.msk [vmem:[%s194 + $0x199] sm:$0x1] %vm2132, %v4356
        %4475 = vst.msk [vmem:[%s194 + $0x1a9] sm:$0x1] %vm2132, %v4358
        %4476 = vst.msk [vmem:[%s194 + $0x1b9] sm:$0x1] %vm2132, %v4360
        %4477 = vst.msk [vmem:[%s194 + $0x1c9] sm:$0x1] %vm2132, %v4362
        %4478 = vst.msk [vmem:[%s194 + $0x1d9] sm:$0x1] %vm2132, %v4364
        %4479 = vst.msk [vmem:[%s194 + $0x1e9] sm:$0x1] %vm2132, %v4366
        %4480 = vst.msk [vmem:[%s194 + $0x1f9] sm:$0x1] %vm2132, %v4368
        %4481 = vst.msk [vmem:[%s194 + $0x209] sm:$0x1] %vm2132, %v4370
        %4482 = vst.msk [vmem:[%s194 + $0x219] sm:$0x1] %vm2132, %v4372
        %4483 = vst.msk [vmem:[%s194 + $0x229] sm:$0x1] %vm2132, %v4374
        %4484 = vst.msk [vmem:[%s194 + $0x239] sm:$0x1] %vm2132, %v4376
        %4485 = vst.msk [vmem:[%s194 + $0x249] sm:$0x1] %vm2132, %v4378
        %4486 = vst.msk [vmem:[%s194 + $0x259] sm:$0x1] %vm2132, %v4380
        %4487 = vst.msk [vmem:[%s194 + $0x269] sm:$0x1] %vm2132, %v4382
        %4488 = vst.msk [vmem:[%s194 + $0x279] sm:$0x1] %vm2132, %v4384
        %4489 = vst.msk [vmem:[%s194 + $0x289] sm:$0x1] %vm2132, %v4386
        %4490 = vst.msk [vmem:[%s194 + $0x299] sm:$0x1] %vm2132, %v4388
        %4491 = vst.msk [vmem:[%s194 + $0x2a9] sm:$0x1] %vm2132, %v4390
        %4492 = vst.msk [vmem:[%s194 + $0x2b9] sm:$0x1] %vm2132, %v4392
        %4493 = vst.msk [vmem:[%s194 + $0x2c9] sm:$0x1] %vm2132, %v4394
        %4494 = vst.msk [vmem:[%s194 + $0x2d9] sm:$0x1] %vm2132, %v4396
        %4495 = vst.msk [vmem:[%s194 + $0x2e9] sm:$0x1] %vm2132, %v4398
        %4496 = vst.msk [vmem:[%s194 + $0x2f9] sm:$0x1] %vm2132, %v4400
        %4497 = vrot.lane.b32.xlu0 %v4116, 96
        %v4498 = vpop.permute.xlu0 %4497
        %4499 = vrot.lane.b32.xlu0 %v4120, 96
        %v4500 = vpop.permute.xlu0 %4499
        %4501 = vrot.lane.b32.xlu0 %v4124, 96
        %v4502 = vpop.permute.xlu0 %4501
        %4503 = vrot.lane.b32.xlu0 %v4128, 96
        %v4504 = vpop.permute.xlu0 %4503
        %4505 = vrot.lane.b32.xlu0 %v4132, 96
        %v4506 = vpop.permute.xlu0 %4505
        %4507 = vrot.lane.b32.xlu0 %v4136, 96
        %v4508 = vpop.permute.xlu0 %4507
        %4509 = vrot.lane.b32.xlu0 %v4140, 96
        %v4510 = vpop.permute.xlu0 %4509
        %4511 = vrot.lane.b32.xlu0 %v4144, 96
        %v4512 = vpop.permute.xlu0 %4511
        %4513 = vrot.lane.b32.xlu0 %v4148, 96
        %v4514 = vpop.permute.xlu0 %4513
        %4515 = vrot.lane.b32.xlu0 %v4152, 96
        %v4516 = vpop.permute.xlu0 %4515
        %4517 = vrot.lane.b32.xlu0 %v4156, 96
        %v4518 = vpop.permute.xlu0 %4517
        %4519 = vrot.lane.b32.xlu0 %v4160, 96
        %v4520 = vpop.permute.xlu0 %4519
        %4521 = vrot.lane.b32.xlu0 %v4164, 96
        %v4522 = vpop.permute.xlu0 %4521
        %4523 = vrot.lane.b32.xlu0 %v4168, 96
        %v4524 = vpop.permute.xlu0 %4523
        %4525 = vrot.lane.b32.xlu0 %v4172, 96
        %v4526 = vpop.permute.xlu0 %4525
        %4527 = vrot.lane.b32.xlu0 %v4176, 96
        %v4528 = vpop.permute.xlu0 %4527
        %4529 = vrot.lane.b32.xlu0 %v4180, 96
        %v4530 = vpop.permute.xlu0 %4529
        %4531 = vrot.lane.b32.xlu0 %v4184, 96
        %v4532 = vpop.permute.xlu0 %4531
        %4533 = vrot.lane.b32.xlu0 %v4188, 96
        %v4534 = vpop.permute.xlu0 %4533
        %4535 = vrot.lane.b32.xlu0 %v4192, 96
        %v4536 = vpop.permute.xlu0 %4535
        %4537 = vrot.lane.b32.xlu0 %v4196, 96
        %v4538 = vpop.permute.xlu0 %4537
        %4539 = vrot.lane.b32.xlu0 %v4200, 96
        %v4540 = vpop.permute.xlu0 %4539
        %4541 = vrot.lane.b32.xlu0 %v4204, 96
        %v4542 = vpop.permute.xlu0 %4541
        %4543 = vrot.lane.b32.xlu0 %v4208, 96
        %v4544 = vpop.permute.xlu0 %4543
        %4545 = vrot.lane.b32.xlu0 %v4212, 96
        %v4546 = vpop.permute.xlu0 %4545
        %4547 = vrot.lane.b32.xlu0 %v4216, 96
        %v4548 = vpop.permute.xlu0 %4547
        %4549 = vrot.lane.b32.xlu0 %v4220, 96
        %v4550 = vpop.permute.xlu0 %4549
        %4551 = vrot.lane.b32.xlu0 %v4224, 96
        %v4552 = vpop.permute.xlu0 %4551
        %4553 = vrot.lane.b32.xlu0 %v4228, 96
        %v4554 = vpop.permute.xlu0 %4553
        %4555 = vrot.lane.b32.xlu0 %v4232, 96
        %v4556 = vpop.permute.xlu0 %4555
        %4557 = vrot.lane.b32.xlu0 %v4236, 96
        %v4558 = vpop.permute.xlu0 %4557
        %4559 = vrot.lane.b32.xlu0 %v4240, 96
        %v4560 = vpop.permute.xlu0 %4559
        %4561 = vrot.lane.b32.xlu0 %v4244, 96
        %v4562 = vpop.permute.xlu0 %4561
        %4563 = vrot.lane.b32.xlu0 %v4248, 96
        %v4564 = vpop.permute.xlu0 %4563
        %4565 = vrot.lane.b32.xlu0 %v4252, 96
        %v4566 = vpop.permute.xlu0 %4565
        %4567 = vrot.lane.b32.xlu0 %v4256, 96
        %v4568 = vpop.permute.xlu0 %4567
        %4569 = vrot.lane.b32.xlu0 %v4260, 96
        %v4570 = vpop.permute.xlu0 %4569
        %4571 = vrot.lane.b32.xlu0 %v4264, 96
        %v4572 = vpop.permute.xlu0 %4571
        %4573 = vrot.lane.b32.xlu0 %v4268, 96
        %v4574 = vpop.permute.xlu0 %4573
        %4575 = vrot.lane.b32.xlu0 %v4272, 96
        %v4576 = vpop.permute.xlu0 %4575
        %4577 = vrot.lane.b32.xlu0 %v4276, 96
        %v4578 = vpop.permute.xlu0 %4577
        %4579 = vrot.lane.b32.xlu0 %v4280, 96
        %v4580 = vpop.permute.xlu0 %4579
        %4581 = vrot.lane.b32.xlu0 %v4284, 96
        %v4582 = vpop.permute.xlu0 %4581
        %4583 = vrot.lane.b32.xlu0 %v4288, 96
        %v4584 = vpop.permute.xlu0 %4583
        %4585 = vrot.lane.b32.xlu0 %v4292, 96
        %v4586 = vpop.permute.xlu0 %4585
        %4587 = vrot.lane.b32.xlu0 %v4296, 96
        %v4588 = vpop.permute.xlu0 %4587
        %4589 = vrot.lane.b32.xlu0 %v4300, 96
        %v4590 = vpop.permute.xlu0 %4589
        %4591 = vrot.lane.b32.xlu0 %v4304, 96
        %v4592 = vpop.permute.xlu0 %4591
        %4641 = vst.msk [vmem:[%s194 + $0xa] sm:$0x1] %vm2132, %v4498
        %4642 = vst.msk [vmem:[%s194 + $0x1a] sm:$0x1] %vm2132, %v4500
        %4643 = vst.msk [vmem:[%s194 + $0x2a] sm:$0x1] %vm2132, %v4502
        %4644 = vst.msk [vmem:[%s194 + $0x3a] sm:$0x1] %vm2132, %v4504
        %4645 = vst.msk [vmem:[%s194 + $0x4a] sm:$0x1] %vm2132, %v4506
        %4646 = vst.msk [vmem:[%s194 + $0x5a] sm:$0x1] %vm2132, %v4508
        %4647 = vst.msk [vmem:[%s194 + $0x6a] sm:$0x1] %vm2132, %v4510
        %4648 = vst.msk [vmem:[%s194 + $0x7a] sm:$0x1] %vm2132, %v4512
        %4649 = vst.msk [vmem:[%s194 + $0x8a] sm:$0x1] %vm2132, %v4514
        %4650 = vst.msk [vmem:[%s194 + $0x9a] sm:$0x1] %vm2132, %v4516
        %4651 = vst.msk [vmem:[%s194 + $0xaa] sm:$0x1] %vm2132, %v4518
        %4652 = vst.msk [vmem:[%s194 + $0xba] sm:$0x1] %vm2132, %v4520
        %4653 = vst.msk [vmem:[%s194 + $0xca] sm:$0x1] %vm2132, %v4522
        %4654 = vst.msk [vmem:[%s194 + $0xda] sm:$0x1] %vm2132, %v4524
        %4655 = vst.msk [vmem:[%s194 + $0xea] sm:$0x1] %vm2132, %v4526
        %4656 = vst.msk [vmem:[%s194 + $0xfa] sm:$0x1] %vm2132, %v4528
        %4657 = vst.msk [vmem:[%s194 + $0x10a] sm:$0x1] %vm2132, %v4530
        %4658 = vst.msk [vmem:[%s194 + $0x11a] sm:$0x1] %vm2132, %v4532
        %4659 = vst.msk [vmem:[%s194 + $0x12a] sm:$0x1] %vm2132, %v4534
        %4660 = vst.msk [vmem:[%s194 + $0x13a] sm:$0x1] %vm2132, %v4536
        %4661 = vst.msk [vmem:[%s194 + $0x14a] sm:$0x1] %vm2132, %v4538
        %4662 = vst.msk [vmem:[%s194 + $0x15a] sm:$0x1] %vm2132, %v4540
        %4663 = vst.msk [vmem:[%s194 + $0x16a] sm:$0x1] %vm2132, %v4542
        %4664 = vst.msk [vmem:[%s194 + $0x17a] sm:$0x1] %vm2132, %v4544
        %4665 = vst.msk [vmem:[%s194 + $0x18a] sm:$0x1] %vm2132, %v4546
        %4666 = vst.msk [vmem:[%s194 + $0x19a] sm:$0x1] %vm2132, %v4548
        %4667 = vst.msk [vmem:[%s194 + $0x1aa] sm:$0x1] %vm2132, %v4550
        %4668 = vst.msk [vmem:[%s194 + $0x1ba] sm:$0x1] %vm2132, %v4552
        %4669 = vst.msk [vmem:[%s194 + $0x1ca] sm:$0x1] %vm2132, %v4554
        %4670 = vst.msk [vmem:[%s194 + $0x1da] sm:$0x1] %vm2132, %v4556
        %4671 = vst.msk [vmem:[%s194 + $0x1ea] sm:$0x1] %vm2132, %v4558
        %4672 = vst.msk [vmem:[%s194 + $0x1fa] sm:$0x1] %vm2132, %v4560
        %4673 = vst.msk [vmem:[%s194 + $0x20a] sm:$0x1] %vm2132, %v4562
        %4674 = vst.msk [vmem:[%s194 + $0x21a] sm:$0x1] %vm2132, %v4564
        %4675 = vst.msk [vmem:[%s194 + $0x22a] sm:$0x1] %vm2132, %v4566
        %4676 = vst.msk [vmem:[%s194 + $0x23a] sm:$0x1] %vm2132, %v4568
        %4677 = vst.msk [vmem:[%s194 + $0x24a] sm:$0x1] %vm2132, %v4570
        %4678 = vst.msk [vmem:[%s194 + $0x25a] sm:$0x1] %vm2132, %v4572
        %4679 = vst.msk [vmem:[%s194 + $0x26a] sm:$0x1] %vm2132, %v4574
        %4680 = vst.msk [vmem:[%s194 + $0x27a] sm:$0x1] %vm2132, %v4576
        %4681 = vst.msk [vmem:[%s194 + $0x28a] sm:$0x1] %vm2132, %v4578
        %4682 = vst.msk [vmem:[%s194 + $0x29a] sm:$0x1] %vm2132, %v4580
        %4683 = vst.msk [vmem:[%s194 + $0x2aa] sm:$0x1] %vm2132, %v4582
        %4684 = vst.msk [vmem:[%s194 + $0x2ba] sm:$0x1] %vm2132, %v4584
        %4685 = vst.msk [vmem:[%s194 + $0x2ca] sm:$0x1] %vm2132, %v4586
        %4686 = vst.msk [vmem:[%s194 + $0x2da] sm:$0x1] %vm2132, %v4588
        %4687 = vst.msk [vmem:[%s194 + $0x2ea] sm:$0x1] %vm2132, %v4590
        %4688 = vst.msk [vmem:[%s194 + $0x2fa] sm:$0x1] %vm2132, %v4592
        %4689 = vrot.lane.b32.xlu0 %v4116, 80
        %v4690 = vpop.permute.xlu0 %4689
        %4691 = vrot.lane.b32.xlu0 %v4120, 80
        %v4692 = vpop.permute.xlu0 %4691
        %4693 = vrot.lane.b32.xlu0 %v4124, 80
        %v4694 = vpop.permute.xlu0 %4693
        %4695 = vrot.lane.b32.xlu0 %v4128, 80
        %v4696 = vpop.permute.xlu0 %4695
        %4697 = vrot.lane.b32.xlu0 %v4132, 80
        %v4698 = vpop.permute.xlu0 %4697
        %4699 = vrot.lane.b32.xlu0 %v4136, 80
        %v4700 = vpop.permute.xlu0 %4699
        %4701 = vrot.lane.b32.xlu0 %v4140, 80
        %v4702 = vpop.permute.xlu0 %4701
        %4703 = vrot.lane.b32.xlu0 %v4144, 80
        %v4704 = vpop.permute.xlu0 %4703
        %4705 = vrot.lane.b32.xlu0 %v4148, 80
        %v4706 = vpop.permute.xlu0 %4705
        %4707 = vrot.lane.b32.xlu0 %v4152, 80
        %v4708 = vpop.permute.xlu0 %4707
        %4709 = vrot.lane.b32.xlu0 %v4156, 80
        %v4710 = vpop.permute.xlu0 %4709
        %4711 = vrot.lane.b32.xlu0 %v4160, 80
        %v4712 = vpop.permute.xlu0 %4711
        %4713 = vrot.lane.b32.xlu0 %v4164, 80
        %v4714 = vpop.permute.xlu0 %4713
        %4715 = vrot.lane.b32.xlu0 %v4168, 80
        %v4716 = vpop.permute.xlu0 %4715
        %4717 = vrot.lane.b32.xlu0 %v4172, 80
        %v4718 = vpop.permute.xlu0 %4717
        %4719 = vrot.lane.b32.xlu0 %v4176, 80
        %v4720 = vpop.permute.xlu0 %4719
        %4721 = vrot.lane.b32.xlu0 %v4180, 80
        %v4722 = vpop.permute.xlu0 %4721
        %4723 = vrot.lane.b32.xlu0 %v4184, 80
        %v4724 = vpop.permute.xlu0 %4723
        %4725 = vrot.lane.b32.xlu0 %v4188, 80
        %v4726 = vpop.permute.xlu0 %4725
        %4727 = vrot.lane.b32.xlu0 %v4192, 80
        %v4728 = vpop.permute.xlu0 %4727
        %4729 = vrot.lane.b32.xlu0 %v4196, 80
        %v4730 = vpop.permute.xlu0 %4729
        %4731 = vrot.lane.b32.xlu0 %v4200, 80
        %v4732 = vpop.permute.xlu0 %4731
        %4733 = vrot.lane.b32.xlu0 %v4204, 80
        %v4734 = vpop.permute.xlu0 %4733
        %4735 = vrot.lane.b32.xlu0 %v4208, 80
        %v4736 = vpop.permute.xlu0 %4735
        %4737 = vrot.lane.b32.xlu0 %v4212, 80
        %v4738 = vpop.permute.xlu0 %4737
        %4739 = vrot.lane.b32.xlu0 %v4216, 80
        %v4740 = vpop.permute.xlu0 %4739
        %4741 = vrot.lane.b32.xlu0 %v4220, 80
        %v4742 = vpop.permute.xlu0 %4741
        %4743 = vrot.lane.b32.xlu0 %v4224, 80
        %v4744 = vpop.permute.xlu0 %4743
        %4745 = vrot.lane.b32.xlu0 %v4228, 80
        %v4746 = vpop.permute.xlu0 %4745
        %4747 = vrot.lane.b32.xlu0 %v4232, 80
        %v4748 = vpop.permute.xlu0 %4747
        %4749 = vrot.lane.b32.xlu0 %v4236, 80
        %v4750 = vpop.permute.xlu0 %4749
        %4751 = vrot.lane.b32.xlu0 %v4240, 80
        %v4752 = vpop.permute.xlu0 %4751
        %4753 = vrot.lane.b32.xlu0 %v4244, 80
        %v4754 = vpop.permute.xlu0 %4753
        %4755 = vrot.lane.b32.xlu0 %v4248, 80
        %v4756 = vpop.permute.xlu0 %4755
        %4757 = vrot.lane.b32.xlu0 %v4252, 80
        %v4758 = vpop.permute.xlu0 %4757
        %4759 = vrot.lane.b32.xlu0 %v4256, 80
        %v4760 = vpop.permute.xlu0 %4759
        %4761 = vrot.lane.b32.xlu0 %v4260, 80
        %v4762 = vpop.permute.xlu0 %4761
        %4763 = vrot.lane.b32.xlu0 %v4264, 80
        %v4764 = vpop.permute.xlu0 %4763
        %4765 = vrot.lane.b32.xlu0 %v4268, 80
        %v4766 = vpop.permute.xlu0 %4765
        %4767 = vrot.lane.b32.xlu0 %v4272, 80
        %v4768 = vpop.permute.xlu0 %4767
        %4769 = vrot.lane.b32.xlu0 %v4276, 80
        %v4770 = vpop.permute.xlu0 %4769
        %4771 = vrot.lane.b32.xlu0 %v4280, 80
        %v4772 = vpop.permute.xlu0 %4771
        %4773 = vrot.lane.b32.xlu0 %v4284, 80
        %v4774 = vpop.permute.xlu0 %4773
        %4775 = vrot.lane.b32.xlu0 %v4288, 80
        %v4776 = vpop.permute.xlu0 %4775
        %4777 = vrot.lane.b32.xlu0 %v4292, 80
        %v4778 = vpop.permute.xlu0 %4777
        %4779 = vrot.lane.b32.xlu0 %v4296, 80
        %v4780 = vpop.permute.xlu0 %4779
        %4781 = vrot.lane.b32.xlu0 %v4300, 80
        %v4782 = vpop.permute.xlu0 %4781
        %4783 = vrot.lane.b32.xlu0 %v4304, 80
        %v4784 = vpop.permute.xlu0 %4783
        %4833 = vst.msk [vmem:[%s194 + $0xb] sm:$0x1] %vm2132, %v4690
        %4834 = vst.msk [vmem:[%s194 + $0x1b] sm:$0x1] %vm2132, %v4692
        %4835 = vst.msk [vmem:[%s194 + $0x2b] sm:$0x1] %vm2132, %v4694
        %4836 = vst.msk [vmem:[%s194 + $0x3b] sm:$0x1] %vm2132, %v4696
        %4837 = vst.msk [vmem:[%s194 + $0x4b] sm:$0x1] %vm2132, %v4698
        %4838 = vst.msk [vmem:[%s194 + $0x5b] sm:$0x1] %vm2132, %v4700
        %4839 = vst.msk [vmem:[%s194 + $0x6b] sm:$0x1] %vm2132, %v4702
        %4840 = vst.msk [vmem:[%s194 + $0x7b] sm:$0x1] %vm2132, %v4704
        %4841 = vst.msk [vmem:[%s194 + $0x8b] sm:$0x1] %vm2132, %v4706
        %4842 = vst.msk [vmem:[%s194 + $0x9b] sm:$0x1] %vm2132, %v4708
        %4843 = vst.msk [vmem:[%s194 + $0xab] sm:$0x1] %vm2132, %v4710
        %4844 = vst.msk [vmem:[%s194 + $0xbb] sm:$0x1] %vm2132, %v4712
        %4845 = vst.msk [vmem:[%s194 + $0xcb] sm:$0x1] %vm2132, %v4714
        %4846 = vst.msk [vmem:[%s194 + $0xdb] sm:$0x1] %vm2132, %v4716
        %4847 = vst.msk [vmem:[%s194 + $0xeb] sm:$0x1] %vm2132, %v4718
        %4848 = vst.msk [vmem:[%s194 + $0xfb] sm:$0x1] %vm2132, %v4720
        %4849 = vst.msk [vmem:[%s194 + $0x10b] sm:$0x1] %vm2132, %v4722
        %4850 = vst.msk [vmem:[%s194 + $0x11b] sm:$0x1] %vm2132, %v4724
        %4851 = vst.msk [vmem:[%s194 + $0x12b] sm:$0x1] %vm2132, %v4726
        %4852 = vst.msk [vmem:[%s194 + $0x13b] sm:$0x1] %vm2132, %v4728
        %4853 = vst.msk [vmem:[%s194 + $0x14b] sm:$0x1] %vm2132, %v4730
        %4854 = vst.msk [vmem:[%s194 + $0x15b] sm:$0x1] %vm2132, %v4732
        %4855 = vst.msk [vmem:[%s194 + $0x16b] sm:$0x1] %vm2132, %v4734
        %4856 = vst.msk [vmem:[%s194 + $0x17b] sm:$0x1] %vm2132, %v4736
        %4857 = vst.msk [vmem:[%s194 + $0x18b] sm:$0x1] %vm2132, %v4738
        %4858 = vst.msk [vmem:[%s194 + $0x19b] sm:$0x1] %vm2132, %v4740
        %4859 = vst.msk [vmem:[%s194 + $0x1ab] sm:$0x1] %vm2132, %v4742
        %4860 = vst.msk [vmem:[%s194 + $0x1bb] sm:$0x1] %vm2132, %v4744
        %4861 = vst.msk [vmem:[%s194 + $0x1cb] sm:$0x1] %vm2132, %v4746
        %4862 = vst.msk [vmem:[%s194 + $0x1db] sm:$0x1] %vm2132, %v4748
        %4863 = vst.msk [vmem:[%s194 + $0x1eb] sm:$0x1] %vm2132, %v4750
        %4864 = vst.msk [vmem:[%s194 + $0x1fb] sm:$0x1] %vm2132, %v4752
        %4865 = vst.msk [vmem:[%s194 + $0x20b] sm:$0x1] %vm2132, %v4754
        %4866 = vst.msk [vmem:[%s194 + $0x21b] sm:$0x1] %vm2132, %v4756
        %4867 = vst.msk [vmem:[%s194 + $0x22b] sm:$0x1] %vm2132, %v4758
        %4868 = vst.msk [vmem:[%s194 + $0x23b] sm:$0x1] %vm2132, %v4760
        %4869 = vst.msk [vmem:[%s194 + $0x24b] sm:$0x1] %vm2132, %v4762
        %4870 = vst.msk [vmem:[%s194 + $0x25b] sm:$0x1] %vm2132, %v4764
        %4871 = vst.msk [vmem:[%s194 + $0x26b] sm:$0x1] %vm2132, %v4766
        %4872 = vst.msk [vmem:[%s194 + $0x27b] sm:$0x1] %vm2132, %v4768
        %4873 = vst.msk [vmem:[%s194 + $0x28b] sm:$0x1] %vm2132, %v4770
        %4874 = vst.msk [vmem:[%s194 + $0x29b] sm:$0x1] %vm2132, %v4772
        %4875 = vst.msk [vmem:[%s194 + $0x2ab] sm:$0x1] %vm2132, %v4774
        %4876 = vst.msk [vmem:[%s194 + $0x2bb] sm:$0x1] %vm2132, %v4776
        %4877 = vst.msk [vmem:[%s194 + $0x2cb] sm:$0x1] %vm2132, %v4778
        %4878 = vst.msk [vmem:[%s194 + $0x2db] sm:$0x1] %vm2132, %v4780
        %4879 = vst.msk [vmem:[%s194 + $0x2eb] sm:$0x1] %vm2132, %v4782
        %4880 = vst.msk [vmem:[%s194 + $0x2fb] sm:$0x1] %vm2132, %v4784
        %4881 = vrot.lane.b32.xlu0 %v4116, 64
        %v4882 = vpop.permute.xlu0 %4881
        %4883 = vrot.lane.b32.xlu0 %v4120, 64
        %v4884 = vpop.permute.xlu0 %4883
        %4885 = vrot.lane.b32.xlu0 %v4124, 64
        %v4886 = vpop.permute.xlu0 %4885
        %4887 = vrot.lane.b32.xlu0 %v4128, 64
        %v4888 = vpop.permute.xlu0 %4887
        %4889 = vrot.lane.b32.xlu0 %v4132, 64
        %v4890 = vpop.permute.xlu0 %4889
        %4891 = vrot.lane.b32.xlu0 %v4136, 64
        %v4892 = vpop.permute.xlu0 %4891
        %4893 = vrot.lane.b32.xlu0 %v4140, 64
        %v4894 = vpop.permute.xlu0 %4893
        %4895 = vrot.lane.b32.xlu0 %v4144, 64
        %v4896 = vpop.permute.xlu0 %4895
        %4897 = vrot.lane.b32.xlu0 %v4148, 64
        %v4898 = vpop.permute.xlu0 %4897
        %4899 = vrot.lane.b32.xlu0 %v4152, 64
        %v4900 = vpop.permute.xlu0 %4899
        %4901 = vrot.lane.b32.xlu0 %v4156, 64
        %v4902 = vpop.permute.xlu0 %4901
        %4903 = vrot.lane.b32.xlu0 %v4160, 64
        %v4904 = vpop.permute.xlu0 %4903
        %4905 = vrot.lane.b32.xlu0 %v4164, 64
        %v4906 = vpop.permute.xlu0 %4905
        %4907 = vrot.lane.b32.xlu0 %v4168, 64
        %v4908 = vpop.permute.xlu0 %4907
        %4909 = vrot.lane.b32.xlu0 %v4172, 64
        %v4910 = vpop.permute.xlu0 %4909
        %4911 = vrot.lane.b32.xlu0 %v4176, 64
        %v4912 = vpop.permute.xlu0 %4911
        %4913 = vrot.lane.b32.xlu0 %v4180, 64
        %v4914 = vpop.permute.xlu0 %4913
        %4915 = vrot.lane.b32.xlu0 %v4184, 64
        %v4916 = vpop.permute.xlu0 %4915
        %4917 = vrot.lane.b32.xlu0 %v4188, 64
        %v4918 = vpop.permute.xlu0 %4917
        %4919 = vrot.lane.b32.xlu0 %v4192, 64
        %v4920 = vpop.permute.xlu0 %4919
        %4921 = vrot.lane.b32.xlu0 %v4196, 64
        %v4922 = vpop.permute.xlu0 %4921
        %4923 = vrot.lane.b32.xlu0 %v4200, 64
        %v4924 = vpop.permute.xlu0 %4923
        %4925 = vrot.lane.b32.xlu0 %v4204, 64
        %v4926 = vpop.permute.xlu0 %4925
        %4927 = vrot.lane.b32.xlu0 %v4208, 64
        %v4928 = vpop.permute.xlu0 %4927
        %4929 = vrot.lane.b32.xlu0 %v4212, 64
        %v4930 = vpop.permute.xlu0 %4929
        %4931 = vrot.lane.b32.xlu0 %v4216, 64
        %v4932 = vpop.permute.xlu0 %4931
        %4933 = vrot.lane.b32.xlu0 %v4220, 64
        %v4934 = vpop.permute.xlu0 %4933
        %4935 = vrot.lane.b32.xlu0 %v4224, 64
        %v4936 = vpop.permute.xlu0 %4935
        %4937 = vrot.lane.b32.xlu0 %v4228, 64
        %v4938 = vpop.permute.xlu0 %4937
        %4939 = vrot.lane.b32.xlu0 %v4232, 64
        %v4940 = vpop.permute.xlu0 %4939
        %4941 = vrot.lane.b32.xlu0 %v4236, 64
        %v4942 = vpop.permute.xlu0 %4941
        %4943 = vrot.lane.b32.xlu0 %v4240, 64
        %v4944 = vpop.permute.xlu0 %4943
        %4945 = vrot.lane.b32.xlu0 %v4244, 64
        %v4946 = vpop.permute.xlu0 %4945
        %4947 = vrot.lane.b32.xlu0 %v4248, 64
        %v4948 = vpop.permute.xlu0 %4947
        %4949 = vrot.lane.b32.xlu0 %v4252, 64
        %v4950 = vpop.permute.xlu0 %4949
        %4951 = vrot.lane.b32.xlu0 %v4256, 64
        %v4952 = vpop.permute.xlu0 %4951
        %4953 = vrot.lane.b32.xlu0 %v4260, 64
        %v4954 = vpop.permute.xlu0 %4953
        %4955 = vrot.lane.b32.xlu0 %v4264, 64
        %v4956 = vpop.permute.xlu0 %4955
        %4957 = vrot.lane.b32.xlu0 %v4268, 64
        %v4958 = vpop.permute.xlu0 %4957
        %4959 = vrot.lane.b32.xlu0 %v4272, 64
        %v4960 = vpop.permute.xlu0 %4959
        %4961 = vrot.lane.b32.xlu0 %v4276, 64
        %v4962 = vpop.permute.xlu0 %4961
        %4963 = vrot.lane.b32.xlu0 %v4280, 64
        %v4964 = vpop.permute.xlu0 %4963
        %4965 = vrot.lane.b32.xlu0 %v4284, 64
        %v4966 = vpop.permute.xlu0 %4965
        %4967 = vrot.lane.b32.xlu0 %v4288, 64
        %v4968 = vpop.permute.xlu0 %4967
        %4969 = vrot.lane.b32.xlu0 %v4292, 64
        %v4970 = vpop.permute.xlu0 %4969
        %4971 = vrot.lane.b32.xlu0 %v4296, 64
        %v4972 = vpop.permute.xlu0 %4971
        %4973 = vrot.lane.b32.xlu0 %v4300, 64
        %v4974 = vpop.permute.xlu0 %4973
        %4975 = vrot.lane.b32.xlu0 %v4304, 64
        %v4976 = vpop.permute.xlu0 %4975
        %5025 = vst.msk [vmem:[%s194 + $0xc] sm:$0x1] %vm2132, %v4882
        %5026 = vst.msk [vmem:[%s194 + $0x1c] sm:$0x1] %vm2132, %v4884
        %5027 = vst.msk [vmem:[%s194 + $0x2c] sm:$0x1] %vm2132, %v4886
        %5028 = vst.msk [vmem:[%s194 + $0x3c] sm:$0x1] %vm2132, %v4888
        %5029 = vst.msk [vmem:[%s194 + $0x4c] sm:$0x1] %vm2132, %v4890
        %5030 = vst.msk [vmem:[%s194 + $0x5c] sm:$0x1] %vm2132, %v4892
        %5031 = vst.msk [vmem:[%s194 + $0x6c] sm:$0x1] %vm2132, %v4894
        %5032 = vst.msk [vmem:[%s194 + $0x7c] sm:$0x1] %vm2132, %v4896
        %5033 = vst.msk [vmem:[%s194 + $0x8c] sm:$0x1] %vm2132, %v4898
        %5034 = vst.msk [vmem:[%s194 + $0x9c] sm:$0x1] %vm2132, %v4900
        %5035 = vst.msk [vmem:[%s194 + $0xac] sm:$0x1] %vm2132, %v4902
        %5036 = vst.msk [vmem:[%s194 + $0xbc] sm:$0x1] %vm2132, %v4904
        %5037 = vst.msk [vmem:[%s194 + $0xcc] sm:$0x1] %vm2132, %v4906
        %5038 = vst.msk [vmem:[%s194 + $0xdc] sm:$0x1] %vm2132, %v4908
        %5039 = vst.msk [vmem:[%s194 + $0xec] sm:$0x1] %vm2132, %v4910
        %5040 = vst.msk [vmem:[%s194 + $0xfc] sm:$0x1] %vm2132, %v4912
        %5041 = vst.msk [vmem:[%s194 + $0x10c] sm:$0x1] %vm2132, %v4914
        %5042 = vst.msk [vmem:[%s194 + $0x11c] sm:$0x1] %vm2132, %v4916
        %5043 = vst.msk [vmem:[%s194 + $0x12c] sm:$0x1] %vm2132, %v4918
        %5044 = vst.msk [vmem:[%s194 + $0x13c] sm:$0x1] %vm2132, %v4920
        %5045 = vst.msk [vmem:[%s194 + $0x14c] sm:$0x1] %vm2132, %v4922
        %5046 = vst.msk [vmem:[%s194 + $0x15c] sm:$0x1] %vm2132, %v4924
        %5047 = vst.msk [vmem:[%s194 + $0x16c] sm:$0x1] %vm2132, %v4926
        %5048 = vst.msk [vmem:[%s194 + $0x17c] sm:$0x1] %vm2132, %v4928
        %5049 = vst.msk [vmem:[%s194 + $0x18c] sm:$0x1] %vm2132, %v4930
        %5050 = vst.msk [vmem:[%s194 + $0x19c] sm:$0x1] %vm2132, %v4932
        %5051 = vst.msk [vmem:[%s194 + $0x1ac] sm:$0x1] %vm2132, %v4934
        %5052 = vst.msk [vmem:[%s194 + $0x1bc] sm:$0x1] %vm2132, %v4936
        %5053 = vst.msk [vmem:[%s194 + $0x1cc] sm:$0x1] %vm2132, %v4938
        %5054 = vst.msk [vmem:[%s194 + $0x1dc] sm:$0x1] %vm2132, %v4940
        %5055 = vst.msk [vmem:[%s194 + $0x1ec] sm:$0x1] %vm2132, %v4942
        %5056 = vst.msk [vmem:[%s194 + $0x1fc] sm:$0x1] %vm2132, %v4944
        %5057 = vst.msk [vmem:[%s194 + $0x20c] sm:$0x1] %vm2132, %v4946
        %5058 = vst.msk [vmem:[%s194 + $0x21c] sm:$0x1] %vm2132, %v4948
        %5059 = vst.msk [vmem:[%s194 + $0x22c] sm:$0x1] %vm2132, %v4950
        %5060 = vst.msk [vmem:[%s194 + $0x23c] sm:$0x1] %vm2132, %v4952
        %5061 = vst.msk [vmem:[%s194 + $0x24c] sm:$0x1] %vm2132, %v4954
        %5062 = vst.msk [vmem:[%s194 + $0x25c] sm:$0x1] %vm2132, %v4956
        %5063 = vst.msk [vmem:[%s194 + $0x26c] sm:$0x1] %vm2132, %v4958
        %5064 = vst.msk [vmem:[%s194 + $0x27c] sm:$0x1] %vm2132, %v4960
        %5065 = vst.msk [vmem:[%s194 + $0x28c] sm:$0x1] %vm2132, %v4962
        %5066 = vst.msk [vmem:[%s194 + $0x29c] sm:$0x1] %vm2132, %v4964
        %5067 = vst.msk [vmem:[%s194 + $0x2ac] sm:$0x1] %vm2132, %v4966
        %5068 = vst.msk [vmem:[%s194 + $0x2bc] sm:$0x1] %vm2132, %v4968
        %5069 = vst.msk [vmem:[%s194 + $0x2cc] sm:$0x1] %vm2132, %v4970
        %5070 = vst.msk [vmem:[%s194 + $0x2dc] sm:$0x1] %vm2132, %v4972
        %5071 = vst.msk [vmem:[%s194 + $0x2ec] sm:$0x1] %vm2132, %v4974
        %5072 = vst.msk [vmem:[%s194 + $0x2fc] sm:$0x1] %vm2132, %v4976
        %5073 = vrot.lane.b32.xlu0 %v4116, 48
        %v5074 = vpop.permute.xlu0 %5073
        %5075 = vrot.lane.b32.xlu0 %v4120, 48
        %v5076 = vpop.permute.xlu0 %5075
        %5077 = vrot.lane.b32.xlu0 %v4124, 48
        %v5078 = vpop.permute.xlu0 %5077
        %5079 = vrot.lane.b32.xlu0 %v4128, 48
        %v5080 = vpop.permute.xlu0 %5079
        %5081 = vrot.lane.b32.xlu0 %v4132, 48
        %v5082 = vpop.permute.xlu0 %5081
        %5083 = vrot.lane.b32.xlu0 %v4136, 48
        %v5084 = vpop.permute.xlu0 %5083
        %5085 = vrot.lane.b32.xlu0 %v4140, 48
        %v5086 = vpop.permute.xlu0 %5085
        %5087 = vrot.lane.b32.xlu0 %v4144, 48
        %v5088 = vpop.permute.xlu0 %5087
        %5089 = vrot.lane.b32.xlu0 %v4148, 48
        %v5090 = vpop.permute.xlu0 %5089
        %5091 = vrot.lane.b32.xlu0 %v4152, 48
        %v5092 = vpop.permute.xlu0 %5091
        %5093 = vrot.lane.b32.xlu0 %v4156, 48
        %v5094 = vpop.permute.xlu0 %5093
        %5095 = vrot.lane.b32.xlu0 %v4160, 48
        %v5096 = vpop.permute.xlu0 %5095
        %5097 = vrot.lane.b32.xlu0 %v4164, 48
        %v5098 = vpop.permute.xlu0 %5097
        %5099 = vrot.lane.b32.xlu0 %v4168, 48
        %v5100 = vpop.permute.xlu0 %5099
        %5101 = vrot.lane.b32.xlu0 %v4172, 48
        %v5102 = vpop.permute.xlu0 %5101
        %5103 = vrot.lane.b32.xlu0 %v4176, 48
        %v5104 = vpop.permute.xlu0 %5103
        %5105 = vrot.lane.b32.xlu0 %v4180, 48
        %v5106 = vpop.permute.xlu0 %5105
        %5107 = vrot.lane.b32.xlu0 %v4184, 48
        %v5108 = vpop.permute.xlu0 %5107
        %5109 = vrot.lane.b32.xlu0 %v4188, 48
        %v5110 = vpop.permute.xlu0 %5109
        %5111 = vrot.lane.b32.xlu0 %v4192, 48
        %v5112 = vpop.permute.xlu0 %5111
        %5113 = vrot.lane.b32.xlu0 %v4196, 48
        %v5114 = vpop.permute.xlu0 %5113
        %5115 = vrot.lane.b32.xlu0 %v4200, 48
        %v5116 = vpop.permute.xlu0 %5115
        %5117 = vrot.lane.b32.xlu0 %v4204, 48
        %v5118 = vpop.permute.xlu0 %5117
        %5119 = vrot.lane.b32.xlu0 %v4208, 48
        %v5120 = vpop.permute.xlu0 %5119
        %5121 = vrot.lane.b32.xlu0 %v4212, 48
        %v5122 = vpop.permute.xlu0 %5121
        %5123 = vrot.lane.b32.xlu0 %v4216, 48
        %v5124 = vpop.permute.xlu0 %5123
        %5125 = vrot.lane.b32.xlu0 %v4220, 48
        %v5126 = vpop.permute.xlu0 %5125
        %5127 = vrot.lane.b32.xlu0 %v4224, 48
        %v5128 = vpop.permute.xlu0 %5127
        %5129 = vrot.lane.b32.xlu0 %v4228, 48
        %v5130 = vpop.permute.xlu0 %5129
        %5131 = vrot.lane.b32.xlu0 %v4232, 48
        %v5132 = vpop.permute.xlu0 %5131
        %5133 = vrot.lane.b32.xlu0 %v4236, 48
        %v5134 = vpop.permute.xlu0 %5133
        %5135 = vrot.lane.b32.xlu0 %v4240, 48
        %v5136 = vpop.permute.xlu0 %5135
        %5137 = vrot.lane.b32.xlu0 %v4244, 48
        %v5138 = vpop.permute.xlu0 %5137
        %5139 = vrot.lane.b32.xlu0 %v4248, 48
        %v5140 = vpop.permute.xlu0 %5139
        %5141 = vrot.lane.b32.xlu0 %v4252, 48
        %v5142 = vpop.permute.xlu0 %5141
        %5143 = vrot.lane.b32.xlu0 %v4256, 48
        %v5144 = vpop.permute.xlu0 %5143
        %5145 = vrot.lane.b32.xlu0 %v4260, 48
        %v5146 = vpop.permute.xlu0 %5145
        %5147 = vrot.lane.b32.xlu0 %v4264, 48
        %v5148 = vpop.permute.xlu0 %5147
        %5149 = vrot.lane.b32.xlu0 %v4268, 48
        %v5150 = vpop.permute.xlu0 %5149
        %5151 = vrot.lane.b32.xlu0 %v4272, 48
        %v5152 = vpop.permute.xlu0 %5151
        %5153 = vrot.lane.b32.xlu0 %v4276, 48
        %v5154 = vpop.permute.xlu0 %5153
        %5155 = vrot.lane.b32.xlu0 %v4280, 48
        %v5156 = vpop.permute.xlu0 %5155
        %5157 = vrot.lane.b32.xlu0 %v4284, 48
        %v5158 = vpop.permute.xlu0 %5157
        %5159 = vrot.lane.b32.xlu0 %v4288, 48
        %v5160 = vpop.permute.xlu0 %5159
        %5161 = vrot.lane.b32.xlu0 %v4292, 48
        %v5162 = vpop.permute.xlu0 %5161
        %5163 = vrot.lane.b32.xlu0 %v4296, 48
        %v5164 = vpop.permute.xlu0 %5163
        %5165 = vrot.lane.b32.xlu0 %v4300, 48
        %v5166 = vpop.permute.xlu0 %5165
        %5167 = vrot.lane.b32.xlu0 %v4304, 48
        %v5168 = vpop.permute.xlu0 %5167
        %5217 = vst.msk [vmem:[%s194 + $0xd] sm:$0x1] %vm2132, %v5074
        %5218 = vst.msk [vmem:[%s194 + $0x1d] sm:$0x1] %vm2132, %v5076
        %5219 = vst.msk [vmem:[%s194 + $0x2d] sm:$0x1] %vm2132, %v5078
        %5220 = vst.msk [vmem:[%s194 + $0x3d] sm:$0x1] %vm2132, %v5080
        %5221 = vst.msk [vmem:[%s194 + $0x4d] sm:$0x1] %vm2132, %v5082
        %5222 = vst.msk [vmem:[%s194 + $0x5d] sm:$0x1] %vm2132, %v5084
        %5223 = vst.msk [vmem:[%s194 + $0x6d] sm:$0x1] %vm2132, %v5086
        %5224 = vst.msk [vmem:[%s194 + $0x7d] sm:$0x1] %vm2132, %v5088
        %5225 = vst.msk [vmem:[%s194 + $0x8d] sm:$0x1] %vm2132, %v5090
        %5226 = vst.msk [vmem:[%s194 + $0x9d] sm:$0x1] %vm2132, %v5092
        %5227 = vst.msk [vmem:[%s194 + $0xad] sm:$0x1] %vm2132, %v5094
        %5228 = vst.msk [vmem:[%s194 + $0xbd] sm:$0x1] %vm2132, %v5096
        %5229 = vst.msk [vmem:[%s194 + $0xcd] sm:$0x1] %vm2132, %v5098
        %5230 = vst.msk [vmem:[%s194 + $0xdd] sm:$0x1] %vm2132, %v5100
        %5231 = vst.msk [vmem:[%s194 + $0xed] sm:$0x1] %vm2132, %v5102
        %5232 = vst.msk [vmem:[%s194 + $0xfd] sm:$0x1] %vm2132, %v5104
        %5233 = vst.msk [vmem:[%s194 + $0x10d] sm:$0x1] %vm2132, %v5106
        %5234 = vst.msk [vmem:[%s194 + $0x11d] sm:$0x1] %vm2132, %v5108
        %5235 = vst.msk [vmem:[%s194 + $0x12d] sm:$0x1] %vm2132, %v5110
        %5236 = vst.msk [vmem:[%s194 + $0x13d] sm:$0x1] %vm2132, %v5112
        %5237 = vst.msk [vmem:[%s194 + $0x14d] sm:$0x1] %vm2132, %v5114
        %5238 = vst.msk [vmem:[%s194 + $0x15d] sm:$0x1] %vm2132, %v5116
        %5239 = vst.msk [vmem:[%s194 + $0x16d] sm:$0x1] %vm2132, %v5118
        %5240 = vst.msk [vmem:[%s194 + $0x17d] sm:$0x1] %vm2132, %v5120
        %5241 = vst.msk [vmem:[%s194 + $0x18d] sm:$0x1] %vm2132, %v5122
        %5242 = vst.msk [vmem:[%s194 + $0x19d] sm:$0x1] %vm2132, %v5124
        %5243 = vst.msk [vmem:[%s194 + $0x1ad] sm:$0x1] %vm2132, %v5126
        %5244 = vst.msk [vmem:[%s194 + $0x1bd] sm:$0x1] %vm2132, %v5128
        %5245 = vst.msk [vmem:[%s194 + $0x1cd] sm:$0x1] %vm2132, %v5130
        %5246 = vst.msk [vmem:[%s194 + $0x1dd] sm:$0x1] %vm2132, %v5132
        %5247 = vst.msk [vmem:[%s194 + $0x1ed] sm:$0x1] %vm2132, %v5134
        %5248 = vst.msk [vmem:[%s194 + $0x1fd] sm:$0x1] %vm2132, %v5136
        %5249 = vst.msk [vmem:[%s194 + $0x20d] sm:$0x1] %vm2132, %v5138
        %5250 = vst.msk [vmem:[%s194 + $0x21d] sm:$0x1] %vm2132, %v5140
        %5251 = vst.msk [vmem:[%s194 + $0x22d] sm:$0x1] %vm2132, %v5142
        %5252 = vst.msk [vmem:[%s194 + $0x23d] sm:$0x1] %vm2132, %v5144
        %5253 = vst.msk [vmem:[%s194 + $0x24d] sm:$0x1] %vm2132, %v5146
        %5254 = vst.msk [vmem:[%s194 + $0x25d] sm:$0x1] %vm2132, %v5148
        %5255 = vst.msk [vmem:[%s194 + $0x26d] sm:$0x1] %vm2132, %v5150
        %5256 = vst.msk [vmem:[%s194 + $0x27d] sm:$0x1] %vm2132, %v5152
        %5257 = vst.msk [vmem:[%s194 + $0x28d] sm:$0x1] %vm2132, %v5154
        %5258 = vst.msk [vmem:[%s194 + $0x29d] sm:$0x1] %vm2132, %v5156
        %5259 = vst.msk [vmem:[%s194 + $0x2ad] sm:$0x1] %vm2132, %v5158
        %5260 = vst.msk [vmem:[%s194 + $0x2bd] sm:$0x1] %vm2132, %v5160
        %5261 = vst.msk [vmem:[%s194 + $0x2cd] sm:$0x1] %vm2132, %v5162
        %5262 = vst.msk [vmem:[%s194 + $0x2dd] sm:$0x1] %vm2132, %v5164
        %5263 = vst.msk [vmem:[%s194 + $0x2ed] sm:$0x1] %vm2132, %v5166
        %5264 = vst.msk [vmem:[%s194 + $0x2fd] sm:$0x1] %vm2132, %v5168
        %5265 = vrot.lane.b32.xlu0 %v4116, 32
        %v5266 = vpop.permute.xlu0 %5265
        %5267 = vrot.lane.b32.xlu0 %v4120, 32
        %v5268 = vpop.permute.xlu0 %5267
        %5269 = vrot.lane.b32.xlu0 %v4124, 32
        %v5270 = vpop.permute.xlu0 %5269
        %5271 = vrot.lane.b32.xlu0 %v4128, 32
        %v5272 = vpop.permute.xlu0 %5271
        %5273 = vrot.lane.b32.xlu0 %v4132, 32
        %v5274 = vpop.permute.xlu0 %5273
        %5275 = vrot.lane.b32.xlu0 %v4136, 32
        %v5276 = vpop.permute.xlu0 %5275
        %5277 = vrot.lane.b32.xlu0 %v4140, 32
        %v5278 = vpop.permute.xlu0 %5277
        %5279 = vrot.lane.b32.xlu0 %v4144, 32
        %v5280 = vpop.permute.xlu0 %5279
        %5281 = vrot.lane.b32.xlu0 %v4148, 32
        %v5282 = vpop.permute.xlu0 %5281
        %5283 = vrot.lane.b32.xlu0 %v4152, 32
        %v5284 = vpop.permute.xlu0 %5283
        %5285 = vrot.lane.b32.xlu0 %v4156, 32
        %v5286 = vpop.permute.xlu0 %5285
        %5287 = vrot.lane.b32.xlu0 %v4160, 32
        %v5288 = vpop.permute.xlu0 %5287
        %5289 = vrot.lane.b32.xlu0 %v4164, 32
        %v5290 = vpop.permute.xlu0 %5289
        %5291 = vrot.lane.b32.xlu0 %v4168, 32
        %v5292 = vpop.permute.xlu0 %5291
        %5293 = vrot.lane.b32.xlu0 %v4172, 32
        %v5294 = vpop.permute.xlu0 %5293
        %5295 = vrot.lane.b32.xlu0 %v4176, 32
        %v5296 = vpop.permute.xlu0 %5295
        %5297 = vrot.lane.b32.xlu0 %v4180, 32
        %v5298 = vpop.permute.xlu0 %5297
        %5299 = vrot.lane.b32.xlu0 %v4184, 32
        %v5300 = vpop.permute.xlu0 %5299
        %5301 = vrot.lane.b32.xlu0 %v4188, 32
        %v5302 = vpop.permute.xlu0 %5301
        %5303 = vrot.lane.b32.xlu0 %v4192, 32
        %v5304 = vpop.permute.xlu0 %5303
        %5305 = vrot.lane.b32.xlu0 %v4196, 32
        %v5306 = vpop.permute.xlu0 %5305
        %5307 = vrot.lane.b32.xlu0 %v4200, 32
        %v5308 = vpop.permute.xlu0 %5307
        %5309 = vrot.lane.b32.xlu0 %v4204, 32
        %v5310 = vpop.permute.xlu0 %5309
        %5311 = vrot.lane.b32.xlu0 %v4208, 32
        %v5312 = vpop.permute.xlu0 %5311
        %5313 = vrot.lane.b32.xlu0 %v4212, 32
        %v5314 = vpop.permute.xlu0 %5313
        %5315 = vrot.lane.b32.xlu0 %v4216, 32
        %v5316 = vpop.permute.xlu0 %5315
        %5317 = vrot.lane.b32.xlu0 %v4220, 32
        %v5318 = vpop.permute.xlu0 %5317
        %5319 = vrot.lane.b32.xlu0 %v4224, 32
        %v5320 = vpop.permute.xlu0 %5319
        %5321 = vrot.lane.b32.xlu0 %v4228, 32
        %v5322 = vpop.permute.xlu0 %5321
        %5323 = vrot.lane.b32.xlu0 %v4232, 32
        %v5324 = vpop.permute.xlu0 %5323
        %5325 = vrot.lane.b32.xlu0 %v4236, 32
        %v5326 = vpop.permute.xlu0 %5325
        %5327 = vrot.lane.b32.xlu0 %v4240, 32
        %v5328 = vpop.permute.xlu0 %5327
        %5329 = vrot.lane.b32.xlu0 %v4244, 32
        %v5330 = vpop.permute.xlu0 %5329
        %5331 = vrot.lane.b32.xlu0 %v4248, 32
        %v5332 = vpop.permute.xlu0 %5331
        %5333 = vrot.lane.b32.xlu0 %v4252, 32
        %v5334 = vpop.permute.xlu0 %5333
        %5335 = vrot.lane.b32.xlu0 %v4256, 32
        %v5336 = vpop.permute.xlu0 %5335
        %5337 = vrot.lane.b32.xlu0 %v4260, 32
        %v5338 = vpop.permute.xlu0 %5337
        %5339 = vrot.lane.b32.xlu0 %v4264, 32
        %v5340 = vpop.permute.xlu0 %5339
        %5341 = vrot.lane.b32.xlu0 %v4268, 32
        %v5342 = vpop.permute.xlu0 %5341
        %5343 = vrot.lane.b32.xlu0 %v4272, 32
        %v5344 = vpop.permute.xlu0 %5343
        %5345 = vrot.lane.b32.xlu0 %v4276, 32
        %v5346 = vpop.permute.xlu0 %5345
        %5347 = vrot.lane.b32.xlu0 %v4280, 32
        %v5348 = vpop.permute.xlu0 %5347
        %5349 = vrot.lane.b32.xlu0 %v4284, 32
        %v5350 = vpop.permute.xlu0 %5349
        %5351 = vrot.lane.b32.xlu0 %v4288, 32
        %v5352 = vpop.permute.xlu0 %5351
        %5353 = vrot.lane.b32.xlu0 %v4292, 32
        %v5354 = vpop.permute.xlu0 %5353
        %5355 = vrot.lane.b32.xlu0 %v4296, 32
        %v5356 = vpop.permute.xlu0 %5355
        %5357 = vrot.lane.b32.xlu0 %v4300, 32
        %v5358 = vpop.permute.xlu0 %5357
        %5359 = vrot.lane.b32.xlu0 %v4304, 32
        %v5360 = vpop.permute.xlu0 %5359
        %5409 = vst.msk [vmem:[%s194 + $0xe] sm:$0x1] %vm2132, %v5266
        %5410 = vst.msk [vmem:[%s194 + $0x1e] sm:$0x1] %vm2132, %v5268
        %5411 = vst.msk [vmem:[%s194 + $0x2e] sm:$0x1] %vm2132, %v5270
        %5412 = vst.msk [vmem:[%s194 + $0x3e] sm:$0x1] %vm2132, %v5272
        %5413 = vst.msk [vmem:[%s194 + $0x4e] sm:$0x1] %vm2132, %v5274
        %5414 = vst.msk [vmem:[%s194 + $0x5e] sm:$0x1] %vm2132, %v5276
        %5415 = vst.msk [vmem:[%s194 + $0x6e] sm:$0x1] %vm2132, %v5278
        %5416 = vst.msk [vmem:[%s194 + $0x7e] sm:$0x1] %vm2132, %v5280
        %5417 = vst.msk [vmem:[%s194 + $0x8e] sm:$0x1] %vm2132, %v5282
        %5418 = vst.msk [vmem:[%s194 + $0x9e] sm:$0x1] %vm2132, %v5284
        %5419 = vst.msk [vmem:[%s194 + $0xae] sm:$0x1] %vm2132, %v5286
        %5420 = vst.msk [vmem:[%s194 + $0xbe] sm:$0x1] %vm2132, %v5288
        %5421 = vst.msk [vmem:[%s194 + $0xce] sm:$0x1] %vm2132, %v5290
        %5422 = vst.msk [vmem:[%s194 + $0xde] sm:$0x1] %vm2132, %v5292
        %5423 = vst.msk [vmem:[%s194 + $0xee] sm:$0x1] %vm2132, %v5294
        %5424 = vst.msk [vmem:[%s194 + $0xfe] sm:$0x1] %vm2132, %v5296
        %5425 = vst.msk [vmem:[%s194 + $0x10e] sm:$0x1] %vm2132, %v5298
        %5426 = vst.msk [vmem:[%s194 + $0x11e] sm:$0x1] %vm2132, %v5300
        %5427 = vst.msk [vmem:[%s194 + $0x12e] sm:$0x1] %vm2132, %v5302
        %5428 = vst.msk [vmem:[%s194 + $0x13e] sm:$0x1] %vm2132, %v5304
        %5429 = vst.msk [vmem:[%s194 + $0x14e] sm:$0x1] %vm2132, %v5306
        %5430 = vst.msk [vmem:[%s194 + $0x15e] sm:$0x1] %vm2132, %v5308
        %5431 = vst.msk [vmem:[%s194 + $0x16e] sm:$0x1] %vm2132, %v5310
        %5432 = vst.msk [vmem:[%s194 + $0x17e] sm:$0x1] %vm2132, %v5312
        %5433 = vst.msk [vmem:[%s194 + $0x18e] sm:$0x1] %vm2132, %v5314
        %5434 = vst.msk [vmem:[%s194 + $0x19e] sm:$0x1] %vm2132, %v5316
        %5435 = vst.msk [vmem:[%s194 + $0x1ae] sm:$0x1] %vm2132, %v5318
        %5436 = vst.msk [vmem:[%s194 + $0x1be] sm:$0x1] %vm2132, %v5320
        %5437 = vst.msk [vmem:[%s194 + $0x1ce] sm:$0x1] %vm2132, %v5322
        %5438 = vst.msk [vmem:[%s194 + $0x1de] sm:$0x1] %vm2132, %v5324
        %5439 = vst.msk [vmem:[%s194 + $0x1ee] sm:$0x1] %vm2132, %v5326
        %5440 = vst.msk [vmem:[%s194 + $0x1fe] sm:$0x1] %vm2132, %v5328
        %5441 = vst.msk [vmem:[%s194 + $0x20e] sm:$0x1] %vm2132, %v5330
        %5442 = vst.msk [vmem:[%s194 + $0x21e] sm:$0x1] %vm2132, %v5332
        %5443 = vst.msk [vmem:[%s194 + $0x22e] sm:$0x1] %vm2132, %v5334
        %5444 = vst.msk [vmem:[%s194 + $0x23e] sm:$0x1] %vm2132, %v5336
        %5445 = vst.msk [vmem:[%s194 + $0x24e] sm:$0x1] %vm2132, %v5338
        %5446 = vst.msk [vmem:[%s194 + $0x25e] sm:$0x1] %vm2132, %v5340
        %5447 = vst.msk [vmem:[%s194 + $0x26e] sm:$0x1] %vm2132, %v5342
        %5448 = vst.msk [vmem:[%s194 + $0x27e] sm:$0x1] %vm2132, %v5344
        %5449 = vst.msk [vmem:[%s194 + $0x28e] sm:$0x1] %vm2132, %v5346
        %5450 = vst.msk [vmem:[%s194 + $0x29e] sm:$0x1] %vm2132, %v5348
        %5451 = vst.msk [vmem:[%s194 + $0x2ae] sm:$0x1] %vm2132, %v5350
        %5452 = vst.msk [vmem:[%s194 + $0x2be] sm:$0x1] %vm2132, %v5352
        %5453 = vst.msk [vmem:[%s194 + $0x2ce] sm:$0x1] %vm2132, %v5354
        %5454 = vst.msk [vmem:[%s194 + $0x2de] sm:$0x1] %vm2132, %v5356
        %5455 = vst.msk [vmem:[%s194 + $0x2ee] sm:$0x1] %vm2132, %v5358
        %5456 = vst.msk [vmem:[%s194 + $0x2fe] sm:$0x1] %vm2132, %v5360
        %5457 = vrot.lane.b32.xlu0 %v4116, 16
        %v5458 = vpop.permute.xlu0 %5457
        %5459 = vrot.lane.b32.xlu0 %v4120, 16
        %v5460 = vpop.permute.xlu0 %5459
        %5461 = vrot.lane.b32.xlu0 %v4124, 16
        %v5462 = vpop.permute.xlu0 %5461
        %5463 = vrot.lane.b32.xlu0 %v4128, 16
        %v5464 = vpop.permute.xlu0 %5463
        %5465 = vrot.lane.b32.xlu0 %v4132, 16
        %v5466 = vpop.permute.xlu0 %5465
        %5467 = vrot.lane.b32.xlu0 %v4136, 16
        %v5468 = vpop.permute.xlu0 %5467
        %5469 = vrot.lane.b32.xlu0 %v4140, 16
        %v5470 = vpop.permute.xlu0 %5469
        %5471 = vrot.lane.b32.xlu0 %v4144, 16
        %v5472 = vpop.permute.xlu0 %5471
        %5473 = vrot.lane.b32.xlu0 %v4148, 16
        %v5474 = vpop.permute.xlu0 %5473
        %5475 = vrot.lane.b32.xlu0 %v4152, 16
        %v5476 = vpop.permute.xlu0 %5475
        %5477 = vrot.lane.b32.xlu0 %v4156, 16
        %v5478 = vpop.permute.xlu0 %5477
        %5479 = vrot.lane.b32.xlu0 %v4160, 16
        %v5480 = vpop.permute.xlu0 %5479
        %5481 = vrot.lane.b32.xlu0 %v4164, 16
        %v5482 = vpop.permute.xlu0 %5481
        %5483 = vrot.lane.b32.xlu0 %v4168, 16
        %v5484 = vpop.permute.xlu0 %5483
        %5485 = vrot.lane.b32.xlu0 %v4172, 16
        %v5486 = vpop.permute.xlu0 %5485
        %5487 = vrot.lane.b32.xlu0 %v4176, 16
        %v5488 = vpop.permute.xlu0 %5487
        %5489 = vrot.lane.b32.xlu0 %v4180, 16
        %v5490 = vpop.permute.xlu0 %5489
        %5491 = vrot.lane.b32.xlu0 %v4184, 16
        %v5492 = vpop.permute.xlu0 %5491
        %5493 = vrot.lane.b32.xlu0 %v4188, 16
        %v5494 = vpop.permute.xlu0 %5493
        %5495 = vrot.lane.b32.xlu0 %v4192, 16
        %v5496 = vpop.permute.xlu0 %5495
        %5497 = vrot.lane.b32.xlu0 %v4196, 16
        %v5498 = vpop.permute.xlu0 %5497
        %5499 = vrot.lane.b32.xlu0 %v4200, 16
        %v5500 = vpop.permute.xlu0 %5499
        %5501 = vrot.lane.b32.xlu0 %v4204, 16
        %v5502 = vpop.permute.xlu0 %5501
        %5503 = vrot.lane.b32.xlu0 %v4208, 16
        %v5504 = vpop.permute.xlu0 %5503
        %5505 = vrot.lane.b32.xlu0 %v4212, 16
        %v5506 = vpop.permute.xlu0 %5505
        %5507 = vrot.lane.b32.xlu0 %v4216, 16
        %v5508 = vpop.permute.xlu0 %5507
        %5509 = vrot.lane.b32.xlu0 %v4220, 16
        %v5510 = vpop.permute.xlu0 %5509
        %5511 = vrot.lane.b32.xlu0 %v4224, 16
        %v5512 = vpop.permute.xlu0 %5511
        %5513 = vrot.lane.b32.xlu0 %v4228, 16
        %v5514 = vpop.permute.xlu0 %5513
        %5515 = vrot.lane.b32.xlu0 %v4232, 16
        %v5516 = vpop.permute.xlu0 %5515
        %5517 = vrot.lane.b32.xlu0 %v4236, 16
        %v5518 = vpop.permute.xlu0 %5517
        %5519 = vrot.lane.b32.xlu0 %v4240, 16
        %v5520 = vpop.permute.xlu0 %5519
        %5521 = vrot.lane.b32.xlu0 %v4244, 16
        %v5522 = vpop.permute.xlu0 %5521
        %5523 = vrot.lane.b32.xlu0 %v4248, 16
        %v5524 = vpop.permute.xlu0 %5523
        %5525 = vrot.lane.b32.xlu0 %v4252, 16
        %v5526 = vpop.permute.xlu0 %5525
        %5527 = vrot.lane.b32.xlu0 %v4256, 16
        %v5528 = vpop.permute.xlu0 %5527
        %5529 = vrot.lane.b32.xlu0 %v4260, 16
        %v5530 = vpop.permute.xlu0 %5529
        %5531 = vrot.lane.b32.xlu0 %v4264, 16
        %v5532 = vpop.permute.xlu0 %5531
        %5533 = vrot.lane.b32.xlu0 %v4268, 16
        %v5534 = vpop.permute.xlu0 %5533
        %5535 = vrot.lane.b32.xlu0 %v4272, 16
        %v5536 = vpop.permute.xlu0 %5535
        %5537 = vrot.lane.b32.xlu0 %v4276, 16
        %v5538 = vpop.permute.xlu0 %5537
        %5539 = vrot.lane.b32.xlu0 %v4280, 16
        %v5540 = vpop.permute.xlu0 %5539
        %5541 = vrot.lane.b32.xlu0 %v4284, 16
        %v5542 = vpop.permute.xlu0 %5541
        %5543 = vrot.lane.b32.xlu0 %v4288, 16
        %v5544 = vpop.permute.xlu0 %5543
        %5545 = vrot.lane.b32.xlu0 %v4292, 16
        %v5546 = vpop.permute.xlu0 %5545
        %5547 = vrot.lane.b32.xlu0 %v4296, 16
        %v5548 = vpop.permute.xlu0 %5547
        %5549 = vrot.lane.b32.xlu0 %v4300, 16
        %v5550 = vpop.permute.xlu0 %5549
        %5551 = vrot.lane.b32.xlu0 %v4304, 16
        %v5552 = vpop.permute.xlu0 %5551
        %5601 = vst.msk [vmem:[%s194 + $0xf] sm:$0x1] %vm2132, %v5458
        %5602 = vst.msk [vmem:[%s194 + $0x1f] sm:$0x1] %vm2132, %v5460
        %5603 = vst.msk [vmem:[%s194 + $0x2f] sm:$0x1] %vm2132, %v5462
        %5604 = vst.msk [vmem:[%s194 + $0x3f] sm:$0x1] %vm2132, %v5464
        %5605 = vst.msk [vmem:[%s194 + $0x4f] sm:$0x1] %vm2132, %v5466
        %5606 = vst.msk [vmem:[%s194 + $0x5f] sm:$0x1] %vm2132, %v5468
        %5607 = vst.msk [vmem:[%s194 + $0x6f] sm:$0x1] %vm2132, %v5470
        %5608 = vst.msk [vmem:[%s194 + $0x7f] sm:$0x1] %vm2132, %v5472
        %5609 = vst.msk [vmem:[%s194 + $0x8f] sm:$0x1] %vm2132, %v5474
        %5610 = vst.msk [vmem:[%s194 + $0x9f] sm:$0x1] %vm2132, %v5476
        %5611 = vst.msk [vmem:[%s194 + $0xaf] sm:$0x1] %vm2132, %v5478
        %5612 = vst.msk [vmem:[%s194 + $0xbf] sm:$0x1] %vm2132, %v5480
        %5613 = vst.msk [vmem:[%s194 + $0xcf] sm:$0x1] %vm2132, %v5482
        %5614 = vst.msk [vmem:[%s194 + $0xdf] sm:$0x1] %vm2132, %v5484
        %5615 = vst.msk [vmem:[%s194 + $0xef] sm:$0x1] %vm2132, %v5486
        %5616 = vst.msk [vmem:[%s194 + $0xff] sm:$0x1] %vm2132, %v5488
        %5617 = vst.msk [vmem:[%s194 + $0x10f] sm:$0x1] %vm2132, %v5490
        %5618 = vst.msk [vmem:[%s194 + $0x11f] sm:$0x1] %vm2132, %v5492
        %5619 = vst.msk [vmem:[%s194 + $0x12f] sm:$0x1] %vm2132, %v5494
        %5620 = vst.msk [vmem:[%s194 + $0x13f] sm:$0x1] %vm2132, %v5496
        %5621 = vst.msk [vmem:[%s194 + $0x14f] sm:$0x1] %vm2132, %v5498
        %5622 = vst.msk [vmem:[%s194 + $0x15f] sm:$0x1] %vm2132, %v5500
        %5623 = vst.msk [vmem:[%s194 + $0x16f] sm:$0x1] %vm2132, %v5502
        %5624 = vst.msk [vmem:[%s194 + $0x17f] sm:$0x1] %vm2132, %v5504
        %5625 = vst.msk [vmem:[%s194 + $0x18f] sm:$0x1] %vm2132, %v5506
        %5626 = vst.msk [vmem:[%s194 + $0x19f] sm:$0x1] %vm2132, %v5508
        %5627 = vst.msk [vmem:[%s194 + $0x1af] sm:$0x1] %vm2132, %v5510
        %5628 = vst.msk [vmem:[%s194 + $0x1bf] sm:$0x1] %vm2132, %v5512
        %5629 = vst.msk [vmem:[%s194 + $0x1cf] sm:$0x1] %vm2132, %v5514
        %5630 = vst.msk [vmem:[%s194 + $0x1df] sm:$0x1] %vm2132, %v5516
        %5631 = vst.msk [vmem:[%s194 + $0x1ef] sm:$0x1] %vm2132, %v5518
        %5632 = vst.msk [vmem:[%s194 + $0x1ff] sm:$0x1] %vm2132, %v5520
        %5633 = vst.msk [vmem:[%s194 + $0x20f] sm:$0x1] %vm2132, %v5522
        %5634 = vst.msk [vmem:[%s194 + $0x21f] sm:$0x1] %vm2132, %v5524
        %5635 = vst.msk [vmem:[%s194 + $0x22f] sm:$0x1] %vm2132, %v5526
        %5636 = vst.msk [vmem:[%s194 + $0x23f] sm:$0x1] %vm2132, %v5528
        %5637 = vst.msk [vmem:[%s194 + $0x24f] sm:$0x1] %vm2132, %v5530
        %5638 = vst.msk [vmem:[%s194 + $0x25f] sm:$0x1] %vm2132, %v5532
        %5639 = vst.msk [vmem:[%s194 + $0x26f] sm:$0x1] %vm2132, %v5534
        %5640 = vst.msk [vmem:[%s194 + $0x27f] sm:$0x1] %vm2132, %v5536
        %5641 = vst.msk [vmem:[%s194 + $0x28f] sm:$0x1] %vm2132, %v5538
        %5642 = vst.msk [vmem:[%s194 + $0x29f] sm:$0x1] %vm2132, %v5540
        %5643 = vst.msk [vmem:[%s194 + $0x2af] sm:$0x1] %vm2132, %v5542
        %5644 = vst.msk [vmem:[%s194 + $0x2bf] sm:$0x1] %vm2132, %v5544
        %5645 = vst.msk [vmem:[%s194 + $0x2cf] sm:$0x1] %vm2132, %v5546
        %5646 = vst.msk [vmem:[%s194 + $0x2df] sm:$0x1] %vm2132, %v5548
        %5647 = vst.msk [vmem:[%s194 + $0x2ef] sm:$0x1] %vm2132, %v5550
        %5648 = vst.msk [vmem:[%s194 + $0x2ff] sm:$0x1] %vm2132, %v5552
        %s5649 = smul.u32 2, %s19
        %p5650 = scmp.lt.s32.totalorder %s18, 1
        %s5651 = scalar_select %p5650, %s18, 1
        %p5652 = scmp.lt.s32.totalorder %s5649, 1
        %s5653 = scalar_select %p5652, %s5649, 1
        %s5654 = smul.addr %s5651, 96
        %s5655 = sadd.s32 %s5653, %s5654
        %s5656 = smul.addr %s5655, 8
        %s5657 = scalar_lea.vmem %s2, %s5656
        // Predicated region
        $region33: #{tpu_custom_call.1} parent=27 // pred_check
          %p5658 = pneg %p95
        $region34: #{tpu_custom_call.1} parent=27 // pred_check_branch
          %5660 = sbr.rel (%p5658) target = $region36
        $region35: #{tpu_custom_call.1} parent=27 // pred_region
          %s5661 = smul.u32 2, %s19
        $region36: #{tpu_custom_call.1} parent=27 // pred_fallthru
          _
      $region28: #{tpu_custom_call.1} parent=5 // pred_fallthru
        _
      %p5662 = scmp.le.s32.totalorder 2, %s9
      // Predicated region
      $region37: #{tpu_custom_call.1} parent=5 // pred_check
        %p5663 = pneg %p5662
      $region38: #{tpu_custom_call.1} parent=5 // pred_check_branch
        %5665 = sbr.rel (%p5663) target = $region40
      $region39: #{tpu_custom_call.1} parent=5 // pred_region
        %s5666 = ssub.s32 %s9, 2
        // Predicated region
        $region41: #{tpu_custom_call.1} parent=39 // pred_check
          %p5667 = pneg %p101
        $region42: #{tpu_custom_call.1} parent=39 // pred_check_branch
          %5669 = sbr.rel (%p5667) target = $region44
        $region43: #{tpu_custom_call.1} parent=39 // pred_region
          %s5670 = smul.u32 2, %s21
          %p5671 = scmp.lt.s32.totalorder %s20, 1
          %s5672 = scalar_select %p5671, %s20, 1
          %p5673 = scmp.lt.s32.totalorder %s5670, 1
          %s5674 = scalar_select %p5673, %s5670, 1
          %s5675 = smul.addr %s5672, 96
          %s5676 = sadd.s32 %s5674, %s5675
          %s5677 = smul.addr %s5676, 8
          %s5678 = scalar_lea.vmem %s2, %s5677
        $region44: #{tpu_custom_call.1} parent=39 // pred_fallthru
          _
      $region40: #{tpu_custom_call.1} parent=5 // pred_fallthru
        _
    $region6: #{tpu_custom_call.1} parent=1 // loop_footer
      %s13 = sadd.s32 1, %s9
    $region7: #{tpu_custom_call.1} parent=1 // loop_footer_branch
      %8 = sbr.rel target = $region3
    $region8: #{tpu_custom_call.1} parent=1 // loop_exit
      _
    %5679 = vsyncpa [#allocation3], 1
    %s5680 = scalar_lea.sflag [#allocation3], 1
    %5681 = vsyncpa %s5680, 1

</llo_original>
